<compile_context>
chip_gen: v7x
topology: tpu7x:2x2x1
jax: 0.10.0
libtpu: 0.0.40
codegen_flags: <defaults>
</compile_context>

<pallas_src>
import functools
import math

import jax
import jax.numpy as jnp
from jax.experimental import pallas as pl
from jax.experimental.pallas import tpu as pltpu


def _sh16_components(x, y, z):
    """Spherical harmonics (levels=4 -> 16 comps), nerfstudio convention.

    x, y, z are same-shaped arrays; returns a list of 16 arrays of that shape.
    Shared by the kernel (row-major (1, tm) slices) and the reference
    ((N, 1) column slices) so the constants match exactly.
    """
    xx, yy, zz = x * x, y * y, z * z
    return [
        jnp.full_like(x, 0.28209479177387814),
        0.4886025119029199 * y,
        0.4886025119029199 * z,
        0.4886025119029199 * x,
        1.0925484305920792 * x * y,
        1.0925484305920792 * y * z,
        0.9461746957575601 * zz - 0.31539156525252,
        1.0925484305920792 * x * z,
        0.5462742152960396 * (xx - yy),
        0.5900435899266435 * y * (3.0 * xx - yy),
        2.890611442640554 * x * y * z,
        0.4570457994644658 * y * (5.0 * zz - 1.0),
        0.3731763325901154 * z * (5.0 * zz - 3.0),
        0.4570457994644658 * x * (5.0 * zz - 1.0),
        1.445305721320277 * z * (xx - yy),
        0.5900435899266435 * x * (xx - 3.0 * yy),
    ]


def _sky_field_ms_kernel(cent_ref, rays_ref,
                         w1_ref, b1_ref, w2_ref, b2_ref, w3_ref, b3_ref,
                         out_ref, *, num_fields, a_dim):
    tm = rays_ref.shape[1]
    num_clusters = cent_ref.shape[0]

    # ---- cluster assignment: factored squared cdist + first-argmin ----------
    # cent_ref (SMEM) holds [-2*c | ||c||^2]; score_c = -2*c.o + ||c||^2.
    # (||o||^2 is identical for every cluster -> dropped; argmin unchanged.)
    o0 = rays_ref[0:1, :]
    o1 = rays_ref[1:2, :]
    o2 = rays_ref[2:3, :]

    def score(c):
        return (cent_ref[c, 0] * o0 + cent_ref[c, 1] * o1
                + cent_ref[c, 2] * o2 + cent_ref[c, 3])

    best_d = score(0)
    best_i = jnp.zeros((1, tm), jnp.int32)
    for c in range(1, num_clusters):
        dc = score(c)
        better = dc < best_d                        # strict < keeps first min (torch tie-break)
        best_d = jnp.where(better, dc, best_d)
        best_i = jnp.where(better, jnp.int32(c), best_i)

    # ---- SkyField feature: SH(direction) ++ appearance, single concat -------
    x = rays_ref[3:4, :]
    y = rays_ref[4:5, :]
    z = rays_ref[5:6, :]
    feat = jnp.concatenate(
        _sh16_components(x, y, z) + [rays_ref[6:6 + a_dim, :]], axis=0)   # (16+A, tm) f32
    feat = feat.astype(jnp.bfloat16)

    # ---- fused per-field MLP: 3 matmuls, bf16 operands, f32 accumulation ----
    h = jnp.dot(w1_ref[...], feat, preferred_element_type=jnp.float32) + b1_ref[...]
    h = jnp.maximum(h, 0.0).astype(jnp.bfloat16)
    h = jnp.dot(w2_ref[...], h, preferred_element_type=jnp.float32) + b2_ref[...]
    h = jnp.maximum(h, 0.0).astype(jnp.bfloat16)
    logits = jnp.dot(w3_ref[...], h, preferred_element_type=jnp.float32) + b3_ref[...]
    # logits: (3 * num_fields, tm) f32

    # ---- pick this ray's field's 3 logit rows, then a single sigmoid --------
    sel = logits[0:3, :]
    for i in range(1, num_fields):
        sel = jnp.where(best_i == i, logits[3 * i:3 * i + 3, :], sel)
    out_ref[...] = jax.nn.sigmoid(sel)


def _fuse_params(params):
    """Stack per-field MLP weights into one (transposed) block-diagonal chain.

    Weights are cast to bf16 (MXU operands); biases stay f32 (added to the f32
    accumulator inside the kernel).
    """
    w1, b1, w2, b2, w3, b3 = params
    num_fields, d_in, hidden = w1.shape
    w1t = jnp.transpose(w1, (0, 2, 1)).reshape(num_fields * hidden, d_in)
    w2t = jax.scipy.linalg.block_diag(*[w2[i].T for i in range(num_fields)])
    w3t = jax.scipy.linalg.block_diag(*[w3[i].T for i in range(num_fields)])
    b1c = b1.reshape(num_fields * hidden, 1).astype(jnp.float32)
    b2c = b2.reshape(num_fields * hidden, 1).astype(jnp.float32)
    b3c = b3.reshape(num_fields * 3, 1).astype(jnp.float32)
    return (w1t.astype(jnp.bfloat16), b1c,
            w2t.astype(jnp.bfloat16), b2c,
            w3t.astype(jnp.bfloat16), b3c)


def sky_field_ms_forward(origins, directions, app_emb, centroids, params, *, tm=2048):
    """origins/directions: (bs, 3); app_emb: (bs, A); centroids: (C, 3)."""
    bs = origins.shape[0]
    a_dim = app_emb.shape[-1]
    num_clusters = centroids.shape[0]
    num_fields = params[0].shape[0]
    assert num_fields == num_clusters, "expected one SkyField per centroid"

    w1t, b1c, w2t, b2c, w3t, b3c = _fuse_params(params)

    # Augmented centroid table for the factored cdist: [-2*c | ||c||^2], SMEM.
    cent_aug = jnp.concatenate(
        [-2.0 * centroids,
         jnp.sum(centroids * centroids, axis=-1, keepdims=True)],
        axis=-1).astype(jnp.float32)                                  # (C, 4)

    # Block width: multiple of 256 (v6e/v7x MXU N-fill; also a multiple of 128
    # for v5e), clamped so the grid keeps >= 2 blocks whenever bs allows
    # (both v7x TensorCores get work under dimension_semantics=("parallel",)).
    tm = max(256, (tm // 256) * 256)
    while tm > 256 and pl.cdiv(bs, tm) < 2:
        tm -= 256
    n_blocks = pl.cdiv(bs, tm)
    bs_pad = n_blocks * tm
    pad = bs_pad - bs

    # One stacked, lane-dense ray stream: (3+3+A, bs_pad). Single pad, single
    # transpose, one per-step input DMA (tail rays are computed harmlessly and
    # sliced off below).
    rays = jnp.concatenate([origins, directions, app_emb], axis=-1)
    rays_t = jnp.pad(rays, ((0, pad), (0, 0))).T.astype(jnp.float32)  # (6+A, bs_pad)
    d_rays = 6 + a_dim

    full = lambda arr: pl.BlockSpec(arr.shape, lambda i: (0, 0))
    kernel = functools.partial(_sky_field_ms_kernel,
                               num_fields=num_fields, a_dim=a_dim)

    out_t = pl.pallas_call(
        kernel,
        out_shape=jax.ShapeDtypeStruct((3, bs_pad), jnp.float32),
        grid=(n_blocks,),
        in_specs=[
            pl.BlockSpec(memory_space=pltpu.MemorySpace.SMEM),   # cent_aug (C, 4)
            pl.BlockSpec((d_rays, tm), lambda i: (0, i)),        # stacked rays^T
            full(w1t), full(b1c),
            full(w2t), full(b2c),
            full(w3t), full(b3c),
        ],
        out_specs=pl.BlockSpec((3, tm), lambda i: (0, i)),
        compiler_params=pltpu.CompilerParams(dimension_semantics=("parallel",)),
    )(cent_aug, rays_t, w1t, b1c, w2t, b2c, w3t, b3c)

    return {"rgb": out_t[:, :bs].T}                               # (bs, 3)


def _reference(origins, directions, app_emb, centroids, params):
    """Pure-JAX f32 reference replicating the PyTorch semantics (dense form)."""
    w1, b1, w2, b2, w3, b3 = params
    d2 = jnp.sum((origins[:, None, :] - centroids[None, :, :]) ** 2, axis=-1)
    assign = jnp.argmin(d2, axis=1)                        # first-min, like torch
    comps = _sh16_components(directions[:, 0:1], directions[:, 1:2], directions[:, 2:3])
    feat = jnp.concatenate(comps + [app_emb], axis=-1)
    out = jnp.zeros((origins.shape[0], 3), jnp.float32)
    for i in range(centroids.shape[0]):
        h = jnp.maximum(feat @ w1[i] + b1[i], 0.0)
        h = jnp.maximum(h @ w2[i] + b2[i], 0.0)
        rgb = jax.nn.sigmoid(h @ w3[i] + b3[i])
        out = jnp.where((assign == i)[:, None], rgb, out)
    return out


if __name__ == "__main__":
    BS, TM = 3000, 2048      # bs NOT a multiple of tm -> exercises the padded tail; grid = 2 blocks
    C = 3                    # number of clusters / SkyFields
    A = 8                    # appearance embedding dim
    H = 32                   # hidden dim of the sky MLP
    D_IN = 16 + A            # SH(16) ++ appearance

    key = jax.random.PRNGKey(0)
    ks = jax.random.split(key, 10)

    centroids = jax.random.normal(ks[0], (C, 3), jnp.float32) * 5.0
    origins = jax.random.normal(ks[1], (BS, 3), jnp.float32) * 5.0
    directions = jax.random.normal(ks[2], (BS, 3), jnp.float32)
    directions = directions / jnp.linalg.norm(directions, axis=-1, keepdims=True)
    app_emb = jax.random.normal(ks[3], (BS, A), jnp.float32)

    w1 = jax.random.normal(ks[4], (C, D_IN, H), jnp.float32) / math.sqrt(D_IN)
    b1 = jax.random.normal(ks[5], (C, H), jnp.float32) * 0.01
    w2 = jax.random.normal(ks[6], (C, H, H), jnp.float32) / math.sqrt(H)
    b2 = jax.random.normal(ks[7], (C, H), jnp.float32) * 0.01
    w3 = jax.random.normal(ks[8], (C, H, 3), jnp.float32) / math.sqrt(H)
    b3 = jax.random.normal(ks[9], (C, 3), jnp.float32) * 0.01
    params = (w1, b1, w2, b2, w3, b3)

    outputs = sky_field_ms_forward(origins, directions, app_emb, centroids, params, tm=TM)
    rgb = jax.block_until_ready(outputs["rgb"])

    ref = _reference(origins, directions, app_emb, centroids, params)
    assert rgb.shape == (BS, 3) and rgb.dtype == jnp.float32
    # bf16 MXU operands (f32 accumulation) -> relax tolerance vs. the f32 reference.
    assert jnp.allclose(rgb, ref, atol=2e-2, rtol=0.0), "mismatch vs reference"

    print("KERNEL_OK")
</pallas_src>

<mosaic_0001>
module attributes {stable_mosaic.version = 11 : i64} {
  func.func @_sky_field_ms_kernel(%arg0: i32, %arg1: memref<3x4xf32, #tpu.memory_space<smem>>, %arg2: memref<14x2048xf32, #tpu.memory_space<vmem>>, %arg3: memref<96x24xbf16, #tpu.memory_space<vmem>>, %arg4: memref<96x1xf32, #tpu.memory_space<vmem>>, %arg5: memref<96x96xbf16, #tpu.memory_space<vmem>>, %arg6: memref<96x1xf32, #tpu.memory_space<vmem>>, %arg7: memref<9x96xbf16, #tpu.memory_space<vmem>>, %arg8: memref<9x1xf32, #tpu.memory_space<vmem>>, %arg9: memref<3x2048xf32, #tpu.memory_space<vmem>>) attributes {dimension_semantics = [#tpu.dimension_semantics<parallel>], iteration_bounds = array<i64: 2>, scalar_prefetch = 0 : i64, scratch_operands = 0 : i64, tpu.core_type = #tpu.core_type<tc>, window_params = [{transform_indices = @transform_0, window_bounds = array<i64: 3, 4>}, {transform_indices = @transform_1, window_bounds = array<i64: 14, 2048>}, {pipeline_mode = #tpu.pipeline_mode<synchronous>, transform_indices = @transform_2, window_bounds = array<i64: 96, 24>}, {pipeline_mode = #tpu.pipeline_mode<synchronous>, transform_indices = @transform_3, window_bounds = array<i64: 96, 1>}, {pipeline_mode = #tpu.pipeline_mode<synchronous>, transform_indices = @transform_4, window_bounds = array<i64: 96, 96>}, {pipeline_mode = #tpu.pipeline_mode<synchronous>, transform_indices = @transform_5, window_bounds = array<i64: 96, 1>}, {pipeline_mode = #tpu.pipeline_mode<synchronous>, transform_indices = @transform_6, window_bounds = array<i64: 9, 96>}, {pipeline_mode = #tpu.pipeline_mode<synchronous>, transform_indices = @transform_7, window_bounds = array<i64: 9, 1>}, {transform_indices = @transform_8, window_bounds = array<i64: 3, 2048>}]} {
    %c0 = arith.constant 0 : index
    %c0_0 = arith.constant 0 : index
    %0 = vector.load %arg2[%c0, %c0_0] : memref<14x2048xf32, #tpu.memory_space<vmem>>, vector<1x2048xf32>
    %c1 = arith.constant 1 : index
    %c0_1 = arith.constant 0 : index
    %1 = vector.load %arg2[%c1, %c0_1] : memref<14x2048xf32, #tpu.memory_space<vmem>>, vector<1x2048xf32>
    %c2 = arith.constant 2 : index
    %c0_2 = arith.constant 0 : index
    %2 = vector.load %arg2[%c2, %c0_2] : memref<14x2048xf32, #tpu.memory_space<vmem>>, vector<1x2048xf32>
    %c0_3 = arith.constant 0 : index
    %c0_4 = arith.constant 0 : index
    %3 = memref.load %arg1[%c0_3, %c0_4] : memref<3x4xf32, #tpu.memory_space<smem>>
    %4 = vector.broadcast %3 : f32 to vector<1x2048xf32>
    %5 = arith.mulf %4, %0 : vector<1x2048xf32>
    %c0_5 = arith.constant 0 : index
    %c1_6 = arith.constant 1 : index
    %6 = memref.load %arg1[%c0_5, %c1_6] : memref<3x4xf32, #tpu.memory_space<smem>>
    %7 = vector.broadcast %6 : f32 to vector<1x2048xf32>
    %8 = arith.mulf %7, %1 : vector<1x2048xf32>
    %9 = arith.addf %5, %8 : vector<1x2048xf32>
    %c0_7 = arith.constant 0 : index
    %c2_8 = arith.constant 2 : index
    %10 = memref.load %arg1[%c0_7, %c2_8] : memref<3x4xf32, #tpu.memory_space<smem>>
    %11 = vector.broadcast %10 : f32 to vector<1x2048xf32>
    %12 = arith.mulf %11, %2 : vector<1x2048xf32>
    %13 = arith.addf %9, %12 : vector<1x2048xf32>
    %c0_9 = arith.constant 0 : index
    %c3 = arith.constant 3 : index
    %14 = memref.load %arg1[%c0_9, %c3] : memref<3x4xf32, #tpu.memory_space<smem>>
    %15 = vector.broadcast %14 : f32 to vector<1x2048xf32>
    %16 = arith.addf %13, %15 : vector<1x2048xf32>
    %c0_i32 = arith.constant 0 : i32
    %17 = vector.broadcast %c0_i32 : i32 to vector<1x2048xi32>
    %c1_10 = arith.constant 1 : index
    %c0_11 = arith.constant 0 : index
    %18 = memref.load %arg1[%c1_10, %c0_11] : memref<3x4xf32, #tpu.memory_space<smem>>
    %19 = vector.broadcast %18 : f32 to vector<1x2048xf32>
    %20 = arith.mulf %19, %0 : vector<1x2048xf32>
    %c1_12 = arith.constant 1 : index
    %c1_13 = arith.constant 1 : index
    %21 = memref.load %arg1[%c1_12, %c1_13] : memref<3x4xf32, #tpu.memory_space<smem>>
    %22 = vector.broadcast %21 : f32 to vector<1x2048xf32>
    %23 = arith.mulf %22, %1 : vector<1x2048xf32>
    %24 = arith.addf %20, %23 : vector<1x2048xf32>
    %c1_14 = arith.constant 1 : index
    %c2_15 = arith.constant 2 : index
    %25 = memref.load %arg1[%c1_14, %c2_15] : memref<3x4xf32, #tpu.memory_space<smem>>
    %26 = vector.broadcast %25 : f32 to vector<1x2048xf32>
    %27 = arith.mulf %26, %2 : vector<1x2048xf32>
    %28 = arith.addf %24, %27 : vector<1x2048xf32>
    %c1_16 = arith.constant 1 : index
    %c3_17 = arith.constant 3 : index
    %29 = memref.load %arg1[%c1_16, %c3_17] : memref<3x4xf32, #tpu.memory_space<smem>>
    %30 = vector.broadcast %29 : f32 to vector<1x2048xf32>
    %31 = arith.addf %28, %30 : vector<1x2048xf32>
    %32 = arith.cmpf olt, %31, %16 : vector<1x2048xf32>
    %33 = arith.select %32, %31, %16 : vector<1x2048xi1>, vector<1x2048xf32>
    %c1_i32 = arith.constant 1 : i32
    %34 = vector.broadcast %c1_i32 : i32 to vector<1x2048xi32>
    %35 = arith.select %32, %34, %17 : vector<1x2048xi1>, vector<1x2048xi32>
    %c2_18 = arith.constant 2 : index
    %c0_19 = arith.constant 0 : index
    %36 = memref.load %arg1[%c2_18, %c0_19] : memref<3x4xf32, #tpu.memory_space<smem>>
    %37 = vector.broadcast %36 : f32 to vector<1x2048xf32>
    %38 = arith.mulf %37, %0 : vector<1x2048xf32>
    %c2_20 = arith.constant 2 : index
    %c1_21 = arith.constant 1 : index
    %39 = memref.load %arg1[%c2_20, %c1_21] : memref<3x4xf32, #tpu.memory_space<smem>>
    %40 = vector.broadcast %39 : f32 to vector<1x2048xf32>
    %41 = arith.mulf %40, %1 : vector<1x2048xf32>
    %42 = arith.addf %38, %41 : vector<1x2048xf32>
    %c2_22 = arith.constant 2 : index
    %c2_23 = arith.constant 2 : index
    %43 = memref.load %arg1[%c2_22, %c2_23] : memref<3x4xf32, #tpu.memory_space<smem>>
    %44 = vector.broadcast %43 : f32 to vector<1x2048xf32>
    %45 = arith.mulf %44, %2 : vector<1x2048xf32>
    %46 = arith.addf %42, %45 : vector<1x2048xf32>
    %c2_24 = arith.constant 2 : index
    %c3_25 = arith.constant 3 : index
    %47 = memref.load %arg1[%c2_24, %c3_25] : memref<3x4xf32, #tpu.memory_space<smem>>
    %48 = vector.broadcast %47 : f32 to vector<1x2048xf32>
    %49 = arith.addf %46, %48 : vector<1x2048xf32>
    %50 = arith.cmpf olt, %49, %33 : vector<1x2048xf32>
    %c2_i32 = arith.constant 2 : i32
    %51 = vector.broadcast %c2_i32 : i32 to vector<1x2048xi32>
    %52 = arith.select %50, %51, %35 : vector<1x2048xi1>, vector<1x2048xi32>
    %c3_26 = arith.constant 3 : index
    %c0_27 = arith.constant 0 : index
    %53 = vector.load %arg2[%c3_26, %c0_27] : memref<14x2048xf32, #tpu.memory_space<vmem>>, vector<1x2048xf32>
    %c4 = arith.constant 4 : index
    %c0_28 = arith.constant 0 : index
    %54 = vector.load %arg2[%c4, %c0_28] : memref<14x2048xf32, #tpu.memory_space<vmem>>, vector<1x2048xf32>
    %c5 = arith.constant 5 : index
    %c0_29 = arith.constant 0 : index
    %55 = vector.load %arg2[%c5, %c0_29] : memref<14x2048xf32, #tpu.memory_space<vmem>>, vector<1x2048xf32>
    %56 = arith.mulf %53, %53 : vector<1x2048xf32>
    %57 = arith.mulf %54, %54 : vector<1x2048xf32>
    %58 = arith.mulf %55, %55 : vector<1x2048xf32>
    %cst = arith.constant 0.282094806 : f32
    %59 = vector.broadcast %cst : f32 to vector<1x2048xf32>
    %cst_30 = arith.constant 0.488602519 : f32
    %60 = vector.broadcast %cst_30 : f32 to vector<1x2048xf32>
    %61 = arith.mulf %60, %54 : vector<1x2048xf32>
    %cst_31 = arith.constant 0.488602519 : f32
    %62 = vector.broadcast %cst_31 : f32 to vector<1x2048xf32>
    %63 = arith.mulf %62, %55 : vector<1x2048xf32>
    %cst_32 = arith.constant 0.488602519 : f32
    %64 = vector.broadcast %cst_32 : f32 to vector<1x2048xf32>
    %65 = arith.mulf %64, %53 : vector<1x2048xf32>
    %cst_33 = arith.constant 1.09254849 : f32
    %66 = vector.broadcast %cst_33 : f32 to vector<1x2048xf32>
    %67 = arith.mulf %66, %53 : vector<1x2048xf32>
    %68 = arith.mulf %67, %54 : vector<1x2048xf32>
    %cst_34 = arith.constant 1.09254849 : f32
    %69 = vector.broadcast %cst_34 : f32 to vector<1x2048xf32>
    %70 = arith.mulf %69, %54 : vector<1x2048xf32>
    %71 = arith.mulf %70, %55 : vector<1x2048xf32>
    %cst_35 = arith.constant 0.946174681 : f32
    %72 = vector.broadcast %cst_35 : f32 to vector<1x2048xf32>
    %73 = arith.mulf %72, %58 : vector<1x2048xf32>
    %cst_36 = arith.constant 0.31539157 : f32
    %74 = vector.broadcast %cst_36 : f32 to vector<1x2048xf32>
    %75 = arith.subf %73, %74 : vector<1x2048xf32>
    %cst_37 = arith.constant 1.09254849 : f32
    %76 = vector.broadcast %cst_37 : f32 to vector<1x2048xf32>
    %77 = arith.mulf %76, %53 : vector<1x2048xf32>
    %78 = arith.mulf %77, %55 : vector<1x2048xf32>
    %79 = arith.subf %56, %57 : vector<1x2048xf32>
    %cst_38 = arith.constant 0.546274245 : f32
    %80 = vector.broadcast %cst_38 : f32 to vector<1x2048xf32>
    %81 = arith.mulf %80, %79 : vector<1x2048xf32>
    %cst_39 = arith.constant 0.590043604 : f32
    %82 = vector.broadcast %cst_39 : f32 to vector<1x2048xf32>
    %83 = arith.mulf %82, %54 : vector<1x2048xf32>
    %cst_40 = arith.constant 3.000000e+00 : f32
    %84 = vector.broadcast %cst_40 : f32 to vector<1x2048xf32>
    %85 = arith.mulf %84, %56 : vector<1x2048xf32>
    %86 = arith.subf %85, %57 : vector<1x2048xf32>
    %87 = arith.mulf %83, %86 : vector<1x2048xf32>
    %cst_41 = arith.constant 2.89061141 : f32
    %88 = vector.broadcast %cst_41 : f32 to vector<1x2048xf32>
    %89 = arith.mulf %88, %53 : vector<1x2048xf32>
    %90 = arith.mulf %89, %54 : vector<1x2048xf32>
    %91 = arith.mulf %90, %55 : vector<1x2048xf32>
    %cst_42 = arith.constant 0.457045794 : f32
    %92 = vector.broadcast %cst_42 : f32 to vector<1x2048xf32>
    %93 = arith.mulf %92, %54 : vector<1x2048xf32>
    %cst_43 = arith.constant 5.000000e+00 : f32
    %94 = vector.broadcast %cst_43 : f32 to vector<1x2048xf32>
    %95 = arith.mulf %94, %58 : vector<1x2048xf32>
    %cst_44 = arith.constant 1.000000e+00 : f32
    %96 = vector.broadcast %cst_44 : f32 to vector<1x2048xf32>
    %97 = arith.subf %95, %96 : vector<1x2048xf32>
    %98 = arith.mulf %93, %97 : vector<1x2048xf32>
    %cst_45 = arith.constant 0.373176336 : f32
    %99 = vector.broadcast %cst_45 : f32 to vector<1x2048xf32>
    %100 = arith.mulf %99, %55 : vector<1x2048xf32>
    %cst_46 = arith.constant 5.000000e+00 : f32
    %101 = vector.broadcast %cst_46 : f32 to vector<1x2048xf32>
    %102 = arith.mulf %101, %58 : vector<1x2048xf32>
    %cst_47 = arith.constant 3.000000e+00 : f32
    %103 = vector.broadcast %cst_47 : f32 to vector<1x2048xf32>
    %104 = arith.subf %102, %103 : vector<1x2048xf32>
    %105 = arith.mulf %100, %104 : vector<1x2048xf32>
    %cst_48 = arith.constant 0.457045794 : f32
    %106 = vector.broadcast %cst_48 : f32 to vector<1x2048xf32>
    %107 = arith.mulf %106, %53 : vector<1x2048xf32>
    %cst_49 = arith.constant 5.000000e+00 : f32
    %108 = vector.broadcast %cst_49 : f32 to vector<1x2048xf32>
    %109 = arith.mulf %108, %58 : vector<1x2048xf32>
    %cst_50 = arith.constant 1.000000e+00 : f32
    %110 = vector.broadcast %cst_50 : f32 to vector<1x2048xf32>
    %111 = arith.subf %109, %110 : vector<1x2048xf32>
    %112 = arith.mulf %107, %111 : vector<1x2048xf32>
    %cst_51 = arith.constant 1.44530571 : f32
    %113 = vector.broadcast %cst_51 : f32 to vector<1x2048xf32>
    %114 = arith.mulf %113, %55 : vector<1x2048xf32>
    %115 = arith.subf %56, %57 : vector<1x2048xf32>
    %116 = arith.mulf %114, %115 : vector<1x2048xf32>
    %cst_52 = arith.constant 0.590043604 : f32
    %117 = vector.broadcast %cst_52 : f32 to vector<1x2048xf32>
    %118 = arith.mulf %117, %53 : vector<1x2048xf32>
    %cst_53 = arith.constant 3.000000e+00 : f32
    %119 = vector.broadcast %cst_53 : f32 to vector<1x2048xf32>
    %120 = arith.mulf %119, %57 : vector<1x2048xf32>
    %121 = arith.subf %56, %120 : vector<1x2048xf32>
    %122 = arith.mulf %118, %121 : vector<1x2048xf32>
    %c6 = arith.constant 6 : index
    %c0_54 = arith.constant 0 : index
    %123 = vector.load %arg2[%c6, %c0_54] : memref<14x2048xf32, #tpu.memory_space<vmem>>, vector<8x2048xf32>
    %124 = tpu.concatenate %59, %61, %63, %65, %68, %71, %75, %78, %81, %87, %91, %98, %105, %112, %116, %122 in 0 : vector<1x2048xf32>, vector<1x2048xf32>, vector<1x2048xf32>, vector<1x2048xf32>, vector<1x2048xf32>, vector<1x2048xf32>, vector<1x2048xf32>, vector<1x2048xf32>, vector<1x2048xf32>, vector<1x2048xf32>, vector<1x2048xf32>, vector<1x2048xf32>, vector<1x2048xf32>, vector<1x2048xf32>, vector<1x2048xf32>, vector<1x2048xf32> -> vector<16x2048xf32>
    %125 = tpu.concatenate %124, %123 in 0 : vector<16x2048xf32>, vector<8x2048xf32> -> vector<24x2048xf32>
    %126 = arith.truncf %125 : vector<24x2048xf32> to vector<24x2048xbf16>
    %c0_55 = arith.constant 0 : index
    %c0_56 = arith.constant 0 : index
    %127 = vector.load %arg3[%c0_55, %c0_56] : memref<96x24xbf16, #tpu.memory_space<vmem>>, vector<96x24xbf16>
    %cst_57 = arith.constant dense<0.000000e+00> : vector<96x2048xf32>
    %128 = tpu.matmul %127, %126, %cst_57 {dimension_numbers = #tpu.dot_dimension_numbers<[1], [0], [0], [1], [0, 0, 1, 1], [], []>} : vector<96x24xbf16>, vector<24x2048xbf16>, vector<96x2048xf32> -> vector<96x2048xf32>
    %c0_58 = arith.constant 0 : index
    %c0_59 = arith.constant 0 : index
    %129 = vector.load %arg4[%c0_58, %c0_59] : memref<96x1xf32, #tpu.memory_space<vmem>>, vector<96x1xf32>
    %130 = vector.broadcast %129 : vector<96x1xf32> to vector<96x2048xf32>
    %131 = arith.addf %128, %130 : vector<96x2048xf32>
    %cst_60 = arith.constant 0.000000e+00 : f32
    %132 = vector.broadcast %cst_60 : f32 to vector<96x2048xf32>
    %133 = arith.maximumf %131, %132 : vector<96x2048xf32>
    %134 = arith.truncf %133 : vector<96x2048xf32> to vector<96x2048xbf16>
    %c0_61 = arith.constant 0 : index
    %c0_62 = arith.constant 0 : index
    %135 = vector.load %arg5[%c0_61, %c0_62] : memref<96x96xbf16, #tpu.memory_space<vmem>>, vector<96x96xbf16>
    %cst_63 = arith.constant dense<0.000000e+00> : vector<96x2048xf32>
    %136 = tpu.matmul %135, %134, %cst_63 {dimension_numbers = #tpu.dot_dimension_numbers<[1], [0], [0], [1], [0, 0, 1, 1], [], []>} : vector<96x96xbf16>, vector<96x2048xbf16>, vector<96x2048xf32> -> vector<96x2048xf32>
    %c0_64 = arith.constant 0 : index
    %c0_65 = arith.constant 0 : index
    %137 = vector.load %arg6[%c0_64, %c0_65] : memref<96x1xf32, #tpu.memory_space<vmem>>, vector<96x1xf32>
    %138 = vector.broadcast %137 : vector<96x1xf32> to vector<96x2048xf32>
    %139 = arith.addf %136, %138 : vector<96x2048xf32>
    %cst_66 = arith.constant 0.000000e+00 : f32
    %140 = vector.broadcast %cst_66 : f32 to vector<96x2048xf32>
    %141 = arith.maximumf %139, %140 : vector<96x2048xf32>
    %142 = arith.truncf %141 : vector<96x2048xf32> to vector<96x2048xbf16>
    %c0_67 = arith.constant 0 : index
    %c0_68 = arith.constant 0 : index
    %143 = vector.load %arg7[%c0_67, %c0_68] : memref<9x96xbf16, #tpu.memory_space<vmem>>, vector<9x96xbf16>
    %cst_69 = arith.constant dense<0.000000e+00> : vector<9x2048xf32>
    %144 = tpu.matmul %143, %142, %cst_69 {dimension_numbers = #tpu.dot_dimension_numbers<[1], [0], [0], [1], [0, 0, 1, 1], [], []>} : vector<9x96xbf16>, vector<96x2048xbf16>, vector<9x2048xf32> -> vector<9x2048xf32>
    %c0_70 = arith.constant 0 : index
    %c0_71 = arith.constant 0 : index
    %145 = vector.load %arg8[%c0_70, %c0_71] : memref<9x1xf32, #tpu.memory_space<vmem>>, vector<9x1xf32>
    %146 = vector.broadcast %145 : vector<9x1xf32> to vector<9x2048xf32>
    %147 = arith.addf %144, %146 : vector<9x2048xf32>
    %148 = vector.extract_strided_slice %147 {offsets = [0, 0], sizes = [3, 2048], strides = [1, 1]} : vector<9x2048xf32> to vector<3x2048xf32>
    %c1_i32_72 = arith.constant 1 : i32
    %149 = vector.broadcast %c1_i32_72 : i32 to vector<1x2048xi32>
    %150 = arith.cmpi eq, %52, %149 : vector<1x2048xi32>
    %151 = vector.extract_strided_slice %147 {offsets = [3, 0], sizes = [3, 2048], strides = [1, 1]} : vector<9x2048xf32> to vector<3x2048xf32>
    %152 = vector.shape_cast %150 : vector<1x2048xi1> to vector<1x2048xi1>
    %153 = vector.broadcast %152 : vector<1x2048xi1> to vector<3x2048xi1>
    %154 = arith.select %153, %151, %148 : vector<3x2048xi1>, vector<3x2048xf32>
    %c2_i32_73 = arith.constant 2 : i32
    %155 = vector.broadcast %c2_i32_73 : i32 to vector<1x2048xi32>
    %156 = arith.cmpi eq, %52, %155 : vector<1x2048xi32>
    %157 = vector.extract_strided_slice %147 {offsets = [6, 0], sizes = [3, 2048], strides = [1, 1]} : vector<9x2048xf32> to vector<3x2048xf32>
    %158 = vector.shape_cast %156 : vector<1x2048xi1> to vector<1x2048xi1>
    %159 = vector.broadcast %158 : vector<1x2048xi1> to vector<3x2048xi1>
    %160 = arith.select %159, %157, %154 : vector<3x2048xi1>, vector<3x2048xf32>
    %161 = arith.negf %160 : vector<3x2048xf32>
    %162 = math.exp %161 : vector<3x2048xf32>
    %cst_74 = arith.constant 1.000000e+00 : f32
    %163 = vector.broadcast %cst_74 : f32 to vector<3x2048xf32>
    %164 = arith.addf %163, %162 : vector<3x2048xf32>
    %165 = arith.divf %163, %164 : vector<3x2048xf32>
    %c0_75 = arith.constant 0 : index
    %c0_76 = arith.constant 0 : index
    %166 = vector.load %arg9[%c0_75, %c0_76] : memref<3x2048xf32, #tpu.memory_space<vmem>>, vector<3x2048xf32>
    tpu.vector_store %arg9[%c0_75, %c0_76], %165 {strides = array<i32>} : memref<3x2048xf32, #tpu.memory_space<vmem>>, vector<3x2048xf32>,
    return
  }
  func.func @transform_0(%arg0: i32) -> (i32, i32) {
    %c0_i32 = arith.constant 0 : i32
    %c0_i32_0 = arith.constant 0 : i32
    %c0_i32_1 = arith.constant 0 : i32
    return %c0_i32, %c0_i32_0 : i32, i32
  }
  func.func @transform_1(%arg0: i32) -> (i32, i32) {
    %c0_i32 = arith.constant 0 : i32
    %c0_i32_0 = arith.constant 0 : i32
    return %c0_i32, %arg0 : i32, i32
  }
  func.func @transform_2(%arg0: i32) -> (i32, i32) {
    %c0_i32 = arith.constant 0 : i32
    %c0_i32_0 = arith.constant 0 : i32
    %c0_i32_1 = arith.constant 0 : i32
    return %c0_i32, %c0_i32_0 : i32, i32
  }
  func.func @transform_3(%arg0: i32) -> (i32, i32) {
    %c0_i32 = arith.constant 0 : i32
    %c0_i32_0 = arith.constant 0 : i32
    %c0_i32_1 = arith.constant 0 : i32
    return %c0_i32, %c0_i32_0 : i32, i32
  }
  func.func @transform_4(%arg0: i32) -> (i32, i32) {
    %c0_i32 = arith.constant 0 : i32
    %c0_i32_0 = arith.constant 0 : i32
    %c0_i32_1 = arith.constant 0 : i32
    return %c0_i32, %c0_i32_0 : i32, i32
  }
  func.func @transform_5(%arg0: i32) -> (i32, i32) {
    %c0_i32 = arith.constant 0 : i32
    %c0_i32_0 = arith.constant 0 : i32
    %c0_i32_1 = arith.constant 0 : i32
    return %c0_i32, %c0_i32_0 : i32, i32
  }
  func.func @transform_6(%arg0: i32) -> (i32, i32) {
    %c0_i32 = arith.constant 0 : i32
    %c0_i32_0 = arith.constant 0 : i32
    %c0_i32_1 = arith.constant 0 : i32
    return %c0_i32, %c0_i32_0 : i32, i32
  }
  func.func @transform_7(%arg0: i32) -> (i32, i32) {
    %c0_i32 = arith.constant 0 : i32
    %c0_i32_0 = arith.constant 0 : i32
    %c0_i32_1 = arith.constant 0 : i32
    return %c0_i32, %c0_i32_0 : i32, i32
  }
  func.func @transform_8(%arg0: i32) -> (i32, i32) {
    %c0_i32 = arith.constant 0 : i32
    %c0_i32_0 = arith.constant 0 : i32
    return %c0_i32, %arg0 : i32, i32
  }
}

</mosaic_0001>

<llo_original>
// kernel: tpu_custom_call.1
$region0: #{tpu_custom_call.1}
  #allocation0 [shape = 'u32[]', space=smem, size = 0x4, offset = 0x4, fixed_abs, tag = 'smem constant byte address 0x4 - core index']
  #allocation1 [shape = 'u32[144,128]{1,0:T(1,128)}', space=vmem, size = 0x12000, scoped, tag = 'internal scratch']
  %s0 = inlined_call_operand.vmem [shape: f32[3,4], index: 0, kind: input, shape index: {}]
  %s1 = inlined_call_operand.hbm [shape: f32[14,4096], index: 1, kind: input, shape index: {}]
  %s2 = inlined_call_operand.vmem [shape: bf16[96,24], index: 2, kind: input, shape index: {}]
  %s3 = inlined_call_operand.vmem [shape: f32[96,1], index: 3, kind: input, shape index: {}]
  %s4 = inlined_call_operand.vmem [shape: bf16[96,96], index: 4, kind: input, shape index: {}]
  %s5 = inlined_call_operand.vmem [shape: f32[96,1], index: 5, kind: input, shape index: {}]
  %s6 = inlined_call_operand.vmem [shape: bf16[9,96], index: 6, kind: input, shape index: {}]
  %s7 = inlined_call_operand.vmem [shape: f32[9,1], index: 7, kind: input, shape index: {}]
  %s8 = inlined_call_operand.hbm [shape: f32[3,4096], index: 8, kind: output, shape index: {}]
  %s9 = sld [smem:[#allocation0]]
  $region73: #{tpu_custom_call.1} parent=0
    _
  %s11 = ssub.s32 1, %s9
  %s12 = scalar_select 0, %s11, %s9
  $region1: #{tpu_custom_call.1} parent=0
    #allocation2 [shape = 'u8[2048]{0}', space=smem, size = 0x800, scoped, tag = 'input window, operand 0, single buffered']
    #allocation3 [shape = 's32[2]{0}', space=sflag, size = 0x8, scoped, tag = 'scoped memory for tpu_custom_call.1']
    #allocation4 [shape = 's32[2]{0}', space=sflag, size = 0x8, scoped, tag = 'scoped memory for tpu_custom_call.1']
    #allocation5 [shape = 's32[2]{0}', space=sflag, size = 0x8, scoped, tag = 'scoped memory for tpu_custom_call.1']
    #allocation6 [shape = 'u8[262144]{0}', space=vmem, size = 0x40000, scoped, tag = 'input window, operand 1']
    #allocation7 [shape = 'u8[65536]{0}', space=vmem, size = 0x10000, scoped, tag = 'output window, operand 0']
    %13 = vsyncpa [#allocation5], 0
    %14 = vsyncpa [#allocation3], 0
    %s15 = scalar_lea.sflag [#allocation3], 1
    %16 = vsyncpa %s15, 0
    %17 = vsyncpa [#allocation4], 0
    %s18 = scalar_lea.sflag [#allocation4], 1
    %19 = vsyncpa %s18, 0
    loop: start=0, step=1, limit=4
    $region2: #{tpu_custom_call.1} parent=1 // loop_pre_header
      _
    $region3: #{tpu_custom_call.1} parent=1 // loop_header
      %s21 = sphi 0, %s25
      %p22 = scmp.ge.s32.totalorder %s21, 4
      %s29 = sphi 0, %s29
      %s31 = sphi 0, %s29
      %s32 = sphi 0, %s31
      %s46 = sphi 0, %s32
      %s52 = sphi 0, %s54
      %s55 = sphi 0, %s52
      %s56 = sphi 0, %s55
      %s72 = sphi 0, %s56
      %s76 = sphi 0, %s76
      %s78 = sphi 0, %s76
      %s79 = sphi 0, %s78
      %s93 = sphi 0, %s79
      %s97 = sphi 0, %s97
      %s99 = sphi 0, %s97
      %s100 = sphi 0, %s99
      %s114 = sphi 0, %s100
      %s118 = sphi 0, %s118
      %s120 = sphi 0, %s118
      %s121 = sphi 0, %s120
      %s135 = sphi 0, %s121
      %s139 = sphi 0, %s139
      %s141 = sphi 0, %s139
      %s142 = sphi 0, %s141
      %s156 = sphi 0, %s142
      %s160 = sphi 0, %s160
      %s162 = sphi 0, %s160
      %s163 = sphi 0, %s162
      %s177 = sphi 0, %s163
      %s181 = sphi 0, %s181
      %s183 = sphi 0, %s181
      %s184 = sphi 0, %s183
      %s198 = sphi 0, %s184
      %s204 = sphi 0, %s206
      %s207 = sphi 0, %s204
      %s208 = sphi 0, %s207
      %s224 = sphi 0, %s208
    $region4: #{tpu_custom_call.1} parent=1 // loop_header_branch
      %24 = sbr.rel (%p22) target = $region8
    $region5: #{tpu_custom_call.1} parent=1 // loop_body
      %s26 = ssub.s32 %s21, 1
      %s27 = ssub.s32 %s21, 2
      %s28 = sadd.s32 %s21, 1
      %s30 = sadd.s32 %s29, 1
      %p33 = scmp.eq.s32.totalorder %s21, 1
      %p34 = scmp.ne.s32.totalorder %s29, %s31
      %p35 = scmp.eq.s32.totalorder %s21, 0
      %p36 = por %p34, %p35
      %p37 = scmp.ne.s32.totalorder %s29, %s31
      %p38 = scmp.eq.s32.totalorder %s26, 1
      %p39 = por %p37, %p38
      %p40 = scmp.ne.s32.totalorder %s31, %s32
      %p41 = scmp.eq.s32.totalorder %s26, 0
      %p42 = por %p40, %p41
      %p43 = scmp.ne.s32.totalorder %s31, %s32
      %p44 = scmp.eq.s32.totalorder %s27, 1
      %p45 = por %p43, %p44
      %p47 = scmp.ne.s32.totalorder %s32, %s46
      %p48 = scmp.eq.s32.totalorder %s27, 0
      %p49 = por %p47, %p48
      %s50 = ssub.s32 %s21, %s28
      %p51 = scmp.eq.s32.totalorder %s50, 0
      %s53 = sadd.s32 %s52, 1
      %s54 = scalar_select %p51, %s52, %s53
      %p57 = pneg %p51
      %p58 = scmp.eq.s32.totalorder %s21, 1
      %p59 = por %p57, %p58
      %p60 = scmp.ne.s32.totalorder %s52, %s55
      %p61 = scmp.eq.s32.totalorder %s21, 0
      %p62 = por %p60, %p61
      %p63 = scmp.ne.s32.totalorder %s52, %s55
      %p64 = scmp.eq.s32.totalorder %s26, 1
      %p65 = por %p63, %p64
      %p66 = scmp.ne.s32.totalorder %s55, %s56
      %p67 = scmp.eq.s32.totalorder %s26, 0
      %p68 = por %p66, %p67
      %p69 = scmp.ne.s32.totalorder %s55, %s56
      %p70 = scmp.eq.s32.totalorder %s27, 1
      %p71 = por %p69, %p70
      %p73 = scmp.ne.s32.totalorder %s56, %s72
      %p74 = scmp.eq.s32.totalorder %s27, 0
      %p75 = por %p73, %p74
      %s77 = sadd.s32 %s76, 1
      %p80 = scmp.eq.s32.totalorder %s21, 1
      %p81 = scmp.ne.s32.totalorder %s76, %s78
      %p82 = scmp.eq.s32.totalorder %s21, 0
      %p83 = por %p81, %p82
      %p84 = scmp.ne.s32.totalorder %s76, %s78
      %p85 = scmp.eq.s32.totalorder %s26, 1
      %p86 = por %p84, %p85
      %p87 = scmp.ne.s32.totalorder %s78, %s79
      %p88 = scmp.eq.s32.totalorder %s26, 0
      %p89 = por %p87, %p88
      %p90 = scmp.ne.s32.totalorder %s78, %s79
      %p91 = scmp.eq.s32.totalorder %s27, 1
      %p92 = por %p90, %p91
      %p94 = scmp.ne.s32.totalorder %s79, %s93
      %p95 = scmp.eq.s32.totalorder %s27, 0
      %p96 = por %p94, %p95
      %s98 = sadd.s32 %s97, 1
      %p101 = scmp.eq.s32.totalorder %s21, 1
      %p102 = scmp.ne.s32.totalorder %s97, %s99
      %p103 = scmp.eq.s32.totalorder %s21, 0
      %p104 = por %p102, %p103
      %p105 = scmp.ne.s32.totalorder %s97, %s99
      %p106 = scmp.eq.s32.totalorder %s26, 1
      %p107 = por %p105, %p106
      %p108 = scmp.ne.s32.totalorder %s99, %s100
      %p109 = scmp.eq.s32.totalorder %s26, 0
      %p110 = por %p108, %p109
      %p111 = scmp.ne.s32.totalorder %s99, %s100
      %p112 = scmp.eq.s32.totalorder %s27, 1
      %p113 = por %p111, %p112
      %p115 = scmp.ne.s32.totalorder %s100, %s114
      %p116 = scmp.eq.s32.totalorder %s27, 0
      %p117 = por %p115, %p116
      %s119 = sadd.s32 %s118, 1
      %p122 = scmp.eq.s32.totalorder %s21, 1
      %p123 = scmp.ne.s32.totalorder %s118, %s120
      %p124 = scmp.eq.s32.totalorder %s21, 0
      %p125 = por %p123, %p124
      %p126 = scmp.ne.s32.totalorder %s118, %s120
      %p127 = scmp.eq.s32.totalorder %s26, 1
      %p128 = por %p126, %p127
      %p129 = scmp.ne.s32.totalorder %s120, %s121
      %p130 = scmp.eq.s32.totalorder %s26, 0
      %p131 = por %p129, %p130
      %p132 = scmp.ne.s32.totalorder %s120, %s121
      %p133 = scmp.eq.s32.totalorder %s27, 1
      %p134 = por %p132, %p133
      %p136 = scmp.ne.s32.totalorder %s121, %s135
      %p137 = scmp.eq.s32.totalorder %s27, 0
      %p138 = por %p136, %p137
      %s140 = sadd.s32 %s139, 1
      %p143 = scmp.eq.s32.totalorder %s21, 1
      %p144 = scmp.ne.s32.totalorder %s139, %s141
      %p145 = scmp.eq.s32.totalorder %s21, 0
      %p146 = por %p144, %p145
      %p147 = scmp.ne.s32.totalorder %s139, %s141
      %p148 = scmp.eq.s32.totalorder %s26, 1
      %p149 = por %p147, %p148
      %p150 = scmp.ne.s32.totalorder %s141, %s142
      %p151 = scmp.eq.s32.totalorder %s26, 0
      %p152 = por %p150, %p151
      %p153 = scmp.ne.s32.totalorder %s141, %s142
      %p154 = scmp.eq.s32.totalorder %s27, 1
      %p155 = por %p153, %p154
      %p157 = scmp.ne.s32.totalorder %s142, %s156
      %p158 = scmp.eq.s32.totalorder %s27, 0
      %p159 = por %p157, %p158
      %s161 = sadd.s32 %s160, 1
      %p164 = scmp.eq.s32.totalorder %s21, 1
      %p165 = scmp.ne.s32.totalorder %s160, %s162
      %p166 = scmp.eq.s32.totalorder %s21, 0
      %p167 = por %p165, %p166
      %p168 = scmp.ne.s32.totalorder %s160, %s162
      %p169 = scmp.eq.s32.totalorder %s26, 1
      %p170 = por %p168, %p169
      %p171 = scmp.ne.s32.totalorder %s162, %s163
      %p172 = scmp.eq.s32.totalorder %s26, 0
      %p173 = por %p171, %p172
      %p174 = scmp.ne.s32.totalorder %s162, %s163
      %p175 = scmp.eq.s32.totalorder %s27, 1
      %p176 = por %p174, %p175
      %p178 = scmp.ne.s32.totalorder %s163, %s177
      %p179 = scmp.eq.s32.totalorder %s27, 0
      %p180 = por %p178, %p179
      %s182 = sadd.s32 %s181, 1
      %p185 = scmp.eq.s32.totalorder %s21, 1
      %p186 = scmp.ne.s32.totalorder %s181, %s183
      %p187 = scmp.eq.s32.totalorder %s21, 0
      %p188 = por %p186, %p187
      %p189 = scmp.ne.s32.totalorder %s181, %s183
      %p190 = scmp.eq.s32.totalorder %s26, 1
      %p191 = por %p189, %p190
      %p192 = scmp.ne.s32.totalorder %s183, %s184
      %p193 = scmp.eq.s32.totalorder %s26, 0
      %p194 = por %p192, %p193
      %p195 = scmp.ne.s32.totalorder %s183, %s184
      %p196 = scmp.eq.s32.totalorder %s27, 1
      %p197 = por %p195, %p196
      %p199 = scmp.ne.s32.totalorder %s184, %s198
      %p200 = scmp.eq.s32.totalorder %s27, 0
      %p201 = por %p199, %p200
      %s202 = ssub.s32 %s21, %s28
      %p203 = scmp.eq.s32.totalorder %s202, 0
      %s205 = sadd.s32 %s204, 1
      %s206 = scalar_select %p203, %s204, %s205
      %p209 = pneg %p203
      %p210 = scmp.eq.s32.totalorder %s21, 1
      %p211 = por %p209, %p210
      %p212 = scmp.ne.s32.totalorder %s204, %s207
      %p213 = scmp.eq.s32.totalorder %s21, 0
      %p214 = por %p212, %p213
      %p215 = scmp.ne.s32.totalorder %s204, %s207
      %p216 = scmp.eq.s32.totalorder %s26, 1
      %p217 = por %p215, %p216
      %p218 = scmp.ne.s32.totalorder %s207, %s208
      %p219 = scmp.eq.s32.totalorder %s26, 0
      %p220 = por %p218, %p219
      %p221 = scmp.ne.s32.totalorder %s207, %s208
      %p222 = scmp.eq.s32.totalorder %s27, 1
      %p223 = por %p221, %p222
      %p225 = scmp.ne.s32.totalorder %s208, %s224
      %p226 = scmp.eq.s32.totalorder %s27, 0
      %p227 = por %p225, %p226
      %p228 = scmp.le.s32.totalorder 1, %s21
      %p229 = scmp.lt.s32.totalorder %s21, 3
      %p230 = pnand %p228, %p229
      %p231 = pneg %p230
      // Predicated region
      $region9: #{tpu_custom_call.1} parent=5 // pred_check
        _
      $region10: #{tpu_custom_call.1} parent=5 // pred_check_branch
        %233 = sbr.rel (%p230) target = $region12
      $region11: #{tpu_custom_call.1} parent=5 // pred_region
        %s234 = ssub.s32 %s21, 1
        // Predicated region
        $region13: #{tpu_custom_call.1} parent=11 // pred_check
          %p235 = pneg %p42
        $region14: #{tpu_custom_call.1} parent=11 // pred_check_branch
          %237 = sbr.rel (%p235) target = $region16
        $region15: #{tpu_custom_call.1} parent=11 // pred_region
          %s239 = ssub.s32 64, 64
          %240 = vsyncadd [#allocation5], %s239
          %s242 = sshll.u32 %s0, 4
          %s243 = int_to_ptr.vmem [resolvable:$true] %s242
          %245 = dma.vmem_to_smem %s243, 64, [#allocation2], [#allocation5]
        $region16: #{tpu_custom_call.1} parent=11 // pred_fallthru
          _
        // Predicated region
        $region17: #{tpu_custom_call.1} parent=11 // pred_check
          %p246 = pneg %p89
        $region18: #{tpu_custom_call.1} parent=11 // pred_check_branch
          %248 = sbr.rel (%p246) target = $region20
        $region19: #{tpu_custom_call.1} parent=11 // pred_region
          _
        $region20: #{tpu_custom_call.1} parent=11 // pred_fallthru
          _
        // Predicated region
        $region21: #{tpu_custom_call.1} parent=11 // pred_check
          %p249 = pneg %p110
        $region22: #{tpu_custom_call.1} parent=11 // pred_check_branch
          %251 = sbr.rel (%p249) target = $region24
        $region23: #{tpu_custom_call.1} parent=11 // pred_region
          _
        $region24: #{tpu_custom_call.1} parent=11 // pred_fallthru
          _
        // Predicated region
        $region25: #{tpu_custom_call.1} parent=11 // pred_check
          %p252 = pneg %p131
        $region26: #{tpu_custom_call.1} parent=11 // pred_check_branch
          %254 = sbr.rel (%p252) target = $region28
        $region27: #{tpu_custom_call.1} parent=11 // pred_region
          _
        $region28: #{tpu_custom_call.1} parent=11 // pred_fallthru
          _
        // Predicated region
        $region29: #{tpu_custom_call.1} parent=11 // pred_check
          %p255 = pneg %p152
        $region30: #{tpu_custom_call.1} parent=11 // pred_check_branch
          %257 = sbr.rel (%p255) target = $region32
        $region31: #{tpu_custom_call.1} parent=11 // pred_region
          _
        $region32: #{tpu_custom_call.1} parent=11 // pred_fallthru
          _
        // Predicated region
        $region33: #{tpu_custom_call.1} parent=11 // pred_check
          %p258 = pneg %p173
        $region34: #{tpu_custom_call.1} parent=11 // pred_check_branch
          %260 = sbr.rel (%p258) target = $region36
        $region35: #{tpu_custom_call.1} parent=11 // pred_region
          _
        $region36: #{tpu_custom_call.1} parent=11 // pred_fallthru
          _
        // Predicated region
        $region37: #{tpu_custom_call.1} parent=11 // pred_check
          %p261 = pneg %p194
        $region38: #{tpu_custom_call.1} parent=11 // pred_check_branch
          %263 = sbr.rel (%p261) target = $region40
        $region39: #{tpu_custom_call.1} parent=11 // pred_region
          _
        $region40: #{tpu_custom_call.1} parent=11 // pred_fallthru
          _
      $region12: #{tpu_custom_call.1} parent=5 // pred_fallthru
        _
      %p264 = scmp.lt.s32.totalorder %s21, 2
      // Predicated region
      $region41: #{tpu_custom_call.1} parent=5 // pred_check
        %p265 = pneg %p264
      $region42: #{tpu_custom_call.1} parent=5 // pred_check_branch
        %267 = sbr.rel (%p265) target = $region44
      $region43: #{tpu_custom_call.1} parent=5 // pred_region
        // Predicated region
        $region45: #{tpu_custom_call.1} parent=43 // pred_check
          %p268 = pneg %p62
        $region46: #{tpu_custom_call.1} parent=43 // pred_check_branch
          %270 = sbr.rel (%p268) target = $region48
        $region47: #{tpu_custom_call.1} parent=43 // pred_region
          %s271 = sand.u32 %s52, 1
          %s272 = scalar_lea.sflag [#allocation3], %s271
          %s273 = sand.u32 %s52, 1
          %s274 = smul.addr %s273, 256
          %s275 = scalar_lea.vmem [#allocation6], %s274
          %s276 = smul.u32 16, %s21
          %s278 = ssub.s32 4096, 4096
          %279 = vsyncadd %s272, %s278
          %s280 = smul.addr %s276, 128
          %s281 = scalar_lea.hbm %s1, %s280
          %s282 = sshll.u32 %s275, 4
          %s283 = int_to_ptr.vmem [resolvable:$true] %s282
          %288 = dma.hbm_to_vmem [thread:$0]  %s281, 4096, %s283, %s272, 4096, 2048, 128
        $region48: #{tpu_custom_call.1} parent=43 // pred_fallthru
          _
      $region44: #{tpu_custom_call.1} parent=5 // pred_fallthru
        _
      %p289 = scmp.le.s32.totalorder 1, %s21
      %p290 = scmp.lt.s32.totalorder %s21, 3
      %p291 = pnand %p289, %p290
      %p292 = pneg %p291
      // Predicated region
      $region49: #{tpu_custom_call.1} parent=5 // pred_check
        _
      $region50: #{tpu_custom_call.1} parent=5 // pred_check_branch
        %294 = sbr.rel (%p291) target = $region52
      $region51: #{tpu_custom_call.1} parent=5 // pred_region
        %s295 = ssub.s32 %s21, 1
        // Predicated region
        $region53: #{tpu_custom_call.1} parent=51 // pred_check
          %p296 = pneg %p42
        $region54: #{tpu_custom_call.1} parent=51 // pred_check_branch
          %298 = sbr.rel (%p296) target = $region56
        $region55: #{tpu_custom_call.1} parent=51 // pred_region
          %299 = dma.done [#allocation5], 64
        $region56: #{tpu_custom_call.1} parent=51 // pred_fallthru
          _
        %s300 = sand.u32 %s55, 1
        %s301 = scalar_lea.sflag [#allocation3], %s300
        %s302 = sand.u32 %s55, 1
        %s303 = smul.addr %s302, 256
        %s304 = scalar_lea.vmem [#allocation6], %s303
        // Predicated region
        $region57: #{tpu_custom_call.1} parent=51 // pred_check
          %p305 = pneg %p68
        $region58: #{tpu_custom_call.1} parent=51 // pred_check_branch
          %307 = sbr.rel (%p305) target = $region60
        $region59: #{tpu_custom_call.1} parent=51 // pred_region
          %308 = dma.done %s301, 4096
        $region60: #{tpu_custom_call.1} parent=51 // pred_fallthru
          _
        %309 = sfence
        %p310 = pneg %p42
        %p311 = pneg %p39
        %s312 = sand.u32 %s55, 1
        %s313 = scalar_lea.sflag [#allocation3], %s312
        %s314 = sand.u32 %s55, 1
        %s315 = smul.addr %s314, 256
        %s316 = scalar_lea.vmem [#allocation6], %s315
        %p317 = pneg %p68
        %p318 = pneg %p65
        %p319 = pneg %p89
        %p320 = pneg %p86
        %p321 = pneg %p110
        %p322 = pneg %p107
        %p323 = pneg %p131
        %p324 = pneg %p128
        %p325 = pneg %p152
        %p326 = pneg %p149
        %p327 = pneg %p173
        %p328 = pneg %p170
        %p329 = pneg %p194
        %p330 = pneg %p191
        %p331 = pneg %p220
        %p332 = pneg %p217
        %s333 = sand.u32 %s207, 1
        %s334 = scalar_lea.sflag [#allocation4], %s333
        %s335 = sand.u32 %s207, 1
        %s336 = smul.addr %s335, 64
        %s337 = scalar_lea.vmem [#allocation7], %s336
        %s338 = smul.u32 16, %s26
        %s339 = smul.u32 16, %s26
        %v341 = vld [vmem:[%s304] ss:$8 sm:$0xf]
        %v342 = vld [vmem:[%s304] ss:$8 sm:$0xf0]
        %v343 = vor.u32 %v341, %v342
        %s344 = scalar_lea.vmem %s304, 64 [#allocation6]
        %v345 = vld [vmem:[%s344] ss:$8 sm:$0xf]
        %v346 = vld [vmem:[%s344] ss:$8 sm:$0xf0]
        %v347 = vor.u32 %v345, %v346
        %s348 = scalar_lea.vmem %s304, 1 [#allocation6]
        %v349 = vld [vmem:[%s348] ss:$8 sm:$0xf]
        %v350 = vld [vmem:[%s348] ss:$8 sm:$0xf0]
        %v351 = vor.u32 %v349, %v350
        %s352 = scalar_lea.vmem %s304, 65 [#allocation6]
        %v353 = vld [vmem:[%s352] ss:$8 sm:$0xf]
        %v354 = vld [vmem:[%s352] ss:$8 sm:$0xf0]
        %v355 = vor.u32 %v353, %v354
        %s356 = scalar_lea.vmem %s304, 2 [#allocation6]
        %v357 = vld [vmem:[%s356] ss:$8 sm:$0xf]
        %v358 = vld [vmem:[%s356] ss:$8 sm:$0xf0]
        %v359 = vor.u32 %v357, %v358
        %s360 = scalar_lea.vmem %s304, 66 [#allocation6]
        %v361 = vld [vmem:[%s360] ss:$8 sm:$0xf]
        %v362 = vld [vmem:[%s360] ss:$8 sm:$0xf0]
        %v363 = vor.u32 %v361, %v362
        %s364 = sld [smem:[#allocation2]]
        %v365 = vstv %s364
        %v366 = vmul.f32 %v365, %v343
        %v367 = vmul.f32 %v365, %v347
        %s368 = sld [smem:[#allocation2 + $0x1]]
        %v369 = vstv %s368
        %v370 = vmul.f32 %v369, %v351
        %v371 = vmul.f32 %v369, %v355
        %v372 = vadd.f32 %v366, %v370
        %v373 = vadd.f32 %v367, %v371
        %s374 = sld [smem:[#allocation2 + $0x2]]
        %v375 = vstv %s374
        %v376 = vmul.f32 %v375, %v359
        %v377 = vmul.f32 %v375, %v363
        %v378 = vadd.f32 %v372, %v376
        %v379 = vadd.f32 %v373, %v377
        %s380 = sld [smem:[#allocation2 + $0x3]]
        %v381 = vstv %s380
        %v382 = vadd.f32 %v378, %v381
        %v383 = vadd.f32 %v379, %v381
        %s384 = sld [smem:[#allocation2 + $0x80]]
        %v385 = vstv %s384
        %v386 = vmul.f32 %v385, %v343
        %v387 = vmul.f32 %v385, %v347
        %s388 = sld [smem:[#allocation2 + $0x81]]
        %v389 = vstv %s388
        %v390 = vmul.f32 %v389, %v351
        %v391 = vmul.f32 %v389, %v355
        %v392 = vadd.f32 %v386, %v390
        %v393 = vadd.f32 %v387, %v391
        %s394 = sld [smem:[#allocation2 + $0x82]]
        %v395 = vstv %s394
        %v396 = vmul.f32 %v395, %v359
        %v397 = vmul.f32 %v395, %v363
        %v398 = vadd.f32 %v392, %v396
        %v399 = vadd.f32 %v393, %v397
        %s400 = sld [smem:[#allocation2 + $0x83]]
        %v401 = vstv %s400
        %v402 = vadd.f32 %v398, %v401
        %v403 = vadd.f32 %v399, %v401
        %vm404 = vcmp.lt.f32.partialorder %v402, %v382
        %vm405 = vcmp.lt.f32.partialorder %v403, %v383
        %v406 = vsel %vm404, %v402, %v382
        %v407 = vsel %vm405, %v403, %v383
        %v408 = vsel %vm404, 1, 0
        %v409 = vsel %vm405, 1, 0
        %s410 = sld [smem:[#allocation2 + $0x100]]
        %v411 = vstv %s410
        %v412 = vmul.f32 %v411, %v343
        %v413 = vmul.f32 %v411, %v347
        %s414 = sld [smem:[#allocation2 + $0x101]]
        %v415 = vstv %s414
        %v416 = vmul.f32 %v415, %v351
        %v417 = vmul.f32 %v415, %v355
        %v418 = vadd.f32 %v412, %v416
        %v419 = vadd.f32 %v413, %v417
        %s420 = sld [smem:[#allocation2 + $0x102]]
        %v421 = vstv %s420
        %v422 = vmul.f32 %v421, %v359
        %v423 = vmul.f32 %v421, %v363
        %v424 = vadd.f32 %v418, %v422
        %v425 = vadd.f32 %v419, %v423
        %s426 = sld [smem:[#allocation2 + $0x103]]
        %v427 = vstv %s426
        %v428 = vadd.f32 %v424, %v427
        %v429 = vadd.f32 %v425, %v427
        %vm430 = vcmp.lt.f32.partialorder %v428, %v406
        %vm431 = vcmp.lt.f32.partialorder %v429, %v407
        %v432 = vsel %vm430, 2, %v408
        %v433 = vsel %vm431, 2, %v409
        %s434 = scalar_lea.vmem %s304, 3 [#allocation6]
        %v435 = vld [vmem:[%s434] ss:$8 sm:$0xf]
        %v436 = vld [vmem:[%s434] ss:$8 sm:$0xf0]
        %v437 = vor.u32 %v435, %v436
        %s438 = scalar_lea.vmem %s304, 67 [#allocation6]
        %v439 = vld [vmem:[%s438] ss:$8 sm:$0xf]
        %v440 = vld [vmem:[%s438] ss:$8 sm:$0xf0]
        %v441 = vor.u32 %v439, %v440
        %s442 = scalar_lea.vmem %s304, 4 [#allocation6]
        %v443 = vld [vmem:[%s442] ss:$8 sm:$0xf]
        %v444 = vld [vmem:[%s442] ss:$8 sm:$0xf0]
        %v445 = vor.u32 %v443, %v444
        %s446 = scalar_lea.vmem %s304, 68 [#allocation6]
        %v447 = vld [vmem:[%s446] ss:$8 sm:$0xf]
        %v448 = vld [vmem:[%s446] ss:$8 sm:$0xf0]
        %v449 = vor.u32 %v447, %v448
        %s450 = scalar_lea.vmem %s304, 5 [#allocation6]
        %v451 = vld [vmem:[%s450] ss:$8 sm:$0xf]
        %v452 = vld [vmem:[%s450] ss:$8 sm:$0xf0]
        %v453 = vor.u32 %v451, %v452
        %s454 = scalar_lea.vmem %s304, 69 [#allocation6]
        %v455 = vld [vmem:[%s454] ss:$8 sm:$0xf]
        %v456 = vld [vmem:[%s454] ss:$8 sm:$0xf0]
        %v457 = vor.u32 %v455, %v456
        %v458 = vmul.f32 %v437, %v437
        %v459 = vmul.f32 %v441, %v441
        %v460 = vmul.f32 %v445, %v445
        %v461 = vmul.f32 %v449, %v449
        %v462 = vmul.f32 %v453, %v453
        %v463 = vmul.f32 %v457, %v457
        %v464 = vmul.f32 %v445, 0.48860252
        %v465 = vmul.f32 %v449, 0.48860252
        %v466 = vmul.f32 %v453, 0.48860252
        %v467 = vmul.f32 %v457, 0.48860252
        %v468 = vmul.f32 %v437, 0.48860252
        %v469 = vmul.f32 %v441, 0.48860252
        %v470 = vmul.f32 %v437, 1.0925485
        %v471 = vmul.f32 %v441, 1.0925485
        %v472 = vmul.f32 %v470, %v445
        %v473 = vmul.f32 %v471, %v449
        %v474 = vmul.f32 %v445, 1.0925485
        %v475 = vmul.f32 %v449, 1.0925485
        %v476 = vmul.f32 %v474, %v453
        %v477 = vmul.f32 %v475, %v457
        %v478 = vmul.f32 %v462, 0.9461747
        %v479 = vmul.f32 %v463, 0.9461747
        %v480 = vsub.f32 %v478, 0.31539157
        %v481 = vsub.f32 %v479, 0.31539157
        %v482 = vmul.f32 %v470, %v453
        %v483 = vmul.f32 %v471, %v457
        %v484 = vsub.f32 %v458, %v460
        %v485 = vsub.f32 %v459, %v461
        %v486 = vmul.f32 %v484, 0.54627424
        %v487 = vmul.f32 %v485, 0.54627424
        %v488 = vmul.f32 %v445, 0.5900436
        %v489 = vmul.f32 %v449, 0.5900436
        %v490 = vmul.f32 %v458, 3.0
        %v491 = vmul.f32 %v459, 3.0
        %v492 = vsub.f32 %v490, %v460
        %v493 = vsub.f32 %v491, %v461
        %v494 = vmul.f32 %v488, %v492
        %v495 = vmul.f32 %v489, %v493
        %v496 = vmul.f32 %v437, 2.8906114
        %v497 = vmul.f32 %v441, 2.8906114
        %v498 = vmul.f32 %v496, %v445
        %v499 = vmul.f32 %v497, %v449
        %v500 = vmul.f32 %v498, %v453
        %v501 = vmul.f32 %v499, %v457
        %v502 = vmul.f32 %v445, 0.4570458
        %v503 = vmul.f32 %v449, 0.4570458
        %v504 = vmul.f32 %v462, 5.0
        %v505 = vmul.f32 %v463, 5.0
        %v506 = vsub.f32 %v504, 1.0
        %v507 = vsub.f32 %v505, 1.0
        %v508 = vmul.f32 %v502, %v506
        %v509 = vmul.f32 %v503, %v507
        %v510 = vmul.f32 %v453, 0.37317634
        %v511 = vmul.f32 %v457, 0.37317634
        %v512 = vsub.f32 %v504, 3.0
        %v513 = vsub.f32 %v505, 3.0
        %v514 = vmul.f32 %v510, %v512
        %v515 = vmul.f32 %v511, %v513
        %v516 = vmul.f32 %v437, 0.4570458
        %v517 = vmul.f32 %v441, 0.4570458
        %v518 = vmul.f32 %v516, %v506
        %v519 = vmul.f32 %v517, %v507
        %v520 = vmul.f32 %v453, 1.4453057
        %v521 = vmul.f32 %v457, 1.4453057
        %v522 = vmul.f32 %v520, %v484
        %v523 = vmul.f32 %v521, %v485
        %v524 = vmul.f32 %v437, 0.5900436
        %v525 = vmul.f32 %v441, 0.5900436
        %v526 = vmul.f32 %v460, 3.0
        %v527 = vmul.f32 %v461, 3.0
        %v528 = vsub.f32 %v458, %v526
        %v529 = vsub.f32 %v459, %v527
        %v530 = vmul.f32 %v524, %v528
        %v531 = vmul.f32 %v525, %v529
        %v532 = vld [vmem:[%s304] sm:$0xc0]
        %v533 = vld [vmem:[%s304 + $0x8] sm:$0xc0]
        %v534 = vld [vmem:[%s304 + $0x10] sm:$0xc0]
        %v535 = vld [vmem:[%s304 + $0x18] sm:$0xc0]
        %v536 = vld [vmem:[%s304 + $0x20] sm:$0xc0]
        %v537 = vld [vmem:[%s304 + $0x28] sm:$0xc0]
        %v538 = vld [vmem:[%s304 + $0x30] sm:$0xc0]
        %v539 = vld [vmem:[%s304 + $0x38] sm:$0xc0]
        %v540 = vld [vmem:[%s304 + $0x40] sm:$0xc0]
        %v541 = vld [vmem:[%s304 + $0x48] sm:$0xc0]
        %v542 = vld [vmem:[%s304 + $0x50] sm:$0xc0]
        %v543 = vld [vmem:[%s304 + $0x58] sm:$0xc0]
        %v544 = vld [vmem:[%s304 + $0x60] sm:$0xc0]
        %v545 = vld [vmem:[%s304 + $0x68] sm:$0xc0]
        %v546 = vld [vmem:[%s304 + $0x70] sm:$0xc0]
        %v547 = vld [vmem:[%s304 + $0x78] sm:$0xc0]
        %v548 = vld [vmem:[%s304 + $0x80] sm:$0x3f]
        %v549 = vld [vmem:[%s304 + $0x88] sm:$0x3f]
        %v550 = vld [vmem:[%s304 + $0x90] sm:$0x3f]
        %v551 = vld [vmem:[%s304 + $0x98] sm:$0x3f]
        %v552 = vld [vmem:[%s304 + $0xa0] sm:$0x3f]
        %v553 = vld [vmem:[%s304 + $0xa8] sm:$0x3f]
        %v554 = vld [vmem:[%s304 + $0xb0] sm:$0x3f]
        %v555 = vld [vmem:[%s304 + $0xb8] sm:$0x3f]
        %v556 = vld [vmem:[%s304 + $0xc0] sm:$0x3f]
        %v557 = vld [vmem:[%s304 + $0xc8] sm:$0x3f]
        %v558 = vld [vmem:[%s304 + $0xd0] sm:$0x3f]
        %v559 = vld [vmem:[%s304 + $0xd8] sm:$0x3f]
        %v560 = vld [vmem:[%s304 + $0xe0] sm:$0x3f]
        %v561 = vld [vmem:[%s304 + $0xe8] sm:$0x3f]
        %v562 = vld [vmem:[%s304 + $0xf0] sm:$0x3f]
        %v563 = vld [vmem:[%s304 + $0xf8] sm:$0x3f]
        %v566 = vlaneseq
        %v567 = vshrl.u32 %v566, 7
        %v568 = vsub.s32 0, %v567
        %v569 = vrot.slane %v464, %v568
        %v570 = vlaneseq
        %v571 = vshrl.u32 %v570, 7
        %v572 = vsub.s32 1, %v571
        %v573 = vrot.slane %v464, %v572
        %v574 = vlaneseq
        %v575 = vshrl.u32 %v574, 7
        %v576 = vsub.s32 2, %v575
        %v577 = vrot.slane %v464, %v576
        %v578 = vlaneseq
        %v579 = vshrl.u32 %v578, 7
        %v580 = vsub.s32 3, %v579
        %v581 = vrot.slane %v464, %v580
        %v582 = vlaneseq
        %v583 = vshrl.u32 %v582, 7
        %v584 = vsub.s32 4, %v583
        %v585 = vrot.slane %v464, %v584
        %v586 = vlaneseq
        %v587 = vshrl.u32 %v586, 7
        %v588 = vsub.s32 5, %v587
        %v589 = vrot.slane %v464, %v588
        %v590 = vlaneseq
        %v591 = vshrl.u32 %v590, 7
        %v592 = vsub.s32 6, %v591
        %v593 = vrot.slane %v464, %v592
        %v594 = vlaneseq
        %v595 = vshrl.u32 %v594, 7
        %v596 = vsub.s32 7, %v595
        %v597 = vrot.slane %v464, %v596
        %v598 = vlaneseq
        %v599 = vshrl.u32 %v598, 7
        %v600 = vsub.s32 0, %v599
        %v601 = vrot.slane %v465, %v600
        %v602 = vlaneseq
        %v603 = vshrl.u32 %v602, 7
        %v604 = vsub.s32 1, %v603
        %v605 = vrot.slane %v465, %v604
        %v606 = vlaneseq
        %v607 = vshrl.u32 %v606, 7
        %v608 = vsub.s32 2, %v607
        %v609 = vrot.slane %v465, %v608
        %v610 = vlaneseq
        %v611 = vshrl.u32 %v610, 7
        %v612 = vsub.s32 3, %v611
        %v613 = vrot.slane %v465, %v612
        %v614 = vlaneseq
        %v615 = vshrl.u32 %v614, 7
        %v616 = vsub.s32 4, %v615
        %v617 = vrot.slane %v465, %v616
        %v618 = vlaneseq
        %v619 = vshrl.u32 %v618, 7
        %v620 = vsub.s32 5, %v619
        %v621 = vrot.slane %v465, %v620
        %v622 = vlaneseq
        %v623 = vshrl.u32 %v622, 7
        %v624 = vsub.s32 6, %v623
        %v625 = vrot.slane %v465, %v624
        %v626 = vlaneseq
        %v627 = vshrl.u32 %v626, 7
        %v628 = vsub.s32 7, %v627
        %v629 = vrot.slane %v465, %v628
        %v648 = vlaneseq
        %v649 = vshrl.u32 %v648, 7
        %v650 = vsub.s32 0, %v649
        %v651 = vrot.slane %v466, %v650
        %v652 = vlaneseq
        %v653 = vshrl.u32 %v652, 7
        %v654 = vsub.s32 1, %v653
        %v655 = vrot.slane %v466, %v654
        %v656 = vlaneseq
        %v657 = vshrl.u32 %v656, 7
        %v658 = vsub.s32 2, %v657
        %v659 = vrot.slane %v466, %v658
        %v660 = vlaneseq
        %v661 = vshrl.u32 %v660, 7
        %v662 = vsub.s32 3, %v661
        %v663 = vrot.slane %v466, %v662
        %v664 = vlaneseq
        %v665 = vshrl.u32 %v664, 7
        %v666 = vsub.s32 4, %v665
        %v667 = vrot.slane %v466, %v666
        %v668 = vlaneseq
        %v669 = vshrl.u32 %v668, 7
        %v670 = vsub.s32 5, %v669
        %v671 = vrot.slane %v466, %v670
        %v672 = vlaneseq
        %v673 = vshrl.u32 %v672, 7
        %v674 = vsub.s32 6, %v673
        %v675 = vrot.slane %v466, %v674
        %v676 = vlaneseq
        %v677 = vshrl.u32 %v676, 7
        %v678 = vsub.s32 7, %v677
        %v679 = vrot.slane %v466, %v678
        %v680 = vlaneseq
        %v681 = vshrl.u32 %v680, 7
        %v682 = vsub.s32 0, %v681
        %v683 = vrot.slane %v467, %v682
        %v684 = vlaneseq
        %v685 = vshrl.u32 %v684, 7
        %v686 = vsub.s32 1, %v685
        %v687 = vrot.slane %v467, %v686
        %v688 = vlaneseq
        %v689 = vshrl.u32 %v688, 7
        %v690 = vsub.s32 2, %v689
        %v691 = vrot.slane %v467, %v690
        %v692 = vlaneseq
        %v693 = vshrl.u32 %v692, 7
        %v694 = vsub.s32 3, %v693
        %v695 = vrot.slane %v467, %v694
        %v696 = vlaneseq
        %v697 = vshrl.u32 %v696, 7
        %v698 = vsub.s32 4, %v697
        %v699 = vrot.slane %v467, %v698
        %v700 = vlaneseq
        %v701 = vshrl.u32 %v700, 7
        %v702 = vsub.s32 5, %v701
        %v703 = vrot.slane %v467, %v702
        %v704 = vlaneseq
        %v705 = vshrl.u32 %v704, 7
        %v706 = vsub.s32 6, %v705
        %v707 = vrot.slane %v467, %v706
        %v708 = vlaneseq
        %v709 = vshrl.u32 %v708, 7
        %v710 = vsub.s32 7, %v709
        %v711 = vrot.slane %v467, %v710
        %v730 = vlaneseq
        %v731 = vshrl.u32 %v730, 7
        %v732 = vsub.s32 0, %v731
        %v733 = vrot.slane %v468, %v732
        %v734 = vlaneseq
        %v735 = vshrl.u32 %v734, 7
        %v736 = vsub.s32 1, %v735
        %v737 = vrot.slane %v468, %v736
        %v738 = vlaneseq
        %v739 = vshrl.u32 %v738, 7
        %v740 = vsub.s32 2, %v739
        %v741 = vrot.slane %v468, %v740
        %v742 = vlaneseq
        %v743 = vshrl.u32 %v742, 7
        %v744 = vsub.s32 3, %v743
        %v745 = vrot.slane %v468, %v744
        %v746 = vlaneseq
        %v747 = vshrl.u32 %v746, 7
        %v748 = vsub.s32 4, %v747
        %v749 = vrot.slane %v468, %v748
        %v750 = vlaneseq
        %v751 = vshrl.u32 %v750, 7
        %v752 = vsub.s32 5, %v751
        %v753 = vrot.slane %v468, %v752
        %v754 = vlaneseq
        %v755 = vshrl.u32 %v754, 7
        %v756 = vsub.s32 6, %v755
        %v757 = vrot.slane %v468, %v756
        %v758 = vlaneseq
        %v759 = vshrl.u32 %v758, 7
        %v760 = vsub.s32 7, %v759
        %v761 = vrot.slane %v468, %v760
        %v762 = vlaneseq
        %v763 = vshrl.u32 %v762, 7
        %v764 = vsub.s32 0, %v763
        %v765 = vrot.slane %v469, %v764
        %v766 = vlaneseq
        %v767 = vshrl.u32 %v766, 7
        %v768 = vsub.s32 1, %v767
        %v769 = vrot.slane %v469, %v768
        %v770 = vlaneseq
        %v771 = vshrl.u32 %v770, 7
        %v772 = vsub.s32 2, %v771
        %v773 = vrot.slane %v469, %v772
        %v774 = vlaneseq
        %v775 = vshrl.u32 %v774, 7
        %v776 = vsub.s32 3, %v775
        %v777 = vrot.slane %v469, %v776
        %v778 = vlaneseq
        %v779 = vshrl.u32 %v778, 7
        %v780 = vsub.s32 4, %v779
        %v781 = vrot.slane %v469, %v780
        %v782 = vlaneseq
        %v783 = vshrl.u32 %v782, 7
        %v784 = vsub.s32 5, %v783
        %v785 = vrot.slane %v469, %v784
        %v786 = vlaneseq
        %v787 = vshrl.u32 %v786, 7
        %v788 = vsub.s32 6, %v787
        %v789 = vrot.slane %v469, %v788
        %v790 = vlaneseq
        %v791 = vshrl.u32 %v790, 7
        %v792 = vsub.s32 7, %v791
        %v793 = vrot.slane %v469, %v792
        %v812 = vlaneseq
        %v813 = vshrl.u32 %v812, 7
        %v814 = vsub.s32 0, %v813
        %v815 = vrot.slane %v472, %v814
        %v816 = vlaneseq
        %v817 = vshrl.u32 %v816, 7
        %v818 = vsub.s32 1, %v817
        %v819 = vrot.slane %v472, %v818
        %v820 = vlaneseq
        %v821 = vshrl.u32 %v820, 7
        %v822 = vsub.s32 2, %v821
        %v823 = vrot.slane %v472, %v822
        %v824 = vlaneseq
        %v825 = vshrl.u32 %v824, 7
        %v826 = vsub.s32 3, %v825
        %v827 = vrot.slane %v472, %v826
        %v828 = vlaneseq
        %v829 = vshrl.u32 %v828, 7
        %v830 = vsub.s32 4, %v829
        %v831 = vrot.slane %v472, %v830
        %v832 = vlaneseq
        %v833 = vshrl.u32 %v832, 7
        %v834 = vsub.s32 5, %v833
        %v835 = vrot.slane %v472, %v834
        %v836 = vlaneseq
        %v837 = vshrl.u32 %v836, 7
        %v838 = vsub.s32 6, %v837
        %v839 = vrot.slane %v472, %v838
        %v840 = vlaneseq
        %v841 = vshrl.u32 %v840, 7
        %v842 = vsub.s32 7, %v841
        %v843 = vrot.slane %v472, %v842
        %v844 = vlaneseq
        %v845 = vshrl.u32 %v844, 7
        %v846 = vsub.s32 0, %v845
        %v847 = vrot.slane %v473, %v846
        %v848 = vlaneseq
        %v849 = vshrl.u32 %v848, 7
        %v850 = vsub.s32 1, %v849
        %v851 = vrot.slane %v473, %v850
        %v852 = vlaneseq
        %v853 = vshrl.u32 %v852, 7
        %v854 = vsub.s32 2, %v853
        %v855 = vrot.slane %v473, %v854
        %v856 = vlaneseq
        %v857 = vshrl.u32 %v856, 7
        %v858 = vsub.s32 3, %v857
        %v859 = vrot.slane %v473, %v858
        %v860 = vlaneseq
        %v861 = vshrl.u32 %v860, 7
        %v862 = vsub.s32 4, %v861
        %v863 = vrot.slane %v473, %v862
        %v864 = vlaneseq
        %v865 = vshrl.u32 %v864, 7
        %v866 = vsub.s32 5, %v865
        %v867 = vrot.slane %v473, %v866
        %v868 = vlaneseq
        %v869 = vshrl.u32 %v868, 7
        %v870 = vsub.s32 6, %v869
        %v871 = vrot.slane %v473, %v870
        %v872 = vlaneseq
        %v873 = vshrl.u32 %v872, 7
        %v874 = vsub.s32 7, %v873
        %v875 = vrot.slane %v473, %v874
        %v894 = vlaneseq
        %v895 = vshrl.u32 %v894, 7
        %v896 = vsub.s32 0, %v895
        %v897 = vrot.slane %v476, %v896
        %v898 = vlaneseq
        %v899 = vshrl.u32 %v898, 7
        %v900 = vsub.s32 1, %v899
        %v901 = vrot.slane %v476, %v900
        %v902 = vlaneseq
        %v903 = vshrl.u32 %v902, 7
        %v904 = vsub.s32 2, %v903
        %v905 = vrot.slane %v476, %v904
        %v906 = vlaneseq
        %v907 = vshrl.u32 %v906, 7
        %v908 = vsub.s32 3, %v907
        %v909 = vrot.slane %v476, %v908
        %v910 = vlaneseq
        %v911 = vshrl.u32 %v910, 7
        %v912 = vsub.s32 4, %v911
        %v913 = vrot.slane %v476, %v912
        %v914 = vlaneseq
        %v915 = vshrl.u32 %v914, 7
        %v916 = vsub.s32 5, %v915
        %v917 = vrot.slane %v476, %v916
        %v918 = vlaneseq
        %v919 = vshrl.u32 %v918, 7
        %v920 = vsub.s32 6, %v919
        %v921 = vrot.slane %v476, %v920
        %v922 = vlaneseq
        %v923 = vshrl.u32 %v922, 7
        %v924 = vsub.s32 7, %v923
        %v925 = vrot.slane %v476, %v924
        %v926 = vlaneseq
        %v927 = vshrl.u32 %v926, 7
        %v928 = vsub.s32 0, %v927
        %v929 = vrot.slane %v477, %v928
        %v930 = vlaneseq
        %v931 = vshrl.u32 %v930, 7
        %v932 = vsub.s32 1, %v931
        %v933 = vrot.slane %v477, %v932
        %v934 = vlaneseq
        %v935 = vshrl.u32 %v934, 7
        %v936 = vsub.s32 2, %v935
        %v937 = vrot.slane %v477, %v936
        %v938 = vlaneseq
        %v939 = vshrl.u32 %v938, 7
        %v940 = vsub.s32 3, %v939
        %v941 = vrot.slane %v477, %v940
        %v942 = vlaneseq
        %v943 = vshrl.u32 %v942, 7
        %v944 = vsub.s32 4, %v943
        %v945 = vrot.slane %v477, %v944
        %v946 = vlaneseq
        %v947 = vshrl.u32 %v946, 7
        %v948 = vsub.s32 5, %v947
        %v949 = vrot.slane %v477, %v948
        %v950 = vlaneseq
        %v951 = vshrl.u32 %v950, 7
        %v952 = vsub.s32 6, %v951
        %v953 = vrot.slane %v477, %v952
        %v954 = vlaneseq
        %v955 = vshrl.u32 %v954, 7
        %v956 = vsub.s32 7, %v955
        %v957 = vrot.slane %v477, %v956
        %v976 = vlaneseq
        %v977 = vshrl.u32 %v976, 7
        %v978 = vsub.s32 0, %v977
        %v979 = vrot.slane %v480, %v978
        %v980 = vlaneseq
        %v981 = vshrl.u32 %v980, 7
        %v982 = vsub.s32 1, %v981
        %v983 = vrot.slane %v480, %v982
        %v984 = vlaneseq
        %v985 = vshrl.u32 %v984, 7
        %v986 = vsub.s32 2, %v985
        %v987 = vrot.slane %v480, %v986
        %v988 = vlaneseq
        %v989 = vshrl.u32 %v988, 7
        %v990 = vsub.s32 3, %v989
        %v991 = vrot.slane %v480, %v990
        %v992 = vlaneseq
        %v993 = vshrl.u32 %v992, 7
        %v994 = vsub.s32 4, %v993
        %v995 = vrot.slane %v480, %v994
        %v996 = vlaneseq
        %v997 = vshrl.u32 %v996, 7
        %v998 = vsub.s32 5, %v997
        %v999 = vrot.slane %v480, %v998
        %v1000 = vlaneseq
        %v1001 = vshrl.u32 %v1000, 7
        %v1002 = vsub.s32 6, %v1001
        %v1003 = vrot.slane %v480, %v1002
        %v1004 = vlaneseq
        %v1005 = vshrl.u32 %v1004, 7
        %v1006 = vsub.s32 7, %v1005
        %v1007 = vrot.slane %v480, %v1006
        %v1008 = vlaneseq
        %v1009 = vshrl.u32 %v1008, 7
        %v1010 = vsub.s32 0, %v1009
        %v1011 = vrot.slane %v481, %v1010
        %v1012 = vlaneseq
        %v1013 = vshrl.u32 %v1012, 7
        %v1014 = vsub.s32 1, %v1013
        %v1015 = vrot.slane %v481, %v1014
        %v1016 = vlaneseq
        %v1017 = vshrl.u32 %v1016, 7
        %v1018 = vsub.s32 2, %v1017
        %v1019 = vrot.slane %v481, %v1018
        %v1020 = vlaneseq
        %v1021 = vshrl.u32 %v1020, 7
        %v1022 = vsub.s32 3, %v1021
        %v1023 = vrot.slane %v481, %v1022
        %v1024 = vlaneseq
        %v1025 = vshrl.u32 %v1024, 7
        %v1026 = vsub.s32 4, %v1025
        %v1027 = vrot.slane %v481, %v1026
        %v1028 = vlaneseq
        %v1029 = vshrl.u32 %v1028, 7
        %v1030 = vsub.s32 5, %v1029
        %v1031 = vrot.slane %v481, %v1030
        %v1032 = vlaneseq
        %v1033 = vshrl.u32 %v1032, 7
        %v1034 = vsub.s32 6, %v1033
        %v1035 = vrot.slane %v481, %v1034
        %v1036 = vlaneseq
        %v1037 = vshrl.u32 %v1036, 7
        %v1038 = vsub.s32 7, %v1037
        %v1039 = vrot.slane %v481, %v1038
        %v1058 = vlaneseq
        %v1059 = vshrl.u32 %v1058, 7
        %v1060 = vsub.s32 0, %v1059
        %v1061 = vrot.slane %v482, %v1060
        %v1062 = vlaneseq
        %v1063 = vshrl.u32 %v1062, 7
        %v1064 = vsub.s32 1, %v1063
        %v1065 = vrot.slane %v482, %v1064
        %v1066 = vlaneseq
        %v1067 = vshrl.u32 %v1066, 7
        %v1068 = vsub.s32 2, %v1067
        %v1069 = vrot.slane %v482, %v1068
        %v1070 = vlaneseq
        %v1071 = vshrl.u32 %v1070, 7
        %v1072 = vsub.s32 3, %v1071
        %v1073 = vrot.slane %v482, %v1072
        %v1074 = vlaneseq
        %v1075 = vshrl.u32 %v1074, 7
        %v1076 = vsub.s32 4, %v1075
        %v1077 = vrot.slane %v482, %v1076
        %v1078 = vlaneseq
        %v1079 = vshrl.u32 %v1078, 7
        %v1080 = vsub.s32 5, %v1079
        %v1081 = vrot.slane %v482, %v1080
        %v1082 = vlaneseq
        %v1083 = vshrl.u32 %v1082, 7
        %v1084 = vsub.s32 6, %v1083
        %v1085 = vrot.slane %v482, %v1084
        %v1086 = vlaneseq
        %v1087 = vshrl.u32 %v1086, 7
        %v1088 = vsub.s32 7, %v1087
        %v1089 = vrot.slane %v482, %v1088
        %v1090 = vlaneseq
        %v1091 = vshrl.u32 %v1090, 7
        %v1092 = vsub.s32 0, %v1091
        %v1093 = vrot.slane %v483, %v1092
        %v1094 = vlaneseq
        %v1095 = vshrl.u32 %v1094, 7
        %v1096 = vsub.s32 1, %v1095
        %v1097 = vrot.slane %v483, %v1096
        %v1098 = vlaneseq
        %v1099 = vshrl.u32 %v1098, 7
        %v1100 = vsub.s32 2, %v1099
        %v1101 = vrot.slane %v483, %v1100
        %v1102 = vlaneseq
        %v1103 = vshrl.u32 %v1102, 7
        %v1104 = vsub.s32 3, %v1103
        %v1105 = vrot.slane %v483, %v1104
        %v1106 = vlaneseq
        %v1107 = vshrl.u32 %v1106, 7
        %v1108 = vsub.s32 4, %v1107
        %v1109 = vrot.slane %v483, %v1108
        %v1110 = vlaneseq
        %v1111 = vshrl.u32 %v1110, 7
        %v1112 = vsub.s32 5, %v1111
        %v1113 = vrot.slane %v483, %v1112
        %v1114 = vlaneseq
        %v1115 = vshrl.u32 %v1114, 7
        %v1116 = vsub.s32 6, %v1115
        %v1117 = vrot.slane %v483, %v1116
        %v1118 = vlaneseq
        %v1119 = vshrl.u32 %v1118, 7
        %v1120 = vsub.s32 7, %v1119
        %v1121 = vrot.slane %v483, %v1120
        %v1140 = vlaneseq
        %v1141 = vshrl.u32 %v1140, 7
        %v1142 = vsub.s32 0, %v1141
        %v1143 = vrot.slane %v486, %v1142
        %v1144 = vlaneseq
        %v1145 = vshrl.u32 %v1144, 7
        %v1146 = vsub.s32 1, %v1145
        %v1147 = vrot.slane %v486, %v1146
        %v1148 = vlaneseq
        %v1149 = vshrl.u32 %v1148, 7
        %v1150 = vsub.s32 2, %v1149
        %v1151 = vrot.slane %v486, %v1150
        %v1152 = vlaneseq
        %v1153 = vshrl.u32 %v1152, 7
        %v1154 = vsub.s32 3, %v1153
        %v1155 = vrot.slane %v486, %v1154
        %v1156 = vlaneseq
        %v1157 = vshrl.u32 %v1156, 7
        %v1158 = vsub.s32 4, %v1157
        %v1159 = vrot.slane %v486, %v1158
        %v1160 = vlaneseq
        %v1161 = vshrl.u32 %v1160, 7
        %v1162 = vsub.s32 5, %v1161
        %v1163 = vrot.slane %v486, %v1162
        %v1164 = vlaneseq
        %v1165 = vshrl.u32 %v1164, 7
        %v1166 = vsub.s32 6, %v1165
        %v1167 = vrot.slane %v486, %v1166
        %v1168 = vlaneseq
        %v1169 = vshrl.u32 %v1168, 7
        %v1170 = vsub.s32 7, %v1169
        %v1171 = vrot.slane %v486, %v1170
        %v1172 = vlaneseq
        %v1173 = vshrl.u32 %v1172, 7
        %v1174 = vsub.s32 0, %v1173
        %v1175 = vrot.slane %v487, %v1174
        %v1176 = vlaneseq
        %v1177 = vshrl.u32 %v1176, 7
        %v1178 = vsub.s32 1, %v1177
        %v1179 = vrot.slane %v487, %v1178
        %v1180 = vlaneseq
        %v1181 = vshrl.u32 %v1180, 7
        %v1182 = vsub.s32 2, %v1181
        %v1183 = vrot.slane %v487, %v1182
        %v1184 = vlaneseq
        %v1185 = vshrl.u32 %v1184, 7
        %v1186 = vsub.s32 3, %v1185
        %v1187 = vrot.slane %v487, %v1186
        %v1188 = vlaneseq
        %v1189 = vshrl.u32 %v1188, 7
        %v1190 = vsub.s32 4, %v1189
        %v1191 = vrot.slane %v487, %v1190
        %v1192 = vlaneseq
        %v1193 = vshrl.u32 %v1192, 7
        %v1194 = vsub.s32 5, %v1193
        %v1195 = vrot.slane %v487, %v1194
        %v1196 = vlaneseq
        %v1197 = vshrl.u32 %v1196, 7
        %v1198 = vsub.s32 6, %v1197
        %v1199 = vrot.slane %v487, %v1198
        %v1200 = vlaneseq
        %v1201 = vshrl.u32 %v1200, 7
        %v1202 = vsub.s32 7, %v1201
        %v1203 = vrot.slane %v487, %v1202
        %v1222 = vlaneseq
        %v1223 = vshrl.u32 %v1222, 7
        %v1224 = vsub.s32 0, %v1223
        %v1225 = vrot.slane %v494, %v1224
        %v1226 = vlaneseq
        %v1227 = vshrl.u32 %v1226, 7
        %v1228 = vsub.s32 1, %v1227
        %v1229 = vrot.slane %v494, %v1228
        %v1230 = vlaneseq
        %v1231 = vshrl.u32 %v1230, 7
        %v1232 = vsub.s32 2, %v1231
        %v1233 = vrot.slane %v494, %v1232
        %v1234 = vlaneseq
        %v1235 = vshrl.u32 %v1234, 7
        %v1236 = vsub.s32 3, %v1235
        %v1237 = vrot.slane %v494, %v1236
        %v1238 = vlaneseq
        %v1239 = vshrl.u32 %v1238, 7
        %v1240 = vsub.s32 4, %v1239
        %v1241 = vrot.slane %v494, %v1240
        %v1242 = vlaneseq
        %v1243 = vshrl.u32 %v1242, 7
        %v1244 = vsub.s32 5, %v1243
        %v1245 = vrot.slane %v494, %v1244
        %v1246 = vlaneseq
        %v1247 = vshrl.u32 %v1246, 7
        %v1248 = vsub.s32 6, %v1247
        %v1249 = vrot.slane %v494, %v1248
        %v1250 = vlaneseq
        %v1251 = vshrl.u32 %v1250, 7
        %v1252 = vsub.s32 7, %v1251
        %v1253 = vrot.slane %v494, %v1252
        %v1254 = vlaneseq
        %v1255 = vshrl.u32 %v1254, 7
        %v1256 = vsub.s32 0, %v1255
        %v1257 = vrot.slane %v495, %v1256
        %v1258 = vlaneseq
        %v1259 = vshrl.u32 %v1258, 7
        %v1260 = vsub.s32 1, %v1259
        %v1261 = vrot.slane %v495, %v1260
        %v1262 = vlaneseq
        %v1263 = vshrl.u32 %v1262, 7
        %v1264 = vsub.s32 2, %v1263
        %v1265 = vrot.slane %v495, %v1264
        %v1266 = vlaneseq
        %v1267 = vshrl.u32 %v1266, 7
        %v1268 = vsub.s32 3, %v1267
        %v1269 = vrot.slane %v495, %v1268
        %v1270 = vlaneseq
        %v1271 = vshrl.u32 %v1270, 7
        %v1272 = vsub.s32 4, %v1271
        %v1273 = vrot.slane %v495, %v1272
        %v1274 = vlaneseq
        %v1275 = vshrl.u32 %v1274, 7
        %v1276 = vsub.s32 5, %v1275
        %v1277 = vrot.slane %v495, %v1276
        %v1278 = vlaneseq
        %v1279 = vshrl.u32 %v1278, 7
        %v1280 = vsub.s32 6, %v1279
        %v1281 = vrot.slane %v495, %v1280
        %v1282 = vlaneseq
        %v1283 = vshrl.u32 %v1282, 7
        %v1284 = vsub.s32 7, %v1283
        %v1285 = vrot.slane %v495, %v1284
        %v1304 = vlaneseq
        %v1305 = vshrl.u32 %v1304, 7
        %v1306 = vsub.s32 0, %v1305
        %v1307 = vrot.slane %v500, %v1306
        %v1308 = vlaneseq
        %v1309 = vshrl.u32 %v1308, 7
        %v1310 = vsub.s32 1, %v1309
        %v1311 = vrot.slane %v500, %v1310
        %v1312 = vlaneseq
        %v1313 = vshrl.u32 %v1312, 7
        %v1314 = vsub.s32 2, %v1313
        %v1315 = vrot.slane %v500, %v1314
        %v1316 = vlaneseq
        %v1317 = vshrl.u32 %v1316, 7
        %v1318 = vsub.s32 3, %v1317
        %v1319 = vrot.slane %v500, %v1318
        %v1320 = vlaneseq
        %v1321 = vshrl.u32 %v1320, 7
        %v1322 = vsub.s32 4, %v1321
        %v1323 = vrot.slane %v500, %v1322
        %v1324 = vlaneseq
        %v1325 = vshrl.u32 %v1324, 7
        %v1326 = vsub.s32 5, %v1325
        %v1327 = vrot.slane %v500, %v1326
        %v1328 = vlaneseq
        %v1329 = vshrl.u32 %v1328, 7
        %v1330 = vsub.s32 6, %v1329
        %v1331 = vrot.slane %v500, %v1330
        %v1332 = vlaneseq
        %v1333 = vshrl.u32 %v1332, 7
        %v1334 = vsub.s32 7, %v1333
        %v1335 = vrot.slane %v500, %v1334
        %v1336 = vlaneseq
        %v1337 = vshrl.u32 %v1336, 7
        %v1338 = vsub.s32 0, %v1337
        %v1339 = vrot.slane %v501, %v1338
        %v1340 = vlaneseq
        %v1341 = vshrl.u32 %v1340, 7
        %v1342 = vsub.s32 1, %v1341
        %v1343 = vrot.slane %v501, %v1342
        %v1344 = vlaneseq
        %v1345 = vshrl.u32 %v1344, 7
        %v1346 = vsub.s32 2, %v1345
        %v1347 = vrot.slane %v501, %v1346
        %v1348 = vlaneseq
        %v1349 = vshrl.u32 %v1348, 7
        %v1350 = vsub.s32 3, %v1349
        %v1351 = vrot.slane %v501, %v1350
        %v1352 = vlaneseq
        %v1353 = vshrl.u32 %v1352, 7
        %v1354 = vsub.s32 4, %v1353
        %v1355 = vrot.slane %v501, %v1354
        %v1356 = vlaneseq
        %v1357 = vshrl.u32 %v1356, 7
        %v1358 = vsub.s32 5, %v1357
        %v1359 = vrot.slane %v501, %v1358
        %v1360 = vlaneseq
        %v1361 = vshrl.u32 %v1360, 7
        %v1362 = vsub.s32 6, %v1361
        %v1363 = vrot.slane %v501, %v1362
        %v1364 = vlaneseq
        %v1365 = vshrl.u32 %v1364, 7
        %v1366 = vsub.s32 7, %v1365
        %v1367 = vrot.slane %v501, %v1366
        %v1386 = vlaneseq
        %v1387 = vshrl.u32 %v1386, 7
        %v1388 = vsub.s32 0, %v1387
        %v1389 = vrot.slane %v508, %v1388
        %v1390 = vlaneseq
        %v1391 = vshrl.u32 %v1390, 7
        %v1392 = vsub.s32 1, %v1391
        %v1393 = vrot.slane %v508, %v1392
        %v1394 = vlaneseq
        %v1395 = vshrl.u32 %v1394, 7
        %v1396 = vsub.s32 2, %v1395
        %v1397 = vrot.slane %v508, %v1396
        %v1398 = vlaneseq
        %v1399 = vshrl.u32 %v1398, 7
        %v1400 = vsub.s32 3, %v1399
        %v1401 = vrot.slane %v508, %v1400
        %v1402 = vlaneseq
        %v1403 = vshrl.u32 %v1402, 7
        %v1404 = vsub.s32 4, %v1403
        %v1405 = vrot.slane %v508, %v1404
        %v1406 = vlaneseq
        %v1407 = vshrl.u32 %v1406, 7
        %v1408 = vsub.s32 5, %v1407
        %v1409 = vrot.slane %v508, %v1408
        %v1410 = vlaneseq
        %v1411 = vshrl.u32 %v1410, 7
        %v1412 = vsub.s32 6, %v1411
        %v1413 = vrot.slane %v508, %v1412
        %v1414 = vlaneseq
        %v1415 = vshrl.u32 %v1414, 7
        %v1416 = vsub.s32 7, %v1415
        %v1417 = vrot.slane %v508, %v1416
        %v1418 = vlaneseq
        %v1419 = vshrl.u32 %v1418, 7
        %v1420 = vsub.s32 0, %v1419
        %v1421 = vrot.slane %v509, %v1420
        %v1422 = vlaneseq
        %v1423 = vshrl.u32 %v1422, 7
        %v1424 = vsub.s32 1, %v1423
        %v1425 = vrot.slane %v509, %v1424
        %v1426 = vlaneseq
        %v1427 = vshrl.u32 %v1426, 7
        %v1428 = vsub.s32 2, %v1427
        %v1429 = vrot.slane %v509, %v1428
        %v1430 = vlaneseq
        %v1431 = vshrl.u32 %v1430, 7
        %v1432 = vsub.s32 3, %v1431
        %v1433 = vrot.slane %v509, %v1432
        %v1434 = vlaneseq
        %v1435 = vshrl.u32 %v1434, 7
        %v1436 = vsub.s32 4, %v1435
        %v1437 = vrot.slane %v509, %v1436
        %v1438 = vlaneseq
        %v1439 = vshrl.u32 %v1438, 7
        %v1440 = vsub.s32 5, %v1439
        %v1441 = vrot.slane %v509, %v1440
        %v1442 = vlaneseq
        %v1443 = vshrl.u32 %v1442, 7
        %v1444 = vsub.s32 6, %v1443
        %v1445 = vrot.slane %v509, %v1444
        %v1446 = vlaneseq
        %v1447 = vshrl.u32 %v1446, 7
        %v1448 = vsub.s32 7, %v1447
        %v1449 = vrot.slane %v509, %v1448
        %v1468 = vlaneseq
        %v1469 = vshrl.u32 %v1468, 7
        %v1470 = vsub.s32 0, %v1469
        %v1471 = vrot.slane %v514, %v1470
        %v1472 = vlaneseq
        %v1473 = vshrl.u32 %v1472, 7
        %v1474 = vsub.s32 1, %v1473
        %v1475 = vrot.slane %v514, %v1474
        %v1476 = vlaneseq
        %v1477 = vshrl.u32 %v1476, 7
        %v1478 = vsub.s32 2, %v1477
        %v1479 = vrot.slane %v514, %v1478
        %v1480 = vlaneseq
        %v1481 = vshrl.u32 %v1480, 7
        %v1482 = vsub.s32 3, %v1481
        %v1483 = vrot.slane %v514, %v1482
        %v1484 = vlaneseq
        %v1485 = vshrl.u32 %v1484, 7
        %v1486 = vsub.s32 4, %v1485
        %v1487 = vrot.slane %v514, %v1486
        %v1488 = vlaneseq
        %v1489 = vshrl.u32 %v1488, 7
        %v1490 = vsub.s32 5, %v1489
        %v1491 = vrot.slane %v514, %v1490
        %v1492 = vlaneseq
        %v1493 = vshrl.u32 %v1492, 7
        %v1494 = vsub.s32 6, %v1493
        %v1495 = vrot.slane %v514, %v1494
        %v1496 = vlaneseq
        %v1497 = vshrl.u32 %v1496, 7
        %v1498 = vsub.s32 7, %v1497
        %v1499 = vrot.slane %v514, %v1498
        %v1500 = vlaneseq
        %v1501 = vshrl.u32 %v1500, 7
        %v1502 = vsub.s32 0, %v1501
        %v1503 = vrot.slane %v515, %v1502
        %v1504 = vlaneseq
        %v1505 = vshrl.u32 %v1504, 7
        %v1506 = vsub.s32 1, %v1505
        %v1507 = vrot.slane %v515, %v1506
        %v1508 = vlaneseq
        %v1509 = vshrl.u32 %v1508, 7
        %v1510 = vsub.s32 2, %v1509
        %v1511 = vrot.slane %v515, %v1510
        %v1512 = vlaneseq
        %v1513 = vshrl.u32 %v1512, 7
        %v1514 = vsub.s32 3, %v1513
        %v1515 = vrot.slane %v515, %v1514
        %v1516 = vlaneseq
        %v1517 = vshrl.u32 %v1516, 7
        %v1518 = vsub.s32 4, %v1517
        %v1519 = vrot.slane %v515, %v1518
        %v1520 = vlaneseq
        %v1521 = vshrl.u32 %v1520, 7
        %v1522 = vsub.s32 5, %v1521
        %v1523 = vrot.slane %v515, %v1522
        %v1524 = vlaneseq
        %v1525 = vshrl.u32 %v1524, 7
        %v1526 = vsub.s32 6, %v1525
        %v1527 = vrot.slane %v515, %v1526
        %v1528 = vlaneseq
        %v1529 = vshrl.u32 %v1528, 7
        %v1530 = vsub.s32 7, %v1529
        %v1531 = vrot.slane %v515, %v1530
        %v1550 = vlaneseq
        %v1551 = vshrl.u32 %v1550, 7
        %v1552 = vsub.s32 0, %v1551
        %v1553 = vrot.slane %v518, %v1552
        %v1554 = vlaneseq
        %v1555 = vshrl.u32 %v1554, 7
        %v1556 = vsub.s32 1, %v1555
        %v1557 = vrot.slane %v518, %v1556
        %v1558 = vlaneseq
        %v1559 = vshrl.u32 %v1558, 7
        %v1560 = vsub.s32 2, %v1559
        %v1561 = vrot.slane %v518, %v1560
        %v1562 = vlaneseq
        %v1563 = vshrl.u32 %v1562, 7
        %v1564 = vsub.s32 3, %v1563
        %v1565 = vrot.slane %v518, %v1564
        %v1566 = vlaneseq
        %v1567 = vshrl.u32 %v1566, 7
        %v1568 = vsub.s32 4, %v1567
        %v1569 = vrot.slane %v518, %v1568
        %v1570 = vlaneseq
        %v1571 = vshrl.u32 %v1570, 7
        %v1572 = vsub.s32 5, %v1571
        %v1573 = vrot.slane %v518, %v1572
        %v1574 = vlaneseq
        %v1575 = vshrl.u32 %v1574, 7
        %v1576 = vsub.s32 6, %v1575
        %v1577 = vrot.slane %v518, %v1576
        %v1578 = vlaneseq
        %v1579 = vshrl.u32 %v1578, 7
        %v1580 = vsub.s32 7, %v1579
        %v1581 = vrot.slane %v518, %v1580
        %v1582 = vlaneseq
        %v1583 = vshrl.u32 %v1582, 7
        %v1584 = vsub.s32 0, %v1583
        %v1585 = vrot.slane %v519, %v1584
        %v1586 = vlaneseq
        %v1587 = vshrl.u32 %v1586, 7
        %v1588 = vsub.s32 1, %v1587
        %v1589 = vrot.slane %v519, %v1588
        %v1590 = vlaneseq
        %v1591 = vshrl.u32 %v1590, 7
        %v1592 = vsub.s32 2, %v1591
        %v1593 = vrot.slane %v519, %v1592
        %v1594 = vlaneseq
        %v1595 = vshrl.u32 %v1594, 7
        %v1596 = vsub.s32 3, %v1595
        %v1597 = vrot.slane %v519, %v1596
        %v1598 = vlaneseq
        %v1599 = vshrl.u32 %v1598, 7
        %v1600 = vsub.s32 4, %v1599
        %v1601 = vrot.slane %v519, %v1600
        %v1602 = vlaneseq
        %v1603 = vshrl.u32 %v1602, 7
        %v1604 = vsub.s32 5, %v1603
        %v1605 = vrot.slane %v519, %v1604
        %v1606 = vlaneseq
        %v1607 = vshrl.u32 %v1606, 7
        %v1608 = vsub.s32 6, %v1607
        %v1609 = vrot.slane %v519, %v1608
        %v1610 = vlaneseq
        %v1611 = vshrl.u32 %v1610, 7
        %v1612 = vsub.s32 7, %v1611
        %v1613 = vrot.slane %v519, %v1612
        %v1632 = vlaneseq
        %v1633 = vshrl.u32 %v1632, 7
        %v1634 = vsub.s32 0, %v1633
        %v1635 = vrot.slane %v522, %v1634
        %v1636 = vlaneseq
        %v1637 = vshrl.u32 %v1636, 7
        %v1638 = vsub.s32 1, %v1637
        %v1639 = vrot.slane %v522, %v1638
        %v1640 = vlaneseq
        %v1641 = vshrl.u32 %v1640, 7
        %v1642 = vsub.s32 2, %v1641
        %v1643 = vrot.slane %v522, %v1642
        %v1644 = vlaneseq
        %v1645 = vshrl.u32 %v1644, 7
        %v1646 = vsub.s32 3, %v1645
        %v1647 = vrot.slane %v522, %v1646
        %v1648 = vlaneseq
        %v1649 = vshrl.u32 %v1648, 7
        %v1650 = vsub.s32 4, %v1649
        %v1651 = vrot.slane %v522, %v1650
        %v1652 = vlaneseq
        %v1653 = vshrl.u32 %v1652, 7
        %v1654 = vsub.s32 5, %v1653
        %v1655 = vrot.slane %v522, %v1654
        %v1656 = vlaneseq
        %v1657 = vshrl.u32 %v1656, 7
        %v1658 = vsub.s32 6, %v1657
        %v1659 = vrot.slane %v522, %v1658
        %v1660 = vlaneseq
        %v1661 = vshrl.u32 %v1660, 7
        %v1662 = vsub.s32 7, %v1661
        %v1663 = vrot.slane %v522, %v1662
        %v1664 = vlaneseq
        %v1665 = vshrl.u32 %v1664, 7
        %v1666 = vsub.s32 0, %v1665
        %v1667 = vrot.slane %v523, %v1666
        %v1668 = vlaneseq
        %v1669 = vshrl.u32 %v1668, 7
        %v1670 = vsub.s32 1, %v1669
        %v1671 = vrot.slane %v523, %v1670
        %v1672 = vlaneseq
        %v1673 = vshrl.u32 %v1672, 7
        %v1674 = vsub.s32 2, %v1673
        %v1675 = vrot.slane %v523, %v1674
        %v1676 = vlaneseq
        %v1677 = vshrl.u32 %v1676, 7
        %v1678 = vsub.s32 3, %v1677
        %v1679 = vrot.slane %v523, %v1678
        %v1680 = vlaneseq
        %v1681 = vshrl.u32 %v1680, 7
        %v1682 = vsub.s32 4, %v1681
        %v1683 = vrot.slane %v523, %v1682
        %v1684 = vlaneseq
        %v1685 = vshrl.u32 %v1684, 7
        %v1686 = vsub.s32 5, %v1685
        %v1687 = vrot.slane %v523, %v1686
        %v1688 = vlaneseq
        %v1689 = vshrl.u32 %v1688, 7
        %v1690 = vsub.s32 6, %v1689
        %v1691 = vrot.slane %v523, %v1690
        %v1692 = vlaneseq
        %v1693 = vshrl.u32 %v1692, 7
        %v1694 = vsub.s32 7, %v1693
        %v1695 = vrot.slane %v523, %v1694
        %v1714 = vlaneseq
        %v1715 = vshrl.u32 %v1714, 7
        %v1716 = vsub.s32 0, %v1715
        %v1717 = vrot.slane %v530, %v1716
        %v1718 = vlaneseq
        %v1719 = vshrl.u32 %v1718, 7
        %v1720 = vsub.s32 1, %v1719
        %v1721 = vrot.slane %v530, %v1720
        %v1722 = vlaneseq
        %v1723 = vshrl.u32 %v1722, 7
        %v1724 = vsub.s32 2, %v1723
        %v1725 = vrot.slane %v530, %v1724
        %v1726 = vlaneseq
        %v1727 = vshrl.u32 %v1726, 7
        %v1728 = vsub.s32 3, %v1727
        %v1729 = vrot.slane %v530, %v1728
        %v1730 = vlaneseq
        %v1731 = vshrl.u32 %v1730, 7
        %v1732 = vsub.s32 4, %v1731
        %v1733 = vrot.slane %v530, %v1732
        %v1734 = vlaneseq
        %v1735 = vshrl.u32 %v1734, 7
        %v1736 = vsub.s32 5, %v1735
        %v1737 = vrot.slane %v530, %v1736
        %v1738 = vlaneseq
        %v1739 = vshrl.u32 %v1738, 7
        %v1740 = vsub.s32 6, %v1739
        %v1741 = vrot.slane %v530, %v1740
        %v1742 = vlaneseq
        %v1743 = vshrl.u32 %v1742, 7
        %v1744 = vsub.s32 7, %v1743
        %v1745 = vrot.slane %v530, %v1744
        %v1746 = vlaneseq
        %v1747 = vshrl.u32 %v1746, 7
        %v1748 = vsub.s32 0, %v1747
        %v1749 = vrot.slane %v531, %v1748
        %v1750 = vlaneseq
        %v1751 = vshrl.u32 %v1750, 7
        %v1752 = vsub.s32 1, %v1751
        %v1753 = vrot.slane %v531, %v1752
        %v1754 = vlaneseq
        %v1755 = vshrl.u32 %v1754, 7
        %v1756 = vsub.s32 2, %v1755
        %v1757 = vrot.slane %v531, %v1756
        %v1758 = vlaneseq
        %v1759 = vshrl.u32 %v1758, 7
        %v1760 = vsub.s32 3, %v1759
        %v1761 = vrot.slane %v531, %v1760
        %v1762 = vlaneseq
        %v1763 = vshrl.u32 %v1762, 7
        %v1764 = vsub.s32 4, %v1763
        %v1765 = vrot.slane %v531, %v1764
        %v1766 = vlaneseq
        %v1767 = vshrl.u32 %v1766, 7
        %v1768 = vsub.s32 5, %v1767
        %v1769 = vrot.slane %v531, %v1768
        %v1770 = vlaneseq
        %v1771 = vshrl.u32 %v1770, 7
        %v1772 = vsub.s32 6, %v1771
        %v1773 = vrot.slane %v531, %v1772
        %v1774 = vlaneseq
        %v1775 = vshrl.u32 %v1774, 7
        %v1776 = vsub.s32 7, %v1775
        %v1777 = vrot.slane %v531, %v1776
        %vm1794 = vcmask 1040384
        %v1795 = vsel %vm1794, 0.2820948, %v569
        %v1796 = vsel %vm1794, 0.2820948, %v573
        %v1797 = vsel %vm1794, 0.2820948, %v577
        %v1798 = vsel %vm1794, 0.2820948, %v581
        %v1799 = vsel %vm1794, 0.2820948, %v585
        %v1800 = vsel %vm1794, 0.2820948, %v589
        %v1801 = vsel %vm1794, 0.2820948, %v593
        %v1802 = vsel %vm1794, 0.2820948, %v597
        %v1803 = vsel %vm1794, 0.2820948, %v601
        %v1804 = vsel %vm1794, 0.2820948, %v605
        %v1805 = vsel %vm1794, 0.2820948, %v609
        %v1806 = vsel %vm1794, 0.2820948, %v613
        %v1807 = vsel %vm1794, 0.2820948, %v617
        %v1808 = vsel %vm1794, 0.2820948, %v621
        %v1809 = vsel %vm1794, 0.2820948, %v625
        %v1810 = vsel %vm1794, 0.2820948, %v629
        %vm1811 = vcmask 1041408
        %v1812 = vsel %vm1811, %v1795, %v651
        %v1813 = vsel %vm1811, %v1796, %v655
        %v1814 = vsel %vm1811, %v1797, %v659
        %v1815 = vsel %vm1811, %v1798, %v663
        %v1816 = vsel %vm1811, %v1799, %v667
        %v1817 = vsel %vm1811, %v1800, %v671
        %v1818 = vsel %vm1811, %v1801, %v675
        %v1819 = vsel %vm1811, %v1802, %v679
        %v1820 = vsel %vm1811, %v1803, %v683
        %v1821 = vsel %vm1811, %v1804, %v687
        %v1822 = vsel %vm1811, %v1805, %v691
        %v1823 = vsel %vm1811, %v1806, %v695
        %v1824 = vsel %vm1811, %v1807, %v699
        %v1825 = vsel %vm1811, %v1808, %v703
        %v1826 = vsel %vm1811, %v1809, %v707
        %v1827 = vsel %vm1811, %v1810, %v711
        %vm1828 = vcmask 1042432
        %v1829 = vsel %vm1828, %v1812, %v733
        %v1830 = vsel %vm1828, %v1813, %v737
        %v1831 = vsel %vm1828, %v1814, %v741
        %v1832 = vsel %vm1828, %v1815, %v745
        %v1833 = vsel %vm1828, %v1816, %v749
        %v1834 = vsel %vm1828, %v1817, %v753
        %v1835 = vsel %vm1828, %v1818, %v757
        %v1836 = vsel %vm1828, %v1819, %v761
        %v1837 = vsel %vm1828, %v1820, %v765
        %v1838 = vsel %vm1828, %v1821, %v769
        %v1839 = vsel %vm1828, %v1822, %v773
        %v1840 = vsel %vm1828, %v1823, %v777
        %v1841 = vsel %vm1828, %v1824, %v781
        %v1842 = vsel %vm1828, %v1825, %v785
        %v1843 = vsel %vm1828, %v1826, %v789
        %v1844 = vsel %vm1828, %v1827, %v793
        %vm1845 = vcmask 1043456
        %v1846 = vsel %vm1845, %v1829, %v815
        %v1847 = vsel %vm1845, %v1830, %v819
        %v1848 = vsel %vm1845, %v1831, %v823
        %v1849 = vsel %vm1845, %v1832, %v827
        %v1850 = vsel %vm1845, %v1833, %v831
        %v1851 = vsel %vm1845, %v1834, %v835
        %v1852 = vsel %vm1845, %v1835, %v839
        %v1853 = vsel %vm1845, %v1836, %v843
        %v1854 = vsel %vm1845, %v1837, %v847
        %v1855 = vsel %vm1845, %v1838, %v851
        %v1856 = vsel %vm1845, %v1839, %v855
        %v1857 = vsel %vm1845, %v1840, %v859
        %v1858 = vsel %vm1845, %v1841, %v863
        %v1859 = vsel %vm1845, %v1842, %v867
        %v1860 = vsel %vm1845, %v1843, %v871
        %v1861 = vsel %vm1845, %v1844, %v875
        %vm1862 = vcmask 1044480
        %v1863 = vsel %vm1862, %v1846, %v897
        %v1864 = vsel %vm1862, %v1847, %v901
        %v1865 = vsel %vm1862, %v1848, %v905
        %v1866 = vsel %vm1862, %v1849, %v909
        %v1867 = vsel %vm1862, %v1850, %v913
        %v1868 = vsel %vm1862, %v1851, %v917
        %v1869 = vsel %vm1862, %v1852, %v921
        %v1870 = vsel %vm1862, %v1853, %v925
        %v1871 = vsel %vm1862, %v1854, %v929
        %v1872 = vsel %vm1862, %v1855, %v933
        %v1873 = vsel %vm1862, %v1856, %v937
        %v1874 = vsel %vm1862, %v1857, %v941
        %v1875 = vsel %vm1862, %v1858, %v945
        %v1876 = vsel %vm1862, %v1859, %v949
        %v1877 = vsel %vm1862, %v1860, %v953
        %v1878 = vsel %vm1862, %v1861, %v957
        %vm1879 = vcmask 1045504
        %v1880 = vsel %vm1879, %v1863, %v979
        %v1881 = vsel %vm1879, %v1864, %v983
        %v1882 = vsel %vm1879, %v1865, %v987
        %v1883 = vsel %vm1879, %v1866, %v991
        %v1884 = vsel %vm1879, %v1867, %v995
        %v1885 = vsel %vm1879, %v1868, %v999
        %v1886 = vsel %vm1879, %v1869, %v1003
        %v1887 = vsel %vm1879, %v1870, %v1007
        %v1888 = vsel %vm1879, %v1871, %v1011
        %v1889 = vsel %vm1879, %v1872, %v1015
        %v1890 = vsel %vm1879, %v1873, %v1019
        %v1891 = vsel %vm1879, %v1874, %v1023
        %v1892 = vsel %vm1879, %v1875, %v1027
        %v1893 = vsel %vm1879, %v1876, %v1031
        %v1894 = vsel %vm1879, %v1877, %v1035
        %v1895 = vsel %vm1879, %v1878, %v1039
        %vm1896 = vcmask 1046528
        %v1897 = vsel %vm1896, %v1880, %v1061
        %v1898 = vsel %vm1896, %v1881, %v1065
        %v1899 = vsel %vm1896, %v1882, %v1069
        %v1900 = vsel %vm1896, %v1883, %v1073
        %v1901 = vsel %vm1896, %v1884, %v1077
        %v1902 = vsel %vm1896, %v1885, %v1081
        %v1903 = vsel %vm1896, %v1886, %v1085
        %v1904 = vsel %vm1896, %v1887, %v1089
        %v1905 = vsel %vm1896, %v1888, %v1093
        %v1906 = vsel %vm1896, %v1889, %v1097
        %v1907 = vsel %vm1896, %v1890, %v1101
        %v1908 = vsel %vm1896, %v1891, %v1105
        %v1909 = vsel %vm1896, %v1892, %v1109
        %v1910 = vsel %vm1896, %v1893, %v1113
        %v1911 = vsel %vm1896, %v1894, %v1117
        %v1912 = vsel %vm1896, %v1895, %v1121
        %v1913 = vsel %vm1794, %v1143, %v1225
        %v1914 = vsel %vm1794, %v1147, %v1229
        %v1915 = vsel %vm1794, %v1151, %v1233
        %v1916 = vsel %vm1794, %v1155, %v1237
        %v1917 = vsel %vm1794, %v1159, %v1241
        %v1918 = vsel %vm1794, %v1163, %v1245
        %v1919 = vsel %vm1794, %v1167, %v1249
        %v1920 = vsel %vm1794, %v1171, %v1253
        %v1921 = vsel %vm1794, %v1175, %v1257
        %v1922 = vsel %vm1794, %v1179, %v1261
        %v1923 = vsel %vm1794, %v1183, %v1265
        %v1924 = vsel %vm1794, %v1187, %v1269
        %v1925 = vsel %vm1794, %v1191, %v1273
        %v1926 = vsel %vm1794, %v1195, %v1277
        %v1927 = vsel %vm1794, %v1199, %v1281
        %v1928 = vsel %vm1794, %v1203, %v1285
        %v1929 = vsel %vm1811, %v1913, %v1307
        %v1930 = vsel %vm1811, %v1914, %v1311
        %v1931 = vsel %vm1811, %v1915, %v1315
        %v1932 = vsel %vm1811, %v1916, %v1319
        %v1933 = vsel %vm1811, %v1917, %v1323
        %v1934 = vsel %vm1811, %v1918, %v1327
        %v1935 = vsel %vm1811, %v1919, %v1331
        %v1936 = vsel %vm1811, %v1920, %v1335
        %v1937 = vsel %vm1811, %v1921, %v1339
        %v1938 = vsel %vm1811, %v1922, %v1343
        %v1939 = vsel %vm1811, %v1923, %v1347
        %v1940 = vsel %vm1811, %v1924, %v1351
        %v1941 = vsel %vm1811, %v1925, %v1355
        %v1942 = vsel %vm1811, %v1926, %v1359
        %v1943 = vsel %vm1811, %v1927, %v1363
        %v1944 = vsel %vm1811, %v1928, %v1367
        %v1945 = vsel %vm1828, %v1929, %v1389
        %v1946 = vsel %vm1828, %v1930, %v1393
        %v1947 = vsel %vm1828, %v1931, %v1397
        %v1948 = vsel %vm1828, %v1932, %v1401
        %v1949 = vsel %vm1828, %v1933, %v1405
        %v1950 = vsel %vm1828, %v1934, %v1409
        %v1951 = vsel %vm1828, %v1935, %v1413
        %v1952 = vsel %vm1828, %v1936, %v1417
        %v1953 = vsel %vm1828, %v1937, %v1421
        %v1954 = vsel %vm1828, %v1938, %v1425
        %v1955 = vsel %vm1828, %v1939, %v1429
        %v1956 = vsel %vm1828, %v1940, %v1433
        %v1957 = vsel %vm1828, %v1941, %v1437
        %v1958 = vsel %vm1828, %v1942, %v1441
        %v1959 = vsel %vm1828, %v1943, %v1445
        %v1960 = vsel %vm1828, %v1944, %v1449
        %v1961 = vsel %vm1845, %v1945, %v1471
        %v1962 = vsel %vm1845, %v1946, %v1475
        %v1963 = vsel %vm1845, %v1947, %v1479
        %v1964 = vsel %vm1845, %v1948, %v1483
        %v1965 = vsel %vm1845, %v1949, %v1487
        %v1966 = vsel %vm1845, %v1950, %v1491
        %v1967 = vsel %vm1845, %v1951, %v1495
        %v1968 = vsel %vm1845, %v1952, %v1499
        %v1969 = vsel %vm1845, %v1953, %v1503
        %v1970 = vsel %vm1845, %v1954, %v1507
        %v1971 = vsel %vm1845, %v1955, %v1511
        %v1972 = vsel %vm1845, %v1956, %v1515
        %v1973 = vsel %vm1845, %v1957, %v1519
        %v1974 = vsel %vm1845, %v1958, %v1523
        %v1975 = vsel %vm1845, %v1959, %v1527
        %v1976 = vsel %vm1845, %v1960, %v1531
        %v1977 = vsel %vm1862, %v1961, %v1553
        %v1978 = vsel %vm1862, %v1962, %v1557
        %v1979 = vsel %vm1862, %v1963, %v1561
        %v1980 = vsel %vm1862, %v1964, %v1565
        %v1981 = vsel %vm1862, %v1965, %v1569
        %v1982 = vsel %vm1862, %v1966, %v1573
        %v1983 = vsel %vm1862, %v1967, %v1577
        %v1984 = vsel %vm1862, %v1968, %v1581
        %v1985 = vsel %vm1862, %v1969, %v1585
        %v1986 = vsel %vm1862, %v1970, %v1589
        %v1987 = vsel %vm1862, %v1971, %v1593
        %v1988 = vsel %vm1862, %v1972, %v1597
        %v1989 = vsel %vm1862, %v1973, %v1601
        %v1990 = vsel %vm1862, %v1974, %v1605
        %v1991 = vsel %vm1862, %v1975, %v1609
        %v1992 = vsel %vm1862, %v1976, %v1613
        %v1993 = vsel %vm1879, %v1977, %v1635
        %v1994 = vsel %vm1879, %v1978, %v1639
        %v1995 = vsel %vm1879, %v1979, %v1643
        %v1996 = vsel %vm1879, %v1980, %v1647
        %v1997 = vsel %vm1879, %v1981, %v1651
        %v1998 = vsel %vm1879, %v1982, %v1655
        %v1999 = vsel %vm1879, %v1983, %v1659
        %v2000 = vsel %vm1879, %v1984, %v1663
        %v2001 = vsel %vm1879, %v1985, %v1667
        %v2002 = vsel %vm1879, %v1986, %v1671
        %v2003 = vsel %vm1879, %v1987, %v1675
        %v2004 = vsel %vm1879, %v1988, %v1679
        %v2005 = vsel %vm1879, %v1989, %v1683
        %v2006 = vsel %vm1879, %v1990, %v1687
        %v2007 = vsel %vm1879, %v1991, %v1691
        %v2008 = vsel %vm1879, %v1992, %v1695
        %v2009 = vsel %vm1896, %v1993, %v1717
        %v2010 = vsel %vm1896, %v1994, %v1721
        %v2011 = vsel %vm1896, %v1995, %v1725
        %v2012 = vsel %vm1896, %v1996, %v1729
        %v2013 = vsel %vm1896, %v1997, %v1733
        %v2014 = vsel %vm1896, %v1998, %v1737
        %v2015 = vsel %vm1896, %v1999, %v1741
        %v2016 = vsel %vm1896, %v2000, %v1745
        %v2017 = vsel %vm1896, %v2001, %v1749
        %v2018 = vsel %vm1896, %v2002, %v1753
        %v2019 = vsel %vm1896, %v2003, %v1757
        %v2020 = vsel %vm1896, %v2004, %v1761
        %v2021 = vsel %vm1896, %v2005, %v1765
        %v2022 = vsel %vm1896, %v2006, %v1769
        %v2023 = vsel %vm1896, %v2007, %v1773
        %v2024 = vsel %vm1896, %v2008, %v1777
        %v2057 = vrot.slane %v532, 6
        %v2058 = vrot.slane %v548, 6
        %v2059 = vsel %vm1811, %v2057, %v2058
        %v2060 = vrot.slane %v533, 6
        %v2061 = vrot.slane %v549, 6
        %v2062 = vsel %vm1811, %v2060, %v2061
        %v2063 = vrot.slane %v534, 6
        %v2064 = vrot.slane %v550, 6
        %v2065 = vsel %vm1811, %v2063, %v2064
        %v2066 = vrot.slane %v535, 6
        %v2067 = vrot.slane %v551, 6
        %v2068 = vsel %vm1811, %v2066, %v2067
        %v2069 = vrot.slane %v536, 6
        %v2070 = vrot.slane %v552, 6
        %v2071 = vsel %vm1811, %v2069, %v2070
        %v2072 = vrot.slane %v537, 6
        %v2073 = vrot.slane %v553, 6
        %v2074 = vsel %vm1811, %v2072, %v2073
        %v2075 = vrot.slane %v538, 6
        %v2076 = vrot.slane %v554, 6
        %v2077 = vsel %vm1811, %v2075, %v2076
        %v2078 = vrot.slane %v539, 6
        %v2079 = vrot.slane %v555, 6
        %v2080 = vsel %vm1811, %v2078, %v2079
        %v2081 = vrot.slane %v540, 6
        %v2082 = vrot.slane %v556, 6
        %v2083 = vsel %vm1811, %v2081, %v2082
        %v2084 = vrot.slane %v541, 6
        %v2085 = vrot.slane %v557, 6
        %v2086 = vsel %vm1811, %v2084, %v2085
        %v2087 = vrot.slane %v542, 6
        %v2088 = vrot.slane %v558, 6
        %v2089 = vsel %vm1811, %v2087, %v2088
        %v2090 = vrot.slane %v543, 6
        %v2091 = vrot.slane %v559, 6
        %v2092 = vsel %vm1811, %v2090, %v2091
        %v2093 = vrot.slane %v544, 6
        %v2094 = vrot.slane %v560, 6
        %v2095 = vsel %vm1811, %v2093, %v2094
        %v2096 = vrot.slane %v545, 6
        %v2097 = vrot.slane %v561, 6
        %v2098 = vsel %vm1811, %v2096, %v2097
        %v2099 = vrot.slane %v546, 6
        %v2100 = vrot.slane %v562, 6
        %v2101 = vsel %vm1811, %v2099, %v2100
        %v2102 = vrot.slane %v547, 6
        %v2103 = vrot.slane %v563, 6
        %v2104 = vsel %vm1811, %v2102, %v2103
        %v2121 = vpack.c.bf16 %v2009, %v1897
        %v2122 = vpack.c.bf16 %v2010, %v1898
        %v2123 = vpack.c.bf16 %v2011, %v1899
        %v2124 = vpack.c.bf16 %v2012, %v1900
        %v2125 = vpack.c.bf16 %v2013, %v1901
        %v2126 = vpack.c.bf16 %v2014, %v1902
        %v2127 = vpack.c.bf16 %v2015, %v1903
        %v2128 = vpack.c.bf16 %v2016, %v1904
        %v2129 = vpack.c.bf16 %v2017, %v1905
        %v2130 = vpack.c.bf16 %v2018, %v1906
        %v2131 = vpack.c.bf16 %v2019, %v1907
        %v2132 = vpack.c.bf16 %v2020, %v1908
        %v2133 = vpack.c.bf16 %v2021, %v1909
        %v2134 = vpack.c.bf16 %v2022, %v1910
        %v2135 = vpack.c.bf16 %v2023, %v1911
        %v2136 = vpack.c.bf16 %v2024, %v1912
        %v2137 = vpack.c.bf16 %v2059, %v2059
        %v2138 = vpack.c.bf16 %v2062, %v2062
        %v2139 = vpack.c.bf16 %v2065, %v2065
        %v2140 = vpack.c.bf16 %v2068, %v2068
        %v2141 = vpack.c.bf16 %v2071, %v2071
        %v2142 = vpack.c.bf16 %v2074, %v2074
        %v2143 = vpack.c.bf16 %v2077, %v2077
        %v2144 = vpack.c.bf16 %v2080, %v2080
        %v2145 = vpack.c.bf16 %v2083, %v2083
        %v2146 = vpack.c.bf16 %v2086, %v2086
        %v2147 = vpack.c.bf16 %v2089, %v2089
        %v2148 = vpack.c.bf16 %v2092, %v2092
        %v2149 = vpack.c.bf16 %v2095, %v2095
        %v2150 = vpack.c.bf16 %v2098, %v2098
        %v2151 = vpack.c.bf16 %v2101, %v2101
        %v2152 = vpack.c.bf16 %v2104, %v2104
        %v2153 = vld [vmem:[%s2] sm:$0xf]
        %v2154 = vld [vmem:[%s2 + $0x4] sm:$0xf]
        %v2155 = vld [vmem:[%s2 + $0x8] sm:$0xf]
        %v2156 = vld [vmem:[%s2 + $0xc] sm:$0xf]
        %v2157 = vld [vmem:[%s2 + $0x10] sm:$0xf]
        %v2158 = vld [vmem:[%s2 + $0x14] sm:$0xf]
        %v2159 = vld [vmem:[%s2 + $0x18] sm:$0xf]
        %v2160 = vld [vmem:[%s2 + $0x1c] sm:$0xf]
        %v2161 = vld [vmem:[%s2 + $0x20] sm:$0xf]
        %v2162 = vld [vmem:[%s2 + $0x24] sm:$0xf]
        %v2163 = vld [vmem:[%s2 + $0x28] sm:$0xf]
        %v2164 = vld [vmem:[%s2 + $0x2c] sm:$0xf]
        %v2165 = vld [vmem:[%s3] sm:$0xff]
        %v2166 = vld [vmem:[%s3 + $0x8] sm:$0xff]
        %v2167 = vld [vmem:[%s3 + $0x10] sm:$0xff]
        %v2168 = vld [vmem:[%s3 + $0x18] sm:$0xff]
        %v2169 = vld [vmem:[%s3 + $0x20] sm:$0xff]
        %v2170 = vld [vmem:[%s3 + $0x28] sm:$0xff]
        %v2171 = vld [vmem:[%s3 + $0x30] sm:$0xff]
        %v2172 = vld [vmem:[%s3 + $0x38] sm:$0xff]
        %v2173 = vld [vmem:[%s3 + $0x40] sm:$0xff]
        %v2174 = vld [vmem:[%s3 + $0x48] sm:$0xff]
        %v2175 = vld [vmem:[%s3 + $0x50] sm:$0xff]
        %v2176 = vld [vmem:[%s3 + $0x58] sm:$0xff]
        %2178 = vset.pattern.permute.xlu0 0
        %2179 = vperm.xlu0 %2178, %v2165
        %v2180 = vpop.permute.xlu0 %2179
        %2183 = vset.pattern.permute.xlu0 0
        %2184 = vperm.xlu0 %2183, %v2166
        %v2185 = vpop.permute.xlu0 %2184
        %2188 = vset.pattern.permute.xlu0 0
        %2189 = vperm.xlu0 %2188, %v2167
        %v2190 = vpop.permute.xlu0 %2189
        %2193 = vset.pattern.permute.xlu0 0
        %2194 = vperm.xlu0 %2193, %v2168
        %v2195 = vpop.permute.xlu0 %2194
        %2198 = vset.pattern.permute.xlu0 0
        %2199 = vperm.xlu0 %2198, %v2169
        %v2200 = vpop.permute.xlu0 %2199
        %2203 = vset.pattern.permute.xlu0 0
        %2204 = vperm.xlu0 %2203, %v2170
        %v2205 = vpop.permute.xlu0 %2204
        %2208 = vset.pattern.permute.xlu0 0
        %2209 = vperm.xlu0 %2208, %v2171
        %v2210 = vpop.permute.xlu0 %2209
        %2213 = vset.pattern.permute.xlu0 0
        %2214 = vperm.xlu0 %2213, %v2172
        %v2215 = vpop.permute.xlu0 %2214
        %2218 = vset.pattern.permute.xlu0 0
        %2219 = vperm.xlu0 %2218, %v2173
        %v2220 = vpop.permute.xlu0 %2219
        %2223 = vset.pattern.permute.xlu0 0
        %2224 = vperm.xlu0 %2223, %v2174
        %v2225 = vpop.permute.xlu0 %2224
        %2228 = vset.pattern.permute.xlu0 0
        %2229 = vperm.xlu0 %2228, %v2175
        %v2230 = vpop.permute.xlu0 %2229
        %2233 = vset.pattern.permute.xlu0 0
        %2234 = vperm.xlu0 %2233, %v2176
        %v2235 = vpop.permute.xlu0 %2234
        %v2249 = vunpack.c.l.b16 %v2153
        %v2250 = vunpack.c.l.b16 %v2154
        %v2251 = vunpack.c.l.b16 %v2155
        %v2252 = vunpack.c.l.b16 %v2156
        %v2253 = vunpack.c.l.b16 %v2157
        %v2254 = vunpack.c.l.b16 %v2158
        %v2255 = vunpack.c.l.b16 %v2159
        %v2256 = vunpack.c.l.b16 %v2160
        %v2257 = vunpack.c.l.b16 %v2161
        %v2258 = vunpack.c.l.b16 %v2162
        %v2259 = vunpack.c.l.b16 %v2163
        %v2260 = vunpack.c.l.b16 %v2164
        %v2261 = vpack.c.b16 %v2250, %v2249
        %v2262 = vpack.c.b16 %v2252, %v2251
        %v2263 = vpack.c.b16 %v2254, %v2253
        %v2264 = vpack.c.b16 %v2256, %v2255
        %v2265 = vpack.c.b16 %v2258, %v2257
        %v2266 = vpack.c.b16 %v2260, %v2259
        %vm2267 = vcmask 195584
        %v2269 = vsel %vm2267, %v2261, 0
        %v2272 = vsel %vm2267, %v2262, 0
        %v2275 = vsel %vm2267, %v2263, 0
        %v2278 = vsel %vm2267, %v2264, 0
        %v2281 = vsel %vm2267, %v2265, 0
        %v2284 = vsel %vm2267, %v2266, 0
        %v2287 = vsel %vm1845, %v2137, 0
        %v2290 = vsel %vm1845, %v2138, 0
        %v2293 = vsel %vm1845, %v2139, 0
        %v2296 = vsel %vm1845, %v2140, 0
        %v2299 = vsel %vm1845, %v2141, 0
        %v2302 = vsel %vm1845, %v2142, 0
        %v2305 = vsel %vm1845, %v2143, 0
        %v2308 = vsel %vm1845, %v2144, 0
        %v2311 = vsel %vm1845, %v2145, 0
        %v2314 = vsel %vm1845, %v2146, 0
        %v2317 = vsel %vm1845, %v2147, 0
        %v2320 = vsel %vm1845, %v2148, 0
        %v2323 = vsel %vm1845, %v2149, 0
        %v2326 = vsel %vm1845, %v2150, 0
        %v2329 = vsel %vm1845, %v2151, 0
        %v2332 = vsel %vm1845, %v2152, 0
        %2334 = vmatprep.subr.bf16.mxu0 %v2122
        %2335 = vmatpush1.bf16.msra.mxu0 %v2121
        %2336 = vmatprep.subr.bf16.mxu0 %v2290
        %2337 = vmatpush1.bf16.msra.mxu0 %v2287
        %2338 = vmatprep.subr.bf16.mxu0 0
        %2339 = vmatpush1.bf16.msra.mxu0 0
        %2340 = vmatprep.subr.bf16.mxu0 0
        %2341 = vmatpush1.bf16.msra.mxu0 0
        %2342 = vmatprep.subr.bf16.mxu0 0
        %2343 = vmatpush1.bf16.msra.mxu0 0
        %2344 = vmatprep.subr.bf16.mxu0 0
        %2345 = vmatpush1.bf16.msra.mxu0 0
        %2346 = vmatprep.subr.bf16.mxu0 0
        %2347 = vmatpush1.bf16.msra.mxu0 0
        %2348 = vmatprep.subr.bf16.mxu0 0
        %2349 = vmatpush1.bf16.msra.mxu0 0
        %2350 = vmatprep.subr.bf16.mxu0 0
        %2351 = vmatpush1.bf16.msra.mxu0 0
        %2352 = vmatprep.subr.bf16.mxu0 0
        %2353 = vmatpush1.bf16.msra.mxu0 0
        %2354 = vmatprep.subr.bf16.mxu0 0
        %2355 = vmatpush1.bf16.msra.mxu0 0
        %2356 = vmatprep.subr.bf16.mxu0 0
        %2357 = vmatpush1.bf16.msra.mxu0 0
        %2358 = vmatprep.subr.bf16.mxu0 0
        %2359 = vmatpush1.bf16.msra.mxu0 0
        %2360 = vmatprep.subr.bf16.mxu0 0
        %2361 = vmatpush1.bf16.msra.mxu0 0
        %2362 = vmatprep.subr.bf16.mxu0 0
        %2363 = vmatpush1.bf16.msra.mxu0 0
        %2364 = vmatprep.subr.bf16.mxu0 0
        %2365 = vmatpush1.bf16.msra.mxu0 0
        %2366 = vmatprep.mubr.bf16.mxu0 0
        %2367 = vmatmul.mubr.bf16.gmra.mrb[0].mxu0 %v2269
        %v2368 = vpop.f32.mrb[0].mxu0
        %v2369 = vadd.f32 %v2180, %v2368
        %v2370 = vpop.f32.mrb[0].mxu0
        %v2371 = vadd.f32 %v2180, %v2370
        %v2372 = vpop.f32.mrb[0].mxu0
        %v2373 = vadd.f32 %v2185, %v2372
        %v2374 = vpop.f32.mrb[0].mxu0
        %v2375 = vadd.f32 %v2185, %v2374
        %2376 = vmatprep.mubr.bf16.mxu0 0
        %2377 = vmatmul.mubr.bf16.gmra.mrb[0].mxu0 %v2272
        %v2378 = vpop.f32.mrb[0].mxu0
        %v2379 = vadd.f32 %v2190, %v2378
        %v2380 = vpop.f32.mrb[0].mxu0
        %v2381 = vadd.f32 %v2190, %v2380
        %v2382 = vpop.f32.mrb[0].mxu0
        %v2383 = vadd.f32 %v2195, %v2382
        %v2384 = vpop.f32.mrb[0].mxu0
        %v2385 = vadd.f32 %v2195, %v2384
        %2386 = vmatprep.mubr.bf16.mxu0 0
        %2387 = vmatmul.mubr.bf16.gmra.mrb[0].mxu0 %v2275
        %v2388 = vpop.f32.mrb[0].mxu0
        %v2389 = vadd.f32 %v2200, %v2388
        %v2390 = vpop.f32.mrb[0].mxu0
        %v2391 = vadd.f32 %v2200, %v2390
        %v2392 = vpop.f32.mrb[0].mxu0
        %v2393 = vadd.f32 %v2205, %v2392
        %v2394 = vpop.f32.mrb[0].mxu0
        %v2395 = vadd.f32 %v2205, %v2394
        %2396 = vmatprep.mubr.bf16.mxu0 0
        %2397 = vmatmul.mubr.bf16.gmra.mrb[0].mxu0 %v2278
        %v2398 = vpop.f32.mrb[0].mxu0
        %v2399 = vadd.f32 %v2210, %v2398
        %v2400 = vpop.f32.mrb[0].mxu0
        %v2401 = vadd.f32 %v2210, %v2400
        %v2402 = vpop.f32.mrb[0].mxu0
        %v2403 = vadd.f32 %v2215, %v2402
        %v2404 = vpop.f32.mrb[0].mxu0
        %v2405 = vadd.f32 %v2215, %v2404
        %2406 = vmatprep.mubr.bf16.mxu0 0
        %2407 = vmatmul.mubr.bf16.gmra.mrb[0].mxu0 %v2281
        %v2408 = vpop.f32.mrb[0].mxu0
        %v2409 = vadd.f32 %v2220, %v2408
        %v2410 = vpop.f32.mrb[0].mxu0
        %v2411 = vadd.f32 %v2220, %v2410
        %v2412 = vpop.f32.mrb[0].mxu0
        %v2413 = vadd.f32 %v2225, %v2412
        %v2414 = vpop.f32.mrb[0].mxu0
        %v2415 = vadd.f32 %v2225, %v2414
        %2416 = vmatprep.mubr.bf16.mxu0 0
        %2417 = vmatmul.mubr.bf16.gmra.mrb[0].mxu0 %v2284
        %v2418 = vpop.f32.mrb[0].mxu0
        %v2419 = vadd.f32 %v2230, %v2418
        %v2420 = vpop.f32.mrb[0].mxu0
        %v2421 = vadd.f32 %v2230, %v2420
        %v2422 = vpop.f32.mrb[0].mxu0
        %v2423 = vadd.f32 %v2235, %v2422
        %v2424 = vpop.f32.mrb[0].mxu0
        %v2425 = vadd.f32 %v2235, %v2424
        %2426 = vdwg.mxu0
        %2427 = vmatprep.subr.bf16.mxu0 %v2124
        %2428 = vmatpush1.bf16.msra.mxu0 %v2123
        %2429 = vmatprep.subr.bf16.mxu0 %v2296
        %2430 = vmatpush1.bf16.msra.mxu0 %v2293
        %2431 = vmatprep.subr.bf16.mxu0 0
        %2432 = vmatpush1.bf16.msra.mxu0 0
        %2433 = vmatprep.subr.bf16.mxu0 0
        %2434 = vmatpush1.bf16.msra.mxu0 0
        %2435 = vmatprep.subr.bf16.mxu0 0
        %2436 = vmatpush1.bf16.msra.mxu0 0
        %2437 = vmatprep.subr.bf16.mxu0 0
        %2438 = vmatpush1.bf16.msra.mxu0 0
        %2439 = vmatprep.subr.bf16.mxu0 0
        %2440 = vmatpush1.bf16.msra.mxu0 0
        %2441 = vmatprep.subr.bf16.mxu0 0
        %2442 = vmatpush1.bf16.msra.mxu0 0
        %2443 = vmatprep.subr.bf16.mxu0 0
        %2444 = vmatpush1.bf16.msra.mxu0 0
        %2445 = vmatprep.subr.bf16.mxu0 0
        %2446 = vmatpush1.bf16.msra.mxu0 0
        %2447 = vmatprep.subr.bf16.mxu0 0
        %2448 = vmatpush1.bf16.msra.mxu0 0
        %2449 = vmatprep.subr.bf16.mxu0 0
        %2450 = vmatpush1.bf16.msra.mxu0 0
        %2451 = vmatprep.subr.bf16.mxu0 0
        %2452 = vmatpush1.bf16.msra.mxu0 0
        %2453 = vmatprep.subr.bf16.mxu0 0
        %2454 = vmatpush1.bf16.msra.mxu0 0
        %2455 = vmatprep.subr.bf16.mxu0 0
        %2456 = vmatpush1.bf16.msra.mxu0 0
        %2457 = vmatprep.subr.bf16.mxu0 0
        %2458 = vmatpush1.bf16.msra.mxu0 0
        %2459 = vmatprep.mubr.bf16.mxu0 0
        %2460 = vmatmul.mubr.bf16.gmra.mrb[0].mxu0 %v2269
        %v2461 = vpop.f32.mrb[0].mxu0
        %v2462 = vadd.f32 %v2180, %v2461
        %v2463 = vpop.f32.mrb[0].mxu0
        %v2464 = vadd.f32 %v2180, %v2463
        %v2465 = vpop.f32.mrb[0].mxu0
        %v2466 = vadd.f32 %v2185, %v2465
        %v2467 = vpop.f32.mrb[0].mxu0
        %v2468 = vadd.f32 %v2185, %v2467
        %2469 = vmatprep.mubr.bf16.mxu0 0
        %2470 = vmatmul.mubr.bf16.gmra.mrb[0].mxu0 %v2272
        %v2471 = vpop.f32.mrb[0].mxu0
        %v2472 = vadd.f32 %v2190, %v2471
        %v2473 = vpop.f32.mrb[0].mxu0
        %v2474 = vadd.f32 %v2190, %v2473
        %v2475 = vpop.f32.mrb[0].mxu0
        %v2476 = vadd.f32 %v2195, %v2475
        %v2477 = vpop.f32.mrb[0].mxu0
        %v2478 = vadd.f32 %v2195, %v2477
        %2479 = vmatprep.mubr.bf16.mxu0 0
        %2480 = vmatmul.mubr.bf16.gmra.mrb[0].mxu0 %v2275
        %v2481 = vpop.f32.mrb[0].mxu0
        %v2482 = vadd.f32 %v2200, %v2481
        %v2483 = vpop.f32.mrb[0].mxu0
        %v2484 = vadd.f32 %v2200, %v2483
        %v2485 = vpop.f32.mrb[0].mxu0
        %v2486 = vadd.f32 %v2205, %v2485
        %v2487 = vpop.f32.mrb[0].mxu0
        %v2488 = vadd.f32 %v2205, %v2487
        %2489 = vmatprep.mubr.bf16.mxu0 0
        %2490 = vmatmul.mubr.bf16.gmra.mrb[0].mxu0 %v2278
        %v2491 = vpop.f32.mrb[0].mxu0
        %v2492 = vadd.f32 %v2210, %v2491
        %v2493 = vpop.f32.mrb[0].mxu0
        %v2494 = vadd.f32 %v2210, %v2493
        %v2495 = vpop.f32.mrb[0].mxu0
        %v2496 = vadd.f32 %v2215, %v2495
        %v2497 = vpop.f32.mrb[0].mxu0
        %v2498 = vadd.f32 %v2215, %v2497
        %2499 = vmatprep.mubr.bf16.mxu0 0
        %2500 = vmatmul.mubr.bf16.gmra.mrb[0].mxu0 %v2281
        %v2501 = vpop.f32.mrb[0].mxu0
        %v2502 = vadd.f32 %v2220, %v2501
        %v2503 = vpop.f32.mrb[0].mxu0
        %v2504 = vadd.f32 %v2220, %v2503
        %v2505 = vpop.f32.mrb[0].mxu0
        %v2506 = vadd.f32 %v2225, %v2505
        %v2507 = vpop.f32.mrb[0].mxu0
        %v2508 = vadd.f32 %v2225, %v2507
        %2509 = vmatprep.mubr.bf16.mxu0 0
        %2510 = vmatmul.mubr.bf16.gmra.mrb[0].mxu0 %v2284
        %v2511 = vpop.f32.mrb[0].mxu0
        %v2512 = vadd.f32 %v2230, %v2511
        %v2513 = vpop.f32.mrb[0].mxu0
        %v2514 = vadd.f32 %v2230, %v2513
        %v2515 = vpop.f32.mrb[0].mxu0
        %v2516 = vadd.f32 %v2235, %v2515
        %v2517 = vpop.f32.mrb[0].mxu0
        %v2518 = vadd.f32 %v2235, %v2517
        %2519 = vdwg.mxu0
        %2520 = vmatprep.subr.bf16.mxu0 %v2126
        %2521 = vmatpush1.bf16.msra.mxu0 %v2125
        %2522 = vmatprep.subr.bf16.mxu0 %v2302
        %2523 = vmatpush1.bf16.msra.mxu0 %v2299
        %2524 = vmatprep.subr.bf16.mxu0 0
        %2525 = vmatpush1.bf16.msra.mxu0 0
        %2526 = vmatprep.subr.bf16.mxu0 0
        %2527 = vmatpush1.bf16.msra.mxu0 0
        %2528 = vmatprep.subr.bf16.mxu0 0
        %2529 = vmatpush1.bf16.msra.mxu0 0
        %2530 = vmatprep.subr.bf16.mxu0 0
        %2531 = vmatpush1.bf16.msra.mxu0 0
        %2532 = vmatprep.subr.bf16.mxu0 0
        %2533 = vmatpush1.bf16.msra.mxu0 0
        %2534 = vmatprep.subr.bf16.mxu0 0
        %2535 = vmatpush1.bf16.msra.mxu0 0
        %2536 = vmatprep.subr.bf16.mxu0 0
        %2537 = vmatpush1.bf16.msra.mxu0 0
        %2538 = vmatprep.subr.bf16.mxu0 0
        %2539 = vmatpush1.bf16.msra.mxu0 0
        %2540 = vmatprep.subr.bf16.mxu0 0
        %2541 = vmatpush1.bf16.msra.mxu0 0
        %2542 = vmatprep.subr.bf16.mxu0 0
        %2543 = vmatpush1.bf16.msra.mxu0 0
        %2544 = vmatprep.subr.bf16.mxu0 0
        %2545 = vmatpush1.bf16.msra.mxu0 0
        %2546 = vmatprep.subr.bf16.mxu0 0
        %2547 = vmatpush1.bf16.msra.mxu0 0
        %2548 = vmatprep.subr.bf16.mxu0 0
        %2549 = vmatpush1.bf16.msra.mxu0 0
        %2550 = vmatprep.subr.bf16.mxu0 0
        %2551 = vmatpush1.bf16.msra.mxu0 0
        %2552 = vmatprep.mubr.bf16.mxu0 0
        %2553 = vmatmul.mubr.bf16.gmra.mrb[0].mxu0 %v2269
        %v2554 = vpop.f32.mrb[0].mxu0
        %v2555 = vadd.f32 %v2180, %v2554
        %v2556 = vpop.f32.mrb[0].mxu0
        %v2557 = vadd.f32 %v2180, %v2556
        %v2558 = vpop.f32.mrb[0].mxu0
        %v2559 = vadd.f32 %v2185, %v2558
        %v2560 = vpop.f32.mrb[0].mxu0
        %v2561 = vadd.f32 %v2185, %v2560
        %2562 = vmatprep.mubr.bf16.mxu0 0
        %2563 = vmatmul.mubr.bf16.gmra.mrb[0].mxu0 %v2272
        %v2564 = vpop.f32.mrb[0].mxu0
        %v2565 = vadd.f32 %v2190, %v2564
        %v2566 = vpop.f32.mrb[0].mxu0
        %v2567 = vadd.f32 %v2190, %v2566
        %v2568 = vpop.f32.mrb[0].mxu0
        %v2569 = vadd.f32 %v2195, %v2568
        %v2570 = vpop.f32.mrb[0].mxu0
        %v2571 = vadd.f32 %v2195, %v2570
        %2572 = vmatprep.mubr.bf16.mxu0 0
        %2573 = vmatmul.mubr.bf16.gmra.mrb[0].mxu0 %v2275
        %v2574 = vpop.f32.mrb[0].mxu0
        %v2575 = vadd.f32 %v2200, %v2574
        %v2576 = vpop.f32.mrb[0].mxu0
        %v2577 = vadd.f32 %v2200, %v2576
        %v2578 = vpop.f32.mrb[0].mxu0
        %v2579 = vadd.f32 %v2205, %v2578
        %v2580 = vpop.f32.mrb[0].mxu0
        %v2581 = vadd.f32 %v2205, %v2580
        %2582 = vmatprep.mubr.bf16.mxu0 0
        %2583 = vmatmul.mubr.bf16.gmra.mrb[0].mxu0 %v2278
        %v2584 = vpop.f32.mrb[0].mxu0
        %v2585 = vadd.f32 %v2210, %v2584
        %v2586 = vpop.f32.mrb[0].mxu0
        %v2587 = vadd.f32 %v2210, %v2586
        %v2588 = vpop.f32.mrb[0].mxu0
        %v2589 = vadd.f32 %v2215, %v2588
        %v2590 = vpop.f32.mrb[0].mxu0
        %v2591 = vadd.f32 %v2215, %v2590
        %2592 = vmatprep.mubr.bf16.mxu0 0
        %2593 = vmatmul.mubr.bf16.gmra.mrb[0].mxu0 %v2281
        %v2594 = vpop.f32.mrb[0].mxu0
        %v2595 = vadd.f32 %v2220, %v2594
        %v2596 = vpop.f32.mrb[0].mxu0
        %v2597 = vadd.f32 %v2220, %v2596
        %v2598 = vpop.f32.mrb[0].mxu0
        %v2599 = vadd.f32 %v2225, %v2598
        %v2600 = vpop.f32.mrb[0].mxu0
        %v2601 = vadd.f32 %v2225, %v2600
        %2602 = vmatprep.mubr.bf16.mxu0 0
        %2603 = vmatmul.mubr.bf16.gmra.mrb[0].mxu0 %v2284
        %v2604 = vpop.f32.mrb[0].mxu0
        %v2605 = vadd.f32 %v2230, %v2604
        %v2606 = vpop.f32.mrb[0].mxu0
        %v2607 = vadd.f32 %v2230, %v2606
        %v2608 = vpop.f32.mrb[0].mxu0
        %v2609 = vadd.f32 %v2235, %v2608
        %v2610 = vpop.f32.mrb[0].mxu0
        %v2611 = vadd.f32 %v2235, %v2610
        %2612 = vdwg.mxu0
        %2613 = vmatprep.subr.bf16.mxu0 %v2128
        %2614 = vmatpush1.bf16.msra.mxu0 %v2127
        %2615 = vmatprep.subr.bf16.mxu0 %v2308
        %2616 = vmatpush1.bf16.msra.mxu0 %v2305
        %2617 = vmatprep.subr.bf16.mxu0 0
        %2618 = vmatpush1.bf16.msra.mxu0 0
        %2619 = vmatprep.subr.bf16.mxu0 0
        %2620 = vmatpush1.bf16.msra.mxu0 0
        %2621 = vmatprep.subr.bf16.mxu0 0
        %2622 = vmatpush1.bf16.msra.mxu0 0
        %2623 = vmatprep.subr.bf16.mxu0 0
        %2624 = vmatpush1.bf16.msra.mxu0 0
        %2625 = vmatprep.subr.bf16.mxu0 0
        %2626 = vmatpush1.bf16.msra.mxu0 0
        %2627 = vmatprep.subr.bf16.mxu0 0
        %2628 = vmatpush1.bf16.msra.mxu0 0
        %2629 = vmatprep.subr.bf16.mxu0 0
        %2630 = vmatpush1.bf16.msra.mxu0 0
        %2631 = vmatprep.subr.bf16.mxu0 0
        %2632 = vmatpush1.bf16.msra.mxu0 0
        %2633 = vmatprep.subr.bf16.mxu0 0
        %2634 = vmatpush1.bf16.msra.mxu0 0
        %2635 = vmatprep.subr.bf16.mxu0 0
        %2636 = vmatpush1.bf16.msra.mxu0 0
        %2637 = vmatprep.subr.bf16.mxu0 0
        %2638 = vmatpush1.bf16.msra.mxu0 0
        %2639 = vmatprep.subr.bf16.mxu0 0
        %2640 = vmatpush1.bf16.msra.mxu0 0
        %2641 = vmatprep.subr.bf16.mxu0 0
        %2642 = vmatpush1.bf16.msra.mxu0 0
        %2643 = vmatprep.subr.bf16.mxu0 0
        %2644 = vmatpush1.bf16.msra.mxu0 0
        %2645 = vmatprep.mubr.bf16.mxu0 0
        %2646 = vmatmul.mubr.bf16.gmra.mrb[0].mxu0 %v2269
        %v2647 = vpop.f32.mrb[0].mxu0
        %v2648 = vadd.f32 %v2180, %v2647
        %v2649 = vpop.f32.mrb[0].mxu0
        %v2650 = vadd.f32 %v2180, %v2649
        %v2651 = vpop.f32.mrb[0].mxu0
        %v2652 = vadd.f32 %v2185, %v2651
        %v2653 = vpop.f32.mrb[0].mxu0
        %v2654 = vadd.f32 %v2185, %v2653
        %2655 = vmatprep.mubr.bf16.mxu0 0
        %2656 = vmatmul.mubr.bf16.gmra.mrb[0].mxu0 %v2272
        %v2657 = vpop.f32.mrb[0].mxu0
        %v2658 = vadd.f32 %v2190, %v2657
        %v2659 = vpop.f32.mrb[0].mxu0
        %v2660 = vadd.f32 %v2190, %v2659
        %v2661 = vpop.f32.mrb[0].mxu0
        %v2662 = vadd.f32 %v2195, %v2661
        %v2663 = vpop.f32.mrb[0].mxu0
        %v2664 = vadd.f32 %v2195, %v2663
        %2665 = vmatprep.mubr.bf16.mxu0 0
        %2666 = vmatmul.mubr.bf16.gmra.mrb[0].mxu0 %v2275
        %v2667 = vpop.f32.mrb[0].mxu0
        %v2668 = vadd.f32 %v2200, %v2667
        %v2669 = vpop.f32.mrb[0].mxu0
        %v2670 = vadd.f32 %v2200, %v2669
        %v2671 = vpop.f32.mrb[0].mxu0
        %v2672 = vadd.f32 %v2205, %v2671
        %v2673 = vpop.f32.mrb[0].mxu0
        %v2674 = vadd.f32 %v2205, %v2673
        %2675 = vmatprep.mubr.bf16.mxu0 0
        %2676 = vmatmul.mubr.bf16.gmra.mrb[0].mxu0 %v2278
        %v2677 = vpop.f32.mrb[0].mxu0
        %v2678 = vadd.f32 %v2210, %v2677
        %v2679 = vpop.f32.mrb[0].mxu0
        %v2680 = vadd.f32 %v2210, %v2679
        %v2681 = vpop.f32.mrb[0].mxu0
        %v2682 = vadd.f32 %v2215, %v2681
        %v2683 = vpop.f32.mrb[0].mxu0
        %v2684 = vadd.f32 %v2215, %v2683
        %2685 = vmatprep.mubr.bf16.mxu0 0
        %2686 = vmatmul.mubr.bf16.gmra.mrb[0].mxu0 %v2281
        %v2687 = vpop.f32.mrb[0].mxu0
        %v2688 = vadd.f32 %v2220, %v2687
        %v2689 = vpop.f32.mrb[0].mxu0
        %v2690 = vadd.f32 %v2220, %v2689
        %v2691 = vpop.f32.mrb[0].mxu0
        %v2692 = vadd.f32 %v2225, %v2691
        %v2693 = vpop.f32.mrb[0].mxu0
        %v2694 = vadd.f32 %v2225, %v2693
        %2695 = vmatprep.mubr.bf16.mxu0 0
        %2696 = vmatmul.mubr.bf16.gmra.mrb[0].mxu0 %v2284
        %v2697 = vpop.f32.mrb[0].mxu0
        %v2698 = vadd.f32 %v2230, %v2697
        %v2699 = vpop.f32.mrb[0].mxu0
        %v2700 = vadd.f32 %v2230, %v2699
        %v2701 = vpop.f32.mrb[0].mxu0
        %v2702 = vadd.f32 %v2235, %v2701
        %v2703 = vpop.f32.mrb[0].mxu0
        %v2704 = vadd.f32 %v2235, %v2703
        %2705 = vdwg.mxu0
        %2706 = vmatprep.subr.bf16.mxu0 %v2130
        %2707 = vmatpush1.bf16.msra.mxu0 %v2129
        %2708 = vmatprep.subr.bf16.mxu0 %v2314
        %2709 = vmatpush1.bf16.msra.mxu0 %v2311
        %2710 = vmatprep.subr.bf16.mxu0 0
        %2711 = vmatpush1.bf16.msra.mxu0 0
        %2712 = vmatprep.subr.bf16.mxu0 0
        %2713 = vmatpush1.bf16.msra.mxu0 0
        %2714 = vmatprep.subr.bf16.mxu0 0
        %2715 = vmatpush1.bf16.msra.mxu0 0
        %2716 = vmatprep.subr.bf16.mxu0 0
        %2717 = vmatpush1.bf16.msra.mxu0 0
        %2718 = vmatprep.subr.bf16.mxu0 0
        %2719 = vmatpush1.bf16.msra.mxu0 0
        %2720 = vmatprep.subr.bf16.mxu0 0
        %2721 = vmatpush1.bf16.msra.mxu0 0
        %2722 = vmatprep.subr.bf16.mxu0 0
        %2723 = vmatpush1.bf16.msra.mxu0 0
        %2724 = vmatprep.subr.bf16.mxu0 0
        %2725 = vmatpush1.bf16.msra.mxu0 0
        %2726 = vmatprep.subr.bf16.mxu0 0
        %2727 = vmatpush1.bf16.msra.mxu0 0
        %2728 = vmatprep.subr.bf16.mxu0 0
        %2729 = vmatpush1.bf16.msra.mxu0 0
        %2730 = vmatprep.subr.bf16.mxu0 0
        %2731 = vmatpush1.bf16.msra.mxu0 0
        %2732 = vmatprep.subr.bf16.mxu0 0
        %2733 = vmatpush1.bf16.msra.mxu0 0
        %2734 = vmatprep.subr.bf16.mxu0 0
        %2735 = vmatpush1.bf16.msra.mxu0 0
        %2736 = vmatprep.subr.bf16.mxu0 0
        %2737 = vmatpush1.bf16.msra.mxu0 0
        %2738 = vmatprep.mubr.bf16.mxu0 0
        %2739 = vmatmul.mubr.bf16.gmra.mrb[0].mxu0 %v2269
        %v2740 = vpop.f32.mrb[0].mxu0
        %v2741 = vadd.f32 %v2180, %v2740
        %v2742 = vpop.f32.mrb[0].mxu0
        %v2743 = vadd.f32 %v2180, %v2742
        %v2744 = vpop.f32.mrb[0].mxu0
        %v2745 = vadd.f32 %v2185, %v2744
        %v2746 = vpop.f32.mrb[0].mxu0
        %v2747 = vadd.f32 %v2185, %v2746
        %2748 = vmatprep.mubr.bf16.mxu0 0
        %2749 = vmatmul.mubr.bf16.gmra.mrb[0].mxu0 %v2272
        %v2750 = vpop.f32.mrb[0].mxu0
        %v2751 = vadd.f32 %v2190, %v2750
        %v2752 = vpop.f32.mrb[0].mxu0
        %v2753 = vadd.f32 %v2190, %v2752
        %v2754 = vpop.f32.mrb[0].mxu0
        %v2755 = vadd.f32 %v2195, %v2754
        %v2756 = vpop.f32.mrb[0].mxu0
        %v2757 = vadd.f32 %v2195, %v2756
        %2758 = vmatprep.mubr.bf16.mxu0 0
        %2759 = vmatmul.mubr.bf16.gmra.mrb[0].mxu0 %v2275
        %v2760 = vpop.f32.mrb[0].mxu0
        %v2761 = vadd.f32 %v2200, %v2760
        %v2762 = vpop.f32.mrb[0].mxu0
        %v2763 = vadd.f32 %v2200, %v2762
        %v2764 = vpop.f32.mrb[0].mxu0
        %v2765 = vadd.f32 %v2205, %v2764
        %v2766 = vpop.f32.mrb[0].mxu0
        %v2767 = vadd.f32 %v2205, %v2766
        %2768 = vmatprep.mubr.bf16.mxu0 0
        %2769 = vmatmul.mubr.bf16.gmra.mrb[0].mxu0 %v2278
        %v2770 = vpop.f32.mrb[0].mxu0
        %v2771 = vadd.f32 %v2210, %v2770
        %v2772 = vpop.f32.mrb[0].mxu0
        %v2773 = vadd.f32 %v2210, %v2772
        %v2774 = vpop.f32.mrb[0].mxu0
        %v2775 = vadd.f32 %v2215, %v2774
        %v2776 = vpop.f32.mrb[0].mxu0
        %v2777 = vadd.f32 %v2215, %v2776
        %2778 = vmatprep.mubr.bf16.mxu0 0
        %2779 = vmatmul.mubr.bf16.gmra.mrb[0].mxu0 %v2281
        %v2780 = vpop.f32.mrb[0].mxu0
        %v2781 = vadd.f32 %v2220, %v2780
        %v2782 = vpop.f32.mrb[0].mxu0
        %v2783 = vadd.f32 %v2220, %v2782
        %v2784 = vpop.f32.mrb[0].mxu0
        %v2785 = vadd.f32 %v2225, %v2784
        %v2786 = vpop.f32.mrb[0].mxu0
        %v2787 = vadd.f32 %v2225, %v2786
        %2788 = vmatprep.mubr.bf16.mxu0 0
        %2789 = vmatmul.mubr.bf16.gmra.mrb[0].mxu0 %v2284
        %v2790 = vpop.f32.mrb[0].mxu0
        %v2791 = vadd.f32 %v2230, %v2790
        %v2792 = vpop.f32.mrb[0].mxu0
        %v2793 = vadd.f32 %v2230, %v2792
        %v2794 = vpop.f32.mrb[0].mxu0
        %v2795 = vadd.f32 %v2235, %v2794
        %v2796 = vpop.f32.mrb[0].mxu0
        %v2797 = vadd.f32 %v2235, %v2796
        %2798 = vdwg.mxu0
        %2799 = vmatprep.subr.bf16.mxu0 %v2132
        %2800 = vmatpush1.bf16.msra.mxu0 %v2131
        %2801 = vmatprep.subr.bf16.mxu0 %v2320
        %2802 = vmatpush1.bf16.msra.mxu0 %v2317
        %2803 = vmatprep.subr.bf16.mxu0 0
        %2804 = vmatpush1.bf16.msra.mxu0 0
        %2805 = vmatprep.subr.bf16.mxu0 0
        %2806 = vmatpush1.bf16.msra.mxu0 0
        %2807 = vmatprep.subr.bf16.mxu0 0
        %2808 = vmatpush1.bf16.msra.mxu0 0
        %2809 = vmatprep.subr.bf16.mxu0 0
        %2810 = vmatpush1.bf16.msra.mxu0 0
        %2811 = vmatprep.subr.bf16.mxu0 0
        %2812 = vmatpush1.bf16.msra.mxu0 0
        %2813 = vmatprep.subr.bf16.mxu0 0
        %2814 = vmatpush1.bf16.msra.mxu0 0
        %2815 = vmatprep.subr.bf16.mxu0 0
        %2816 = vmatpush1.bf16.msra.mxu0 0
        %2817 = vmatprep.subr.bf16.mxu0 0
        %2818 = vmatpush1.bf16.msra.mxu0 0
        %2819 = vmatprep.subr.bf16.mxu0 0
        %2820 = vmatpush1.bf16.msra.mxu0 0
        %2821 = vmatprep.subr.bf16.mxu0 0
        %2822 = vmatpush1.bf16.msra.mxu0 0
        %2823 = vmatprep.subr.bf16.mxu0 0
        %2824 = vmatpush1.bf16.msra.mxu0 0
        %2825 = vmatprep.subr.bf16.mxu0 0
        %2826 = vmatpush1.bf16.msra.mxu0 0
        %2827 = vmatprep.subr.bf16.mxu0 0
        %2828 = vmatpush1.bf16.msra.mxu0 0
        %2829 = vmatprep.subr.bf16.mxu0 0
        %2830 = vmatpush1.bf16.msra.mxu0 0
        %2831 = vmatprep.mubr.bf16.mxu0 0
        %2832 = vmatmul.mubr.bf16.gmra.mrb[0].mxu0 %v2269
        %v2833 = vpop.f32.mrb[0].mxu0
        %v2834 = vadd.f32 %v2180, %v2833
        %v2835 = vpop.f32.mrb[0].mxu0
        %v2836 = vadd.f32 %v2180, %v2835
        %v2837 = vpop.f32.mrb[0].mxu0
        %v2838 = vadd.f32 %v2185, %v2837
        %v2839 = vpop.f32.mrb[0].mxu0
        %v2840 = vadd.f32 %v2185, %v2839
        %2841 = vmatprep.mubr.bf16.mxu0 0
        %2842 = vmatmul.mubr.bf16.gmra.mrb[0].mxu0 %v2272
        %v2843 = vpop.f32.mrb[0].mxu0
        %v2844 = vadd.f32 %v2190, %v2843
        %v2845 = vpop.f32.mrb[0].mxu0
        %v2846 = vadd.f32 %v2190, %v2845
        %v2847 = vpop.f32.mrb[0].mxu0
        %v2848 = vadd.f32 %v2195, %v2847
        %v2849 = vpop.f32.mrb[0].mxu0
        %v2850 = vadd.f32 %v2195, %v2849
        %2851 = vmatprep.mubr.bf16.mxu0 0
        %2852 = vmatmul.mubr.bf16.gmra.mrb[0].mxu0 %v2275
        %v2853 = vpop.f32.mrb[0].mxu0
        %v2854 = vadd.f32 %v2200, %v2853
        %v2855 = vpop.f32.mrb[0].mxu0
        %v2856 = vadd.f32 %v2200, %v2855
        %v2857 = vpop.f32.mrb[0].mxu0
        %v2858 = vadd.f32 %v2205, %v2857
        %v2859 = vpop.f32.mrb[0].mxu0
        %v2860 = vadd.f32 %v2205, %v2859
        %2861 = vmatprep.mubr.bf16.mxu0 0
        %2862 = vmatmul.mubr.bf16.gmra.mrb[0].mxu0 %v2278
        %v2863 = vpop.f32.mrb[0].mxu0
        %v2864 = vadd.f32 %v2210, %v2863
        %v2865 = vpop.f32.mrb[0].mxu0
        %v2866 = vadd.f32 %v2210, %v2865
        %v2867 = vpop.f32.mrb[0].mxu0
        %v2868 = vadd.f32 %v2215, %v2867
        %v2869 = vpop.f32.mrb[0].mxu0
        %v2870 = vadd.f32 %v2215, %v2869
        %2871 = vmatprep.mubr.bf16.mxu0 0
        %2872 = vmatmul.mubr.bf16.gmra.mrb[0].mxu0 %v2281
        %v2873 = vpop.f32.mrb[0].mxu0
        %v2874 = vadd.f32 %v2220, %v2873
        %v2875 = vpop.f32.mrb[0].mxu0
        %v2876 = vadd.f32 %v2220, %v2875
        %v2877 = vpop.f32.mrb[0].mxu0
        %v2878 = vadd.f32 %v2225, %v2877
        %v2879 = vpop.f32.mrb[0].mxu0
        %v2880 = vadd.f32 %v2225, %v2879
        %2881 = vmatprep.mubr.bf16.mxu0 0
        %2882 = vmatmul.mubr.bf16.gmra.mrb[0].mxu0 %v2284
        %v2883 = vpop.f32.mrb[0].mxu0
        %v2884 = vadd.f32 %v2230, %v2883
        %v2885 = vpop.f32.mrb[0].mxu0
        %v2886 = vadd.f32 %v2230, %v2885
        %v2887 = vpop.f32.mrb[0].mxu0
        %v2888 = vadd.f32 %v2235, %v2887
        %v2889 = vpop.f32.mrb[0].mxu0
        %v2890 = vadd.f32 %v2235, %v2889
        %2891 = vdwg.mxu0
        %2892 = vmatprep.subr.bf16.mxu0 %v2134
        %2893 = vmatpush1.bf16.msra.mxu0 %v2133
        %2894 = vmatprep.subr.bf16.mxu0 %v2326
        %2895 = vmatpush1.bf16.msra.mxu0 %v2323
        %2896 = vmatprep.subr.bf16.mxu0 0
        %2897 = vmatpush1.bf16.msra.mxu0 0
        %2898 = vmatprep.subr.bf16.mxu0 0
        %2899 = vmatpush1.bf16.msra.mxu0 0
        %2900 = vmatprep.subr.bf16.mxu0 0
        %2901 = vmatpush1.bf16.msra.mxu0 0
        %2902 = vmatprep.subr.bf16.mxu0 0
        %2903 = vmatpush1.bf16.msra.mxu0 0
        %2904 = vmatprep.subr.bf16.mxu0 0
        %2905 = vmatpush1.bf16.msra.mxu0 0
        %2906 = vmatprep.subr.bf16.mxu0 0
        %2907 = vmatpush1.bf16.msra.mxu0 0
        %2908 = vmatprep.subr.bf16.mxu0 0
        %2909 = vmatpush1.bf16.msra.mxu0 0
        %2910 = vmatprep.subr.bf16.mxu0 0
        %2911 = vmatpush1.bf16.msra.mxu0 0
        %2912 = vmatprep.subr.bf16.mxu0 0
        %2913 = vmatpush1.bf16.msra.mxu0 0
        %2914 = vmatprep.subr.bf16.mxu0 0
        %2915 = vmatpush1.bf16.msra.mxu0 0
        %2916 = vmatprep.subr.bf16.mxu0 0
        %2917 = vmatpush1.bf16.msra.mxu0 0
        %2918 = vmatprep.subr.bf16.mxu0 0
        %2919 = vmatpush1.bf16.msra.mxu0 0
        %2920 = vmatprep.subr.bf16.mxu0 0
        %2921 = vmatpush1.bf16.msra.mxu0 0
        %2922 = vmatprep.subr.bf16.mxu0 0
        %2923 = vmatpush1.bf16.msra.mxu0 0
        %2924 = vmatprep.mubr.bf16.mxu0 0
        %2925 = vmatmul.mubr.bf16.gmra.mrb[0].mxu0 %v2269
        %v2926 = vpop.f32.mrb[0].mxu0
        %v2927 = vadd.f32 %v2180, %v2926
        %v2928 = vpop.f32.mrb[0].mxu0
        %v2929 = vadd.f32 %v2180, %v2928
        %v2930 = vpop.f32.mrb[0].mxu0
        %v2931 = vadd.f32 %v2185, %v2930
        %v2932 = vpop.f32.mrb[0].mxu0
        %v2933 = vadd.f32 %v2185, %v2932
        %2934 = vmatprep.mubr.bf16.mxu0 0
        %2935 = vmatmul.mubr.bf16.gmra.mrb[0].mxu0 %v2272
        %v2936 = vpop.f32.mrb[0].mxu0
        %v2937 = vadd.f32 %v2190, %v2936
        %v2938 = vpop.f32.mrb[0].mxu0
        %v2939 = vadd.f32 %v2190, %v2938
        %v2940 = vpop.f32.mrb[0].mxu0
        %v2941 = vadd.f32 %v2195, %v2940
        %v2942 = vpop.f32.mrb[0].mxu0
        %v2943 = vadd.f32 %v2195, %v2942
        %2944 = vmatprep.mubr.bf16.mxu0 0
        %2945 = vmatmul.mubr.bf16.gmra.mrb[0].mxu0 %v2275
        %v2946 = vpop.f32.mrb[0].mxu0
        %v2947 = vadd.f32 %v2200, %v2946
        %v2948 = vpop.f32.mrb[0].mxu0
        %v2949 = vadd.f32 %v2200, %v2948
        %v2950 = vpop.f32.mrb[0].mxu0
        %v2951 = vadd.f32 %v2205, %v2950
        %v2952 = vpop.f32.mrb[0].mxu0
        %v2953 = vadd.f32 %v2205, %v2952
        %2954 = vmatprep.mubr.bf16.mxu0 0
        %2955 = vmatmul.mubr.bf16.gmra.mrb[0].mxu0 %v2278
        %v2956 = vpop.f32.mrb[0].mxu0
        %v2957 = vadd.f32 %v2210, %v2956
        %v2958 = vpop.f32.mrb[0].mxu0
        %v2959 = vadd.f32 %v2210, %v2958
        %v2960 = vpop.f32.mrb[0].mxu0
        %v2961 = vadd.f32 %v2215, %v2960
        %v2962 = vpop.f32.mrb[0].mxu0
        %v2963 = vadd.f32 %v2215, %v2962
        %2964 = vmatprep.mubr.bf16.mxu0 0
        %2965 = vmatmul.mubr.bf16.gmra.mrb[0].mxu0 %v2281
        %v2966 = vpop.f32.mrb[0].mxu0
        %v2967 = vadd.f32 %v2220, %v2966
        %v2968 = vpop.f32.mrb[0].mxu0
        %v2969 = vadd.f32 %v2220, %v2968
        %v2970 = vpop.f32.mrb[0].mxu0
        %v2971 = vadd.f32 %v2225, %v2970
        %v2972 = vpop.f32.mrb[0].mxu0
        %v2973 = vadd.f32 %v2225, %v2972
        %2974 = vmatprep.mubr.bf16.mxu0 0
        %2975 = vmatmul.mubr.bf16.gmra.mrb[0].mxu0 %v2284
        %v2976 = vpop.f32.mrb[0].mxu0
        %v2977 = vadd.f32 %v2230, %v2976
        %v2978 = vpop.f32.mrb[0].mxu0
        %v2979 = vadd.f32 %v2230, %v2978
        %v2980 = vpop.f32.mrb[0].mxu0
        %v2981 = vadd.f32 %v2235, %v2980
        %v2982 = vpop.f32.mrb[0].mxu0
        %v2983 = vadd.f32 %v2235, %v2982
        %2984 = vdwg.mxu0
        %2985 = vmatprep.subr.bf16.mxu0 %v2136
        %2986 = vmatpush1.bf16.msra.mxu0 %v2135
        %2987 = vmatprep.subr.bf16.mxu0 %v2332
        %2988 = vmatpush1.bf16.msra.mxu0 %v2329
        %2989 = vmatprep.subr.bf16.mxu0 0
        %2990 = vmatpush1.bf16.msra.mxu0 0
        %2991 = vmatprep.subr.bf16.mxu0 0
        %2992 = vmatpush1.bf16.msra.mxu0 0
        %2993 = vmatprep.subr.bf16.mxu0 0
        %2994 = vmatpush1.bf16.msra.mxu0 0
        %2995 = vmatprep.subr.bf16.mxu0 0
        %2996 = vmatpush1.bf16.msra.mxu0 0
        %2997 = vmatprep.subr.bf16.mxu0 0
        %2998 = vmatpush1.bf16.msra.mxu0 0
        %2999 = vmatprep.subr.bf16.mxu0 0
        %3000 = vmatpush1.bf16.msra.mxu0 0
        %3001 = vmatprep.subr.bf16.mxu0 0
        %3002 = vmatpush1.bf16.msra.mxu0 0
        %3003 = vmatprep.subr.bf16.mxu0 0
        %3004 = vmatpush1.bf16.msra.mxu0 0
        %3005 = vmatprep.subr.bf16.mxu0 0
        %3006 = vmatpush1.bf16.msra.mxu0 0
        %3007 = vmatprep.subr.bf16.mxu0 0
        %3008 = vmatpush1.bf16.msra.mxu0 0
        %3009 = vmatprep.subr.bf16.mxu0 0
        %3010 = vmatpush1.bf16.msra.mxu0 0
        %3011 = vmatprep.subr.bf16.mxu0 0
        %3012 = vmatpush1.bf16.msra.mxu0 0
        %3013 = vmatprep.subr.bf16.mxu0 0
        %3014 = vmatpush1.bf16.msra.mxu0 0
        %3015 = vmatprep.subr.bf16.mxu0 0
        %3016 = vmatpush1.bf16.msra.mxu0 0
        %3017 = vmatprep.mubr.bf16.mxu0 0
        %3018 = vmatmul.mubr.bf16.gmra.mrb[0].mxu0 %v2269
        %v3019 = vpop.f32.mrb[0].mxu0
        %v3020 = vadd.f32 %v2180, %v3019
        %v3021 = vpop.f32.mrb[0].mxu0
        %v3022 = vadd.f32 %v2180, %v3021
        %v3023 = vpop.f32.mrb[0].mxu0
        %v3024 = vadd.f32 %v2185, %v3023
        %v3025 = vpop.f32.mrb[0].mxu0
        %v3026 = vadd.f32 %v2185, %v3025
        %3027 = vmatprep.mubr.bf16.mxu0 0
        %3028 = vmatmul.mubr.bf16.gmra.mrb[0].mxu0 %v2272
        %v3029 = vpop.f32.mrb[0].mxu0
        %v3030 = vadd.f32 %v2190, %v3029
        %v3031 = vpop.f32.mrb[0].mxu0
        %v3032 = vadd.f32 %v2190, %v3031
        %v3033 = vpop.f32.mrb[0].mxu0
        %v3034 = vadd.f32 %v2195, %v3033
        %v3035 = vpop.f32.mrb[0].mxu0
        %v3036 = vadd.f32 %v2195, %v3035
        %3037 = vmatprep.mubr.bf16.mxu0 0
        %3038 = vmatmul.mubr.bf16.gmra.mrb[0].mxu0 %v2275
        %v3039 = vpop.f32.mrb[0].mxu0
        %v3040 = vadd.f32 %v2200, %v3039
        %v3041 = vpop.f32.mrb[0].mxu0
        %v3042 = vadd.f32 %v2200, %v3041
        %v3043 = vpop.f32.mrb[0].mxu0
        %v3044 = vadd.f32 %v2205, %v3043
        %v3045 = vpop.f32.mrb[0].mxu0
        %v3046 = vadd.f32 %v2205, %v3045
        %3047 = vmatprep.mubr.bf16.mxu0 0
        %3048 = vmatmul.mubr.bf16.gmra.mrb[0].mxu0 %v2278
        %v3049 = vpop.f32.mrb[0].mxu0
        %v3050 = vadd.f32 %v2210, %v3049
        %v3051 = vpop.f32.mrb[0].mxu0
        %v3052 = vadd.f32 %v2210, %v3051
        %v3053 = vpop.f32.mrb[0].mxu0
        %v3054 = vadd.f32 %v2215, %v3053
        %v3055 = vpop.f32.mrb[0].mxu0
        %v3056 = vadd.f32 %v2215, %v3055
        %3057 = vmatprep.mubr.bf16.mxu0 0
        %3058 = vmatmul.mubr.bf16.gmra.mrb[0].mxu0 %v2281
        %v3059 = vpop.f32.mrb[0].mxu0
        %v3060 = vadd.f32 %v2220, %v3059
        %v3061 = vpop.f32.mrb[0].mxu0
        %v3062 = vadd.f32 %v2220, %v3061
        %v3063 = vpop.f32.mrb[0].mxu0
        %v3064 = vadd.f32 %v2225, %v3063
        %v3065 = vpop.f32.mrb[0].mxu0
        %v3066 = vadd.f32 %v2225, %v3065
        %3067 = vmatprep.mubr.bf16.mxu0 0
        %3068 = vmatmul.mubr.bf16.gmra.mrb[0].mxu0 %v2284
        %v3069 = vpop.f32.mrb[0].mxu0
        %v3070 = vadd.f32 %v2230, %v3069
        %v3071 = vpop.f32.mrb[0].mxu0
        %v3072 = vadd.f32 %v2230, %v3071
        %v3073 = vpop.f32.mrb[0].mxu0
        %v3074 = vadd.f32 %v2235, %v3073
        %v3075 = vpop.f32.mrb[0].mxu0
        %v3076 = vadd.f32 %v2235, %v3075
        %3077 = vdwg.mxu0
        %v3078 = vmax.f32 %v2369, 0.0
        %v3079 = vmax.f32 %v2371, 0.0
        %v3080 = vmax.f32 %v2462, 0.0
        %v3081 = vmax.f32 %v2464, 0.0
        %v3082 = vmax.f32 %v2555, 0.0
        %v3083 = vmax.f32 %v2557, 0.0
        %v3084 = vmax.f32 %v2648, 0.0
        %v3085 = vmax.f32 %v2650, 0.0
        %v3086 = vmax.f32 %v2741, 0.0
        %v3087 = vmax.f32 %v2743, 0.0
        %v3088 = vmax.f32 %v2834, 0.0
        %v3089 = vmax.f32 %v2836, 0.0
        %v3090 = vmax.f32 %v2927, 0.0
        %v3091 = vmax.f32 %v2929, 0.0
        %v3092 = vmax.f32 %v3020, 0.0
        %v3093 = vmax.f32 %v3022, 0.0
        %v3094 = vmax.f32 %v2373, 0.0
        %v3095 = vmax.f32 %v2375, 0.0
        %v3096 = vmax.f32 %v2466, 0.0
        %v3097 = vmax.f32 %v2468, 0.0
        %v3098 = vmax.f32 %v2559, 0.0
        %v3099 = vmax.f32 %v2561, 0.0
        %v3100 = vmax.f32 %v2652, 0.0
        %v3101 = vmax.f32 %v2654, 0.0
        %v3102 = vmax.f32 %v2745, 0.0
        %v3103 = vmax.f32 %v2747, 0.0
        %v3104 = vmax.f32 %v2838, 0.0
        %v3105 = vmax.f32 %v2840, 0.0
        %v3106 = vmax.f32 %v2931, 0.0
        %v3107 = vmax.f32 %v2933, 0.0
        %v3108 = vmax.f32 %v3024, 0.0
        %v3109 = vmax.f32 %v3026, 0.0
        %v3110 = vmax.f32 %v2379, 0.0
        %v3111 = vmax.f32 %v2381, 0.0
        %v3112 = vmax.f32 %v2472, 0.0
        %v3113 = vmax.f32 %v2474, 0.0
        %v3114 = vmax.f32 %v2565, 0.0
        %v3115 = vmax.f32 %v2567, 0.0
        %v3116 = vmax.f32 %v2658, 0.0
        %v3117 = vmax.f32 %v2660, 0.0
        %v3118 = vmax.f32 %v2751, 0.0
        %v3119 = vmax.f32 %v2753, 0.0
        %v3120 = vmax.f32 %v2844, 0.0
        %v3121 = vmax.f32 %v2846, 0.0
        %v3122 = vmax.f32 %v2937, 0.0
        %v3123 = vmax.f32 %v2939, 0.0
        %v3124 = vmax.f32 %v3030, 0.0
        %v3125 = vmax.f32 %v3032, 0.0
        %v3126 = vmax.f32 %v2383, 0.0
        %v3127 = vmax.f32 %v2385, 0.0
        %v3128 = vmax.f32 %v2476, 0.0
        %v3129 = vmax.f32 %v2478, 0.0
        %v3130 = vmax.f32 %v2569, 0.0
        %v3131 = vmax.f32 %v2571, 0.0
        %v3132 = vmax.f32 %v2662, 0.0
        %v3133 = vmax.f32 %v2664, 0.0
        %v3134 = vmax.f32 %v2755, 0.0
        %v3135 = vmax.f32 %v2757, 0.0
        %v3136 = vmax.f32 %v2848, 0.0
        %v3137 = vmax.f32 %v2850, 0.0
        %v3138 = vmax.f32 %v2941, 0.0
        %v3139 = vmax.f32 %v2943, 0.0
        %v3140 = vmax.f32 %v3034, 0.0
        %v3141 = vmax.f32 %v3036, 0.0
        %v3142 = vmax.f32 %v2389, 0.0
        %v3143 = vmax.f32 %v2391, 0.0
        %v3144 = vmax.f32 %v2482, 0.0
        %v3145 = vmax.f32 %v2484, 0.0
        %v3146 = vmax.f32 %v2575, 0.0
        %v3147 = vmax.f32 %v2577, 0.0
        %v3148 = vmax.f32 %v2668, 0.0
        %v3149 = vmax.f32 %v2670, 0.0
        %v3150 = vmax.f32 %v2761, 0.0
        %v3151 = vmax.f32 %v2763, 0.0
        %v3152 = vmax.f32 %v2854, 0.0
        %v3153 = vmax.f32 %v2856, 0.0
        %v3154 = vmax.f32 %v2947, 0.0
        %v3155 = vmax.f32 %v2949, 0.0
        %v3156 = vmax.f32 %v3040, 0.0
        %v3157 = vmax.f32 %v3042, 0.0
        %v3158 = vmax.f32 %v2393, 0.0
        %v3159 = vmax.f32 %v2395, 0.0
        %v3160 = vmax.f32 %v2486, 0.0
        %v3161 = vmax.f32 %v2488, 0.0
        %v3162 = vmax.f32 %v2579, 0.0
        %v3163 = vmax.f32 %v2581, 0.0
        %v3164 = vmax.f32 %v2672, 0.0
        %v3165 = vmax.f32 %v2674, 0.0
        %v3166 = vmax.f32 %v2765, 0.0
        %v3167 = vmax.f32 %v2767, 0.0
        %v3168 = vmax.f32 %v2858, 0.0
        %v3169 = vmax.f32 %v2860, 0.0
        %v3170 = vmax.f32 %v2951, 0.0
        %v3171 = vmax.f32 %v2953, 0.0
        %v3172 = vmax.f32 %v3044, 0.0
        %v3173 = vmax.f32 %v3046, 0.0
        %v3174 = vmax.f32 %v2399, 0.0
        %v3175 = vmax.f32 %v2401, 0.0
        %v3176 = vmax.f32 %v2492, 0.0
        %v3177 = vmax.f32 %v2494, 0.0
        %v3178 = vmax.f32 %v2585, 0.0
        %v3179 = vmax.f32 %v2587, 0.0
        %v3180 = vmax.f32 %v2678, 0.0
        %v3181 = vmax.f32 %v2680, 0.0
        %v3182 = vmax.f32 %v2771, 0.0
        %v3183 = vmax.f32 %v2773, 0.0
        %v3184 = vmax.f32 %v2864, 0.0
        %v3185 = vmax.f32 %v2866, 0.0
        %v3186 = vmax.f32 %v2957, 0.0
        %v3187 = vmax.f32 %v2959, 0.0
        %v3188 = vmax.f32 %v3050, 0.0
        %v3189 = vmax.f32 %v3052, 0.0
        %v3190 = vmax.f32 %v2403, 0.0
        %v3191 = vmax.f32 %v2405, 0.0
        %v3192 = vmax.f32 %v2496, 0.0
        %v3193 = vmax.f32 %v2498, 0.0
        %v3194 = vmax.f32 %v2589, 0.0
        %v3195 = vmax.f32 %v2591, 0.0
        %v3196 = vmax.f32 %v2682, 0.0
        %v3197 = vmax.f32 %v2684, 0.0
        %v3198 = vmax.f32 %v2775, 0.0
        %v3199 = vmax.f32 %v2777, 0.0
        %v3200 = vmax.f32 %v2868, 0.0
        %v3201 = vmax.f32 %v2870, 0.0
        %v3202 = vmax.f32 %v2961, 0.0
        %v3203 = vmax.f32 %v2963, 0.0
        %v3204 = vmax.f32 %v3054, 0.0
        %v3205 = vmax.f32 %v3056, 0.0
        %v3206 = vmax.f32 %v2409, 0.0
        %v3207 = vmax.f32 %v2411, 0.0
        %v3208 = vmax.f32 %v2502, 0.0
        %v3209 = vmax.f32 %v2504, 0.0
        %v3210 = vmax.f32 %v2595, 0.0
        %v3211 = vmax.f32 %v2597, 0.0
        %v3212 = vmax.f32 %v2688, 0.0
        %v3213 = vmax.f32 %v2690, 0.0
        %v3214 = vmax.f32 %v2781, 0.0
        %v3215 = vmax.f32 %v2783, 0.0
        %v3216 = vmax.f32 %v2874, 0.0
        %v3217 = vmax.f32 %v2876, 0.0
        %v3218 = vmax.f32 %v2967, 0.0
        %v3219 = vmax.f32 %v2969, 0.0
        %v3220 = vmax.f32 %v3060, 0.0
        %v3221 = vmax.f32 %v3062, 0.0
        %v3222 = vmax.f32 %v2413, 0.0
        %v3223 = vmax.f32 %v2415, 0.0
        %v3224 = vmax.f32 %v2506, 0.0
        %v3225 = vmax.f32 %v2508, 0.0
        %v3226 = vmax.f32 %v2599, 0.0
        %v3227 = vmax.f32 %v2601, 0.0
        %v3228 = vmax.f32 %v2692, 0.0
        %v3229 = vmax.f32 %v2694, 0.0
        %v3230 = vmax.f32 %v2785, 0.0
        %v3231 = vmax.f32 %v2787, 0.0
        %v3232 = vmax.f32 %v2878, 0.0
        %v3233 = vmax.f32 %v2880, 0.0
        %v3234 = vmax.f32 %v2971, 0.0
        %v3235 = vmax.f32 %v2973, 0.0
        %v3236 = vmax.f32 %v3064, 0.0
        %v3237 = vmax.f32 %v3066, 0.0
        %v3238 = vmax.f32 %v2419, 0.0
        %v3239 = vmax.f32 %v2421, 0.0
        %v3240 = vmax.f32 %v2512, 0.0
        %v3241 = vmax.f32 %v2514, 0.0
        %v3242 = vmax.f32 %v2605, 0.0
        %v3243 = vmax.f32 %v2607, 0.0
        %v3244 = vmax.f32 %v2698, 0.0
        %v3245 = vmax.f32 %v2700, 0.0
        %v3246 = vmax.f32 %v2791, 0.0
        %v3247 = vmax.f32 %v2793, 0.0
        %v3248 = vmax.f32 %v2884, 0.0
        %v3249 = vmax.f32 %v2886, 0.0
        %v3250 = vmax.f32 %v2977, 0.0
        %v3251 = vmax.f32 %v2979, 0.0
        %v3252 = vmax.f32 %v3070, 0.0
        %v3253 = vmax.f32 %v3072, 0.0
        %v3254 = vmax.f32 %v2423, 0.0
        %v3255 = vmax.f32 %v2425, 0.0
        %v3256 = vmax.f32 %v2516, 0.0
        %v3257 = vmax.f32 %v2518, 0.0
        %v3258 = vmax.f32 %v2609, 0.0
        %v3259 = vmax.f32 %v2611, 0.0
        %v3260 = vmax.f32 %v2702, 0.0
        %v3261 = vmax.f32 %v2704, 0.0
        %v3262 = vmax.f32 %v2795, 0.0
        %v3263 = vmax.f32 %v2797, 0.0
        %v3264 = vmax.f32 %v2888, 0.0
        %v3265 = vmax.f32 %v2890, 0.0
        %v3266 = vmax.f32 %v2981, 0.0
        %v3267 = vmax.f32 %v2983, 0.0
        %v3268 = vmax.f32 %v3074, 0.0
        %v3269 = vmax.f32 %v3076, 0.0
        %v3270 = vpack.c.bf16 %v3094, %v3078
        %v3271 = vpack.c.bf16 %v3095, %v3079
        %v3272 = vpack.c.bf16 %v3096, %v3080
        %v3273 = vpack.c.bf16 %v3097, %v3081
        %v3274 = vpack.c.bf16 %v3098, %v3082
        %v3275 = vpack.c.bf16 %v3099, %v3083
        %v3276 = vpack.c.bf16 %v3100, %v3084
        %v3277 = vpack.c.bf16 %v3101, %v3085
        %v3278 = vpack.c.bf16 %v3102, %v3086
        %v3279 = vpack.c.bf16 %v3103, %v3087
        %v3280 = vpack.c.bf16 %v3104, %v3088
        %v3281 = vpack.c.bf16 %v3105, %v3089
        %v3282 = vpack.c.bf16 %v3106, %v3090
        %v3283 = vpack.c.bf16 %v3107, %v3091
        %v3284 = vpack.c.bf16 %v3108, %v3092
        %v3285 = vpack.c.bf16 %v3109, %v3093
        %v3286 = vpack.c.bf16 %v3126, %v3110
        %v3287 = vpack.c.bf16 %v3127, %v3111
        %v3288 = vpack.c.bf16 %v3128, %v3112
        %v3289 = vpack.c.bf16 %v3129, %v3113
        %v3290 = vpack.c.bf16 %v3130, %v3114
        %v3291 = vpack.c.bf16 %v3131, %v3115
        %v3292 = vpack.c.bf16 %v3132, %v3116
        %v3293 = vpack.c.bf16 %v3133, %v3117
        %v3294 = vpack.c.bf16 %v3134, %v3118
        %v3295 = vpack.c.bf16 %v3135, %v3119
        %v3296 = vpack.c.bf16 %v3136, %v3120
        %v3297 = vpack.c.bf16 %v3137, %v3121
        %v3298 = vpack.c.bf16 %v3138, %v3122
        %v3299 = vpack.c.bf16 %v3139, %v3123
        %v3300 = vpack.c.bf16 %v3140, %v3124
        %v3301 = vpack.c.bf16 %v3141, %v3125
        %v3302 = vpack.c.bf16 %v3158, %v3142
        %v3303 = vpack.c.bf16 %v3159, %v3143
        %v3304 = vpack.c.bf16 %v3160, %v3144
        %v3305 = vpack.c.bf16 %v3161, %v3145
        %v3306 = vpack.c.bf16 %v3162, %v3146
        %v3307 = vpack.c.bf16 %v3163, %v3147
        %v3308 = vpack.c.bf16 %v3164, %v3148
        %v3309 = vpack.c.bf16 %v3165, %v3149
        %v3310 = vpack.c.bf16 %v3166, %v3150
        %v3311 = vpack.c.bf16 %v3167, %v3151
        %v3312 = vpack.c.bf16 %v3168, %v3152
        %v3313 = vpack.c.bf16 %v3169, %v3153
        %v3314 = vpack.c.bf16 %v3170, %v3154
        %v3315 = vpack.c.bf16 %v3171, %v3155
        %v3316 = vpack.c.bf16 %v3172, %v3156
        %v3317 = vpack.c.bf16 %v3173, %v3157
        %v3318 = vpack.c.bf16 %v3190, %v3174
        %v3319 = vpack.c.bf16 %v3191, %v3175
        %v3320 = vpack.c.bf16 %v3192, %v3176
        %v3321 = vpack.c.bf16 %v3193, %v3177
        %v3322 = vpack.c.bf16 %v3194, %v3178
        %v3323 = vpack.c.bf16 %v3195, %v3179
        %v3324 = vpack.c.bf16 %v3196, %v3180
        %v3325 = vpack.c.bf16 %v3197, %v3181
        %v3326 = vpack.c.bf16 %v3198, %v3182
        %v3327 = vpack.c.bf16 %v3199, %v3183
        %v3328 = vpack.c.bf16 %v3200, %v3184
        %v3329 = vpack.c.bf16 %v3201, %v3185
        %v3330 = vpack.c.bf16 %v3202, %v3186
        %v3331 = vpack.c.bf16 %v3203, %v3187
        %v3332 = vpack.c.bf16 %v3204, %v3188
        %v3333 = vpack.c.bf16 %v3205, %v3189
        %v3334 = vpack.c.bf16 %v3222, %v3206
        %v3335 = vpack.c.bf16 %v3223, %v3207
        %v3336 = vpack.c.bf16 %v3224, %v3208
        %v3337 = vpack.c.bf16 %v3225, %v3209
        %v3338 = vpack.c.bf16 %v3226, %v3210
        %v3339 = vpack.c.bf16 %v3227, %v3211
        %v3340 = vpack.c.bf16 %v3228, %v3212
        %v3341 = vpack.c.bf16 %v3229, %v3213
        %v3342 = vpack.c.bf16 %v3230, %v3214
        %v3343 = vpack.c.bf16 %v3231, %v3215
        %v3344 = vpack.c.bf16 %v3232, %v3216
        %v3345 = vpack.c.bf16 %v3233, %v3217
        %v3346 = vpack.c.bf16 %v3234, %v3218
        %v3347 = vpack.c.bf16 %v3235, %v3219
        %v3348 = vpack.c.bf16 %v3236, %v3220
        %v3349 = vpack.c.bf16 %v3237, %v3221
        %v3350 = vpack.c.bf16 %v3254, %v3238
        %v3351 = vpack.c.bf16 %v3255, %v3239
        %v3352 = vpack.c.bf16 %v3256, %v3240
        %v3353 = vpack.c.bf16 %v3257, %v3241
        %v3354 = vpack.c.bf16 %v3258, %v3242
        %v3355 = vpack.c.bf16 %v3259, %v3243
        %v3356 = vpack.c.bf16 %v3260, %v3244
        %v3357 = vpack.c.bf16 %v3261, %v3245
        %v3358 = vpack.c.bf16 %v3262, %v3246
        %v3359 = vpack.c.bf16 %v3263, %v3247
        %v3360 = vpack.c.bf16 %v3264, %v3248
        %v3361 = vpack.c.bf16 %v3265, %v3249
        %v3362 = vpack.c.bf16 %v3266, %v3250
        %v3363 = vpack.c.bf16 %v3267, %v3251
        %v3364 = vpack.c.bf16 %v3268, %v3252
        %v3365 = vpack.c.bf16 %v3269, %v3253
        %v3366 = vld [vmem:[%s4] sm:$0xf]
        %v3367 = vld [vmem:[%s4 + $0x4] sm:$0xf]
        %v3368 = vld [vmem:[%s4 + $0x8] sm:$0xf]
        %v3369 = vld [vmem:[%s4 + $0xc] sm:$0xf]
        %v3370 = vld [vmem:[%s4 + $0x10] sm:$0xf]
        %v3371 = vld [vmem:[%s4 + $0x14] sm:$0xf]
        %v3372 = vld [vmem:[%s4 + $0x18] sm:$0xf]
        %v3373 = vld [vmem:[%s4 + $0x1c] sm:$0xf]
        %v3374 = vld [vmem:[%s4 + $0x20] sm:$0xf]
        %v3375 = vld [vmem:[%s4 + $0x24] sm:$0xf]
        %v3376 = vld [vmem:[%s4 + $0x28] sm:$0xf]
        %v3377 = vld [vmem:[%s4 + $0x2c] sm:$0xf]
        %v3378 = vld [vmem:[%s5] sm:$0xff]
        %v3379 = vld [vmem:[%s5 + $0x8] sm:$0xff]
        %v3380 = vld [vmem:[%s5 + $0x10] sm:$0xff]
        %v3381 = vld [vmem:[%s5 + $0x18] sm:$0xff]
        %v3382 = vld [vmem:[%s5 + $0x20] sm:$0xff]
        %v3383 = vld [vmem:[%s5 + $0x28] sm:$0xff]
        %v3384 = vld [vmem:[%s5 + $0x30] sm:$0xff]
        %v3385 = vld [vmem:[%s5 + $0x38] sm:$0xff]
        %v3386 = vld [vmem:[%s5 + $0x40] sm:$0xff]
        %v3387 = vld [vmem:[%s5 + $0x48] sm:$0xff]
        %v3388 = vld [vmem:[%s5 + $0x50] sm:$0xff]
        %v3389 = vld [vmem:[%s5 + $0x58] sm:$0xff]
        %3391 = vset.pattern.permute.xlu0 0
        %3392 = vperm.xlu0 %3391, %v3378
        %v3393 = vpop.permute.xlu0 %3392
        %3396 = vset.pattern.permute.xlu0 0
        %3397 = vperm.xlu0 %3396, %v3379
        %v3398 = vpop.permute.xlu0 %3397
        %3401 = vset.pattern.permute.xlu0 0
        %3402 = vperm.xlu0 %3401, %v3380
        %v3403 = vpop.permute.xlu0 %3402
        %3406 = vset.pattern.permute.xlu0 0
        %3407 = vperm.xlu0 %3406, %v3381
        %v3408 = vpop.permute.xlu0 %3407
        %3411 = vset.pattern.permute.xlu0 0
        %3412 = vperm.xlu0 %3411, %v3382
        %v3413 = vpop.permute.xlu0 %3412
        %3416 = vset.pattern.permute.xlu0 0
        %3417 = vperm.xlu0 %3416, %v3383
        %v3418 = vpop.permute.xlu0 %3417
        %3421 = vset.pattern.permute.xlu0 0
        %3422 = vperm.xlu0 %3421, %v3384
        %v3423 = vpop.permute.xlu0 %3422
        %3426 = vset.pattern.permute.xlu0 0
        %3427 = vperm.xlu0 %3426, %v3385
        %v3428 = vpop.permute.xlu0 %3427
        %3431 = vset.pattern.permute.xlu0 0
        %3432 = vperm.xlu0 %3431, %v3386
        %v3433 = vpop.permute.xlu0 %3432
        %3436 = vset.pattern.permute.xlu0 0
        %3437 = vperm.xlu0 %3436, %v3387
        %v3438 = vpop.permute.xlu0 %3437
        %3441 = vset.pattern.permute.xlu0 0
        %3442 = vperm.xlu0 %3441, %v3388
        %v3443 = vpop.permute.xlu0 %3442
        %3446 = vset.pattern.permute.xlu0 0
        %3447 = vperm.xlu0 %3446, %v3389
        %v3448 = vpop.permute.xlu0 %3447
        %v3462 = vunpack.c.l.b16 %v3366
        %v3463 = vunpack.c.l.b16 %v3367
        %v3464 = vunpack.c.l.b16 %v3368
        %v3465 = vunpack.c.l.b16 %v3369
        %v3466 = vunpack.c.l.b16 %v3370
        %v3467 = vunpack.c.l.b16 %v3371
        %v3468 = vunpack.c.l.b16 %v3372
        %v3469 = vunpack.c.l.b16 %v3373
        %v3470 = vunpack.c.l.b16 %v3374
        %v3471 = vunpack.c.l.b16 %v3375
        %v3472 = vunpack.c.l.b16 %v3376
        %v3473 = vunpack.c.l.b16 %v3377
        %v3474 = vpack.c.b16 %v3463, %v3462
        %v3475 = vpack.c.b16 %v3465, %v3464
        %v3476 = vpack.c.b16 %v3467, %v3466
        %v3477 = vpack.c.b16 %v3469, %v3468
        %v3478 = vpack.c.b16 %v3471, %v3470
        %v3479 = vpack.c.b16 %v3473, %v3472
        %vm3480 = vcmask 785408
        %v3482 = vsel %vm3480, %v3474, 0
        %v3485 = vsel %vm3480, %v3475, 0
        %v3488 = vsel %vm3480, %v3476, 0
        %v3491 = vsel %vm3480, %v3477, 0
        %v3494 = vsel %vm3480, %v3478, 0
        %v3497 = vsel %vm3480, %v3479, 0
        %3499 = vmatprep.subr.bf16.mxu0 %v3271
        %3500 = vmatpush1.bf16.msra.mxu0 %v3270
        %3501 = vmatprep.subr.bf16.mxu0 %v3287
        %3502 = vmatpush1.bf16.msra.mxu0 %v3286
        %3503 = vmatprep.subr.bf16.mxu0 %v3303
        %3504 = vmatpush1.bf16.msra.mxu0 %v3302
        %3505 = vmatprep.subr.bf16.mxu0 %v3319
        %3506 = vmatpush1.bf16.msra.mxu0 %v3318
        %3507 = vmatprep.subr.bf16.mxu0 %v3335
        %3508 = vmatpush1.bf16.msra.mxu0 %v3334
        %3509 = vmatprep.subr.bf16.mxu0 %v3351
        %3510 = vmatpush1.bf16.msra.mxu0 %v3350
        %3511 = vmatprep.subr.bf16.mxu0 0
        %3512 = vmatpush1.bf16.msra.mxu0 0
        %3513 = vmatprep.subr.bf16.mxu0 0
        %3514 = vmatpush1.bf16.msra.mxu0 0
        %3515 = vmatprep.subr.bf16.mxu0 0
        %3516 = vmatpush1.bf16.msra.mxu0 0
        %3517 = vmatprep.subr.bf16.mxu0 0
        %3518 = vmatpush1.bf16.msra.mxu0 0
        %3519 = vmatprep.subr.bf16.mxu0 0
        %3520 = vmatpush1.bf16.msra.mxu0 0
        %3521 = vmatprep.subr.bf16.mxu0 0
        %3522 = vmatpush1.bf16.msra.mxu0 0
        %3523 = vmatprep.subr.bf16.mxu0 0
        %3524 = vmatpush1.bf16.msra.mxu0 0
        %3525 = vmatprep.subr.bf16.mxu0 0
        %3526 = vmatpush1.bf16.msra.mxu0 0
        %3527 = vmatprep.subr.bf16.mxu0 0
        %3528 = vmatpush1.bf16.msra.mxu0 0
        %3529 = vmatprep.subr.bf16.mxu0 0
        %3530 = vmatpush1.bf16.msra.mxu0 0
        %3531 = vmatprep.mubr.bf16.mxu0 0
        %3532 = vmatmul.mubr.bf16.gmra.mrb[0].mxu0 %v3482
        %v3533 = vpop.f32.mrb[0].mxu0
        %v3534 = vadd.f32 %v3393, %v3533
        %v3535 = vpop.f32.mrb[0].mxu0
        %v3536 = vadd.f32 %v3393, %v3535
        %v3537 = vpop.f32.mrb[0].mxu0
        %v3538 = vadd.f32 %v3398, %v3537
        %v3539 = vpop.f32.mrb[0].mxu0
        %v3540 = vadd.f32 %v3398, %v3539
        %3541 = vmatprep.mubr.bf16.mxu0 0
        %3542 = vmatmul.mubr.bf16.gmra.mrb[0].mxu0 %v3485
        %v3543 = vpop.f32.mrb[0].mxu0
        %v3544 = vadd.f32 %v3403, %v3543
        %v3545 = vpop.f32.mrb[0].mxu0
        %v3546 = vadd.f32 %v3403, %v3545
        %v3547 = vpop.f32.mrb[0].mxu0
        %v3548 = vadd.f32 %v3408, %v3547
        %v3549 = vpop.f32.mrb[0].mxu0
        %v3550 = vadd.f32 %v3408, %v3549
        %3551 = vmatprep.mubr.bf16.mxu0 0
        %3552 = vmatmul.mubr.bf16.gmra.mrb[0].mxu0 %v3488
        %v3553 = vpop.f32.mrb[0].mxu0
        %v3554 = vadd.f32 %v3413, %v3553
        %v3555 = vpop.f32.mrb[0].mxu0
        %v3556 = vadd.f32 %v3413, %v3555
        %v3557 = vpop.f32.mrb[0].mxu0
        %v3558 = vadd.f32 %v3418, %v3557
        %v3559 = vpop.f32.mrb[0].mxu0
        %v3560 = vadd.f32 %v3418, %v3559
        %3561 = vmatprep.mubr.bf16.mxu0 0
        %3562 = vmatmul.mubr.bf16.gmra.mrb[0].mxu0 %v3491
        %v3563 = vpop.f32.mrb[0].mxu0
        %v3564 = vadd.f32 %v3423, %v3563
        %v3565 = vpop.f32.mrb[0].mxu0
        %v3566 = vadd.f32 %v3423, %v3565
        %v3567 = vpop.f32.mrb[0].mxu0
        %v3568 = vadd.f32 %v3428, %v3567
        %v3569 = vpop.f32.mrb[0].mxu0
        %v3570 = vadd.f32 %v3428, %v3569
        %3571 = vmatprep.mubr.bf16.mxu0 0
        %3572 = vmatmul.mubr.bf16.gmra.mrb[0].mxu0 %v3494
        %v3573 = vpop.f32.mrb[0].mxu0
        %v3574 = vadd.f32 %v3433, %v3573
        %v3575 = vpop.f32.mrb[0].mxu0
        %v3576 = vadd.f32 %v3433, %v3575
        %v3577 = vpop.f32.mrb[0].mxu0
        %v3578 = vadd.f32 %v3438, %v3577
        %v3579 = vpop.f32.mrb[0].mxu0
        %v3580 = vadd.f32 %v3438, %v3579
        %3581 = vmatprep.mubr.bf16.mxu0 0
        %3582 = vmatmul.mubr.bf16.gmra.mrb[0].mxu0 %v3497
        %v3583 = vpop.f32.mrb[0].mxu0
        %v3584 = vadd.f32 %v3443, %v3583
        %v3585 = vpop.f32.mrb[0].mxu0
        %v3586 = vadd.f32 %v3443, %v3585
        %v3587 = vpop.f32.mrb[0].mxu0
        %v3588 = vadd.f32 %v3448, %v3587
        %v3589 = vpop.f32.mrb[0].mxu0
        %v3590 = vadd.f32 %v3448, %v3589
        %3591 = vdwg.mxu0
        %3592 = vmatprep.subr.bf16.mxu0 %v3273
        %3593 = vmatpush1.bf16.msra.mxu0 %v3272
        %3594 = vmatprep.subr.bf16.mxu0 %v3289
        %3595 = vmatpush1.bf16.msra.mxu0 %v3288
        %3596 = vmatprep.subr.bf16.mxu0 %v3305
        %3597 = vmatpush1.bf16.msra.mxu0 %v3304
        %3598 = vmatprep.subr.bf16.mxu0 %v3321
        %3599 = vmatpush1.bf16.msra.mxu0 %v3320
        %3600 = vmatprep.subr.bf16.mxu0 %v3337
        %3601 = vmatpush1.bf16.msra.mxu0 %v3336
        %3602 = vmatprep.subr.bf16.mxu0 %v3353
        %3603 = vmatpush1.bf16.msra.mxu0 %v3352
        %3604 = vmatprep.subr.bf16.mxu0 0
        %3605 = vmatpush1.bf16.msra.mxu0 0
        %3606 = vmatprep.subr.bf16.mxu0 0
        %3607 = vmatpush1.bf16.msra.mxu0 0
        %3608 = vmatprep.subr.bf16.mxu0 0
        %3609 = vmatpush1.bf16.msra.mxu0 0
        %3610 = vmatprep.subr.bf16.mxu0 0
        %3611 = vmatpush1.bf16.msra.mxu0 0
        %3612 = vmatprep.subr.bf16.mxu0 0
        %3613 = vmatpush1.bf16.msra.mxu0 0
        %3614 = vmatprep.subr.bf16.mxu0 0
        %3615 = vmatpush1.bf16.msra.mxu0 0
        %3616 = vmatprep.subr.bf16.mxu0 0
        %3617 = vmatpush1.bf16.msra.mxu0 0
        %3618 = vmatprep.subr.bf16.mxu0 0
        %3619 = vmatpush1.bf16.msra.mxu0 0
        %3620 = vmatprep.subr.bf16.mxu0 0
        %3621 = vmatpush1.bf16.msra.mxu0 0
        %3622 = vmatprep.subr.bf16.mxu0 0
        %3623 = vmatpush1.bf16.msra.mxu0 0
        %3624 = vmatprep.mubr.bf16.mxu0 0
        %3625 = vmatmul.mubr.bf16.gmra.mrb[0].mxu0 %v3482
        %v3626 = vpop.f32.mrb[0].mxu0
        %v3627 = vadd.f32 %v3393, %v3626
        %v3628 = vpop.f32.mrb[0].mxu0
        %v3629 = vadd.f32 %v3393, %v3628
        %v3630 = vpop.f32.mrb[0].mxu0
        %v3631 = vadd.f32 %v3398, %v3630
        %v3632 = vpop.f32.mrb[0].mxu0
        %v3633 = vadd.f32 %v3398, %v3632
        %3634 = vmatprep.mubr.bf16.mxu0 0
        %3635 = vmatmul.mubr.bf16.gmra.mrb[0].mxu0 %v3485
        %v3636 = vpop.f32.mrb[0].mxu0
        %v3637 = vadd.f32 %v3403, %v3636
        %v3638 = vpop.f32.mrb[0].mxu0
        %v3639 = vadd.f32 %v3403, %v3638
        %v3640 = vpop.f32.mrb[0].mxu0
        %v3641 = vadd.f32 %v3408, %v3640
        %v3642 = vpop.f32.mrb[0].mxu0
        %v3643 = vadd.f32 %v3408, %v3642
        %3644 = vmatprep.mubr.bf16.mxu0 0
        %3645 = vmatmul.mubr.bf16.gmra.mrb[0].mxu0 %v3488
        %v3646 = vpop.f32.mrb[0].mxu0
        %v3647 = vadd.f32 %v3413, %v3646
        %v3648 = vpop.f32.mrb[0].mxu0
        %v3649 = vadd.f32 %v3413, %v3648
        %v3650 = vpop.f32.mrb[0].mxu0
        %v3651 = vadd.f32 %v3418, %v3650
        %v3652 = vpop.f32.mrb[0].mxu0
        %v3653 = vadd.f32 %v3418, %v3652
        %3654 = vmatprep.mubr.bf16.mxu0 0
        %3655 = vmatmul.mubr.bf16.gmra.mrb[0].mxu0 %v3491
        %v3656 = vpop.f32.mrb[0].mxu0
        %v3657 = vadd.f32 %v3423, %v3656
        %v3658 = vpop.f32.mrb[0].mxu0
        %v3659 = vadd.f32 %v3423, %v3658
        %v3660 = vpop.f32.mrb[0].mxu0
        %v3661 = vadd.f32 %v3428, %v3660
        %v3662 = vpop.f32.mrb[0].mxu0
        %v3663 = vadd.f32 %v3428, %v3662
        %3664 = vmatprep.mubr.bf16.mxu0 0
        %3665 = vmatmul.mubr.bf16.gmra.mrb[0].mxu0 %v3494
        %v3666 = vpop.f32.mrb[0].mxu0
        %v3667 = vadd.f32 %v3433, %v3666
        %v3668 = vpop.f32.mrb[0].mxu0
        %v3669 = vadd.f32 %v3433, %v3668
        %v3670 = vpop.f32.mrb[0].mxu0
        %v3671 = vadd.f32 %v3438, %v3670
        %v3672 = vpop.f32.mrb[0].mxu0
        %v3673 = vadd.f32 %v3438, %v3672
        %3674 = vmatprep.mubr.bf16.mxu0 0
        %3675 = vmatmul.mubr.bf16.gmra.mrb[0].mxu0 %v3497
        %v3676 = vpop.f32.mrb[0].mxu0
        %v3677 = vadd.f32 %v3443, %v3676
        %v3678 = vpop.f32.mrb[0].mxu0
        %v3679 = vadd.f32 %v3443, %v3678
        %v3680 = vpop.f32.mrb[0].mxu0
        %v3681 = vadd.f32 %v3448, %v3680
        %v3682 = vpop.f32.mrb[0].mxu0
        %v3683 = vadd.f32 %v3448, %v3682
        %3684 = vdwg.mxu0
        %3685 = vmatprep.subr.bf16.mxu0 %v3275
        %3686 = vmatpush1.bf16.msra.mxu0 %v3274
        %3687 = vmatprep.subr.bf16.mxu0 %v3291
        %3688 = vmatpush1.bf16.msra.mxu0 %v3290
        %3689 = vmatprep.subr.bf16.mxu0 %v3307
        %3690 = vmatpush1.bf16.msra.mxu0 %v3306
        %3691 = vmatprep.subr.bf16.mxu0 %v3323
        %3692 = vmatpush1.bf16.msra.mxu0 %v3322
        %3693 = vmatprep.subr.bf16.mxu0 %v3339
        %3694 = vmatpush1.bf16.msra.mxu0 %v3338
        %3695 = vmatprep.subr.bf16.mxu0 %v3355
        %3696 = vmatpush1.bf16.msra.mxu0 %v3354
        %3697 = vmatprep.subr.bf16.mxu0 0
        %3698 = vmatpush1.bf16.msra.mxu0 0
        %3699 = vmatprep.subr.bf16.mxu0 0
        %3700 = vmatpush1.bf16.msra.mxu0 0
        %3701 = vmatprep.subr.bf16.mxu0 0
        %3702 = vmatpush1.bf16.msra.mxu0 0
        %3703 = vmatprep.subr.bf16.mxu0 0
        %3704 = vmatpush1.bf16.msra.mxu0 0
        %3705 = vmatprep.subr.bf16.mxu0 0
        %3706 = vmatpush1.bf16.msra.mxu0 0
        %3707 = vmatprep.subr.bf16.mxu0 0
        %3708 = vmatpush1.bf16.msra.mxu0 0
        %3709 = vmatprep.subr.bf16.mxu0 0
        %3710 = vmatpush1.bf16.msra.mxu0 0
        %3711 = vmatprep.subr.bf16.mxu0 0
        %3712 = vmatpush1.bf16.msra.mxu0 0
        %3713 = vmatprep.subr.bf16.mxu0 0
        %3714 = vmatpush1.bf16.msra.mxu0 0
        %3715 = vmatprep.subr.bf16.mxu0 0
        %3716 = vmatpush1.bf16.msra.mxu0 0
        %3717 = vmatprep.mubr.bf16.mxu0 0
        %3718 = vmatmul.mubr.bf16.gmra.mrb[0].mxu0 %v3482
        %v3719 = vpop.f32.mrb[0].mxu0
        %v3720 = vadd.f32 %v3393, %v3719
        %v3721 = vpop.f32.mrb[0].mxu0
        %v3722 = vadd.f32 %v3393, %v3721
        %v3723 = vpop.f32.mrb[0].mxu0
        %v3724 = vadd.f32 %v3398, %v3723
        %v3725 = vpop.f32.mrb[0].mxu0
        %v3726 = vadd.f32 %v3398, %v3725
        %3727 = vmatprep.mubr.bf16.mxu0 0
        %3728 = vmatmul.mubr.bf16.gmra.mrb[0].mxu0 %v3485
        %v3729 = vpop.f32.mrb[0].mxu0
        %v3730 = vadd.f32 %v3403, %v3729
        %v3731 = vpop.f32.mrb[0].mxu0
        %v3732 = vadd.f32 %v3403, %v3731
        %v3733 = vpop.f32.mrb[0].mxu0
        %v3734 = vadd.f32 %v3408, %v3733
        %v3735 = vpop.f32.mrb[0].mxu0
        %v3736 = vadd.f32 %v3408, %v3735
        %3737 = vmatprep.mubr.bf16.mxu0 0
        %3738 = vmatmul.mubr.bf16.gmra.mrb[0].mxu0 %v3488
        %v3739 = vpop.f32.mrb[0].mxu0
        %v3740 = vadd.f32 %v3413, %v3739
        %v3741 = vpop.f32.mrb[0].mxu0
        %v3742 = vadd.f32 %v3413, %v3741
        %v3743 = vpop.f32.mrb[0].mxu0
        %v3744 = vadd.f32 %v3418, %v3743
        %v3745 = vpop.f32.mrb[0].mxu0
        %v3746 = vadd.f32 %v3418, %v3745
        %3747 = vmatprep.mubr.bf16.mxu0 0
        %3748 = vmatmul.mubr.bf16.gmra.mrb[0].mxu0 %v3491
        %v3749 = vpop.f32.mrb[0].mxu0
        %v3750 = vadd.f32 %v3423, %v3749
        %v3751 = vpop.f32.mrb[0].mxu0
        %v3752 = vadd.f32 %v3423, %v3751
        %v3753 = vpop.f32.mrb[0].mxu0
        %v3754 = vadd.f32 %v3428, %v3753
        %v3755 = vpop.f32.mrb[0].mxu0
        %v3756 = vadd.f32 %v3428, %v3755
        %3757 = vmatprep.mubr.bf16.mxu0 0
        %3758 = vmatmul.mubr.bf16.gmra.mrb[0].mxu0 %v3494
        %v3759 = vpop.f32.mrb[0].mxu0
        %v3760 = vadd.f32 %v3433, %v3759
        %v3761 = vpop.f32.mrb[0].mxu0
        %v3762 = vadd.f32 %v3433, %v3761
        %v3763 = vpop.f32.mrb[0].mxu0
        %v3764 = vadd.f32 %v3438, %v3763
        %v3765 = vpop.f32.mrb[0].mxu0
        %v3766 = vadd.f32 %v3438, %v3765
        %3767 = vmatprep.mubr.bf16.mxu0 0
        %3768 = vmatmul.mubr.bf16.gmra.mrb[0].mxu0 %v3497
        %v3769 = vpop.f32.mrb[0].mxu0
        %v3770 = vadd.f32 %v3443, %v3769
        %v3771 = vpop.f32.mrb[0].mxu0
        %v3772 = vadd.f32 %v3443, %v3771
        %v3773 = vpop.f32.mrb[0].mxu0
        %v3774 = vadd.f32 %v3448, %v3773
        %v3775 = vpop.f32.mrb[0].mxu0
        %v3776 = vadd.f32 %v3448, %v3775
        %3777 = vdwg.mxu0
        %3778 = vmatprep.subr.bf16.mxu0 %v3277
        %3779 = vmatpush1.bf16.msra.mxu0 %v3276
        %3780 = vmatprep.subr.bf16.mxu0 %v3293
        %3781 = vmatpush1.bf16.msra.mxu0 %v3292
        %3782 = vmatprep.subr.bf16.mxu0 %v3309
        %3783 = vmatpush1.bf16.msra.mxu0 %v3308
        %3784 = vmatprep.subr.bf16.mxu0 %v3325
        %3785 = vmatpush1.bf16.msra.mxu0 %v3324
        %3786 = vmatprep.subr.bf16.mxu0 %v3341
        %3787 = vmatpush1.bf16.msra.mxu0 %v3340
        %3788 = vmatprep.subr.bf16.mxu0 %v3357
        %3789 = vmatpush1.bf16.msra.mxu0 %v3356
        %3790 = vmatprep.subr.bf16.mxu0 0
        %3791 = vmatpush1.bf16.msra.mxu0 0
        %3792 = vmatprep.subr.bf16.mxu0 0
        %3793 = vmatpush1.bf16.msra.mxu0 0
        %3794 = vmatprep.subr.bf16.mxu0 0
        %3795 = vmatpush1.bf16.msra.mxu0 0
        %3796 = vmatprep.subr.bf16.mxu0 0
        %3797 = vmatpush1.bf16.msra.mxu0 0
        %3798 = vmatprep.subr.bf16.mxu0 0
        %3799 = vmatpush1.bf16.msra.mxu0 0
        %3800 = vmatprep.subr.bf16.mxu0 0
        %3801 = vmatpush1.bf16.msra.mxu0 0
        %3802 = vmatprep.subr.bf16.mxu0 0
        %3803 = vmatpush1.bf16.msra.mxu0 0
        %3804 = vmatprep.subr.bf16.mxu0 0
        %3805 = vmatpush1.bf16.msra.mxu0 0
        %3806 = vmatprep.subr.bf16.mxu0 0
        %3807 = vmatpush1.bf16.msra.mxu0 0
        %3808 = vmatprep.subr.bf16.mxu0 0
        %3809 = vmatpush1.bf16.msra.mxu0 0
        %3810 = vmatprep.mubr.bf16.mxu0 0
        %3811 = vmatmul.mubr.bf16.gmra.mrb[0].mxu0 %v3482
        %v3812 = vpop.f32.mrb[0].mxu0
        %v3813 = vadd.f32 %v3393, %v3812
        %v3814 = vpop.f32.mrb[0].mxu0
        %v3815 = vadd.f32 %v3393, %v3814
        %v3816 = vpop.f32.mrb[0].mxu0
        %v3817 = vadd.f32 %v3398, %v3816
        %v3818 = vpop.f32.mrb[0].mxu0
        %v3819 = vadd.f32 %v3398, %v3818
        %3820 = vmatprep.mubr.bf16.mxu0 0
        %3821 = vmatmul.mubr.bf16.gmra.mrb[0].mxu0 %v3485
        %v3822 = vpop.f32.mrb[0].mxu0
        %v3823 = vadd.f32 %v3403, %v3822
        %v3824 = vpop.f32.mrb[0].mxu0
        %v3825 = vadd.f32 %v3403, %v3824
        %v3826 = vpop.f32.mrb[0].mxu0
        %v3827 = vadd.f32 %v3408, %v3826
        %v3828 = vpop.f32.mrb[0].mxu0
        %v3829 = vadd.f32 %v3408, %v3828
        %3830 = vmatprep.mubr.bf16.mxu0 0
        %3831 = vmatmul.mubr.bf16.gmra.mrb[0].mxu0 %v3488
        %v3832 = vpop.f32.mrb[0].mxu0
        %v3833 = vadd.f32 %v3413, %v3832
        %v3834 = vpop.f32.mrb[0].mxu0
        %v3835 = vadd.f32 %v3413, %v3834
        %v3836 = vpop.f32.mrb[0].mxu0
        %v3837 = vadd.f32 %v3418, %v3836
        %v3838 = vpop.f32.mrb[0].mxu0
        %v3839 = vadd.f32 %v3418, %v3838
        %3840 = vmatprep.mubr.bf16.mxu0 0
        %3841 = vmatmul.mubr.bf16.gmra.mrb[0].mxu0 %v3491
        %v3842 = vpop.f32.mrb[0].mxu0
        %v3843 = vadd.f32 %v3423, %v3842
        %v3844 = vpop.f32.mrb[0].mxu0
        %v3845 = vadd.f32 %v3423, %v3844
        %v3846 = vpop.f32.mrb[0].mxu0
        %v3847 = vadd.f32 %v3428, %v3846
        %v3848 = vpop.f32.mrb[0].mxu0
        %v3849 = vadd.f32 %v3428, %v3848
        %3850 = vmatprep.mubr.bf16.mxu0 0
        %3851 = vmatmul.mubr.bf16.gmra.mrb[0].mxu0 %v3494
        %v3852 = vpop.f32.mrb[0].mxu0
        %v3853 = vadd.f32 %v3433, %v3852
        %v3854 = vpop.f32.mrb[0].mxu0
        %v3855 = vadd.f32 %v3433, %v3854
        %v3856 = vpop.f32.mrb[0].mxu0
        %v3857 = vadd.f32 %v3438, %v3856
        %v3858 = vpop.f32.mrb[0].mxu0
        %v3859 = vadd.f32 %v3438, %v3858
        %3860 = vmatprep.mubr.bf16.mxu0 0
        %3861 = vmatmul.mubr.bf16.gmra.mrb[0].mxu0 %v3497
        %v3862 = vpop.f32.mrb[0].mxu0
        %v3863 = vadd.f32 %v3443, %v3862
        %v3864 = vpop.f32.mrb[0].mxu0
        %v3865 = vadd.f32 %v3443, %v3864
        %v3866 = vpop.f32.mrb[0].mxu0
        %v3867 = vadd.f32 %v3448, %v3866
        %v3868 = vpop.f32.mrb[0].mxu0
        %v3869 = vadd.f32 %v3448, %v3868
        %3870 = vdwg.mxu0
        %3871 = vmatprep.subr.bf16.mxu0 %v3279
        %3872 = vmatpush1.bf16.msra.mxu0 %v3278
        %3873 = vmatprep.subr.bf16.mxu0 %v3295
        %3874 = vmatpush1.bf16.msra.mxu0 %v3294
        %3875 = vmatprep.subr.bf16.mxu0 %v3311
        %3876 = vmatpush1.bf16.msra.mxu0 %v3310
        %3877 = vmatprep.subr.bf16.mxu0 %v3327
        %3878 = vmatpush1.bf16.msra.mxu0 %v3326
        %3879 = vmatprep.subr.bf16.mxu0 %v3343
        %3880 = vmatpush1.bf16.msra.mxu0 %v3342
        %3881 = vmatprep.subr.bf16.mxu0 %v3359
        %3882 = vmatpush1.bf16.msra.mxu0 %v3358
        %3883 = vmatprep.subr.bf16.mxu0 0
        %3884 = vmatpush1.bf16.msra.mxu0 0
        %3885 = vmatprep.subr.bf16.mxu0 0
        %3886 = vmatpush1.bf16.msra.mxu0 0
        %3887 = vmatprep.subr.bf16.mxu0 0
        %3888 = vmatpush1.bf16.msra.mxu0 0
        %3889 = vmatprep.subr.bf16.mxu0 0
        %3890 = vmatpush1.bf16.msra.mxu0 0
        %3891 = vmatprep.subr.bf16.mxu0 0
        %3892 = vmatpush1.bf16.msra.mxu0 0
        %3893 = vmatprep.subr.bf16.mxu0 0
        %3894 = vmatpush1.bf16.msra.mxu0 0
        %3895 = vmatprep.subr.bf16.mxu0 0
        %3896 = vmatpush1.bf16.msra.mxu0 0
        %3897 = vmatprep.subr.bf16.mxu0 0
        %3898 = vmatpush1.bf16.msra.mxu0 0
        %3899 = vmatprep.subr.bf16.mxu0 0
        %3900 = vmatpush1.bf16.msra.mxu0 0
        %3901 = vmatprep.subr.bf16.mxu0 0
        %3902 = vmatpush1.bf16.msra.mxu0 0
        %3903 = vmatprep.mubr.bf16.mxu0 0
        %3904 = vmatmul.mubr.bf16.gmra.mrb[0].mxu0 %v3482
        %v3905 = vpop.f32.mrb[0].mxu0
        %v3906 = vadd.f32 %v3393, %v3905
        %v3907 = vpop.f32.mrb[0].mxu0
        %v3908 = vadd.f32 %v3393, %v3907
        %v3909 = vpop.f32.mrb[0].mxu0
        %v3910 = vadd.f32 %v3398, %v3909
        %v3911 = vpop.f32.mrb[0].mxu0
        %v3912 = vadd.f32 %v3398, %v3911
        %3913 = vmatprep.mubr.bf16.mxu0 0
        %3914 = vmatmul.mubr.bf16.gmra.mrb[0].mxu0 %v3485
        %v3915 = vpop.f32.mrb[0].mxu0
        %v3916 = vadd.f32 %v3403, %v3915
        %v3917 = vpop.f32.mrb[0].mxu0
        %v3918 = vadd.f32 %v3403, %v3917
        %v3919 = vpop.f32.mrb[0].mxu0
        %v3920 = vadd.f32 %v3408, %v3919
        %v3921 = vpop.f32.mrb[0].mxu0
        %v3922 = vadd.f32 %v3408, %v3921
        %3923 = vmatprep.mubr.bf16.mxu0 0
        %3924 = vmatmul.mubr.bf16.gmra.mrb[0].mxu0 %v3488
        %v3925 = vpop.f32.mrb[0].mxu0
        %v3926 = vadd.f32 %v3413, %v3925
        %v3927 = vpop.f32.mrb[0].mxu0
        %v3928 = vadd.f32 %v3413, %v3927
        %v3929 = vpop.f32.mrb[0].mxu0
        %v3930 = vadd.f32 %v3418, %v3929
        %v3931 = vpop.f32.mrb[0].mxu0
        %v3932 = vadd.f32 %v3418, %v3931
        %3933 = vmatprep.mubr.bf16.mxu0 0
        %3934 = vmatmul.mubr.bf16.gmra.mrb[0].mxu0 %v3491
        %v3935 = vpop.f32.mrb[0].mxu0
        %v3936 = vadd.f32 %v3423, %v3935
        %v3937 = vpop.f32.mrb[0].mxu0
        %v3938 = vadd.f32 %v3423, %v3937
        %v3939 = vpop.f32.mrb[0].mxu0
        %v3940 = vadd.f32 %v3428, %v3939
        %v3941 = vpop.f32.mrb[0].mxu0
        %v3942 = vadd.f32 %v3428, %v3941
        %3943 = vmatprep.mubr.bf16.mxu0 0
        %3944 = vmatmul.mubr.bf16.gmra.mrb[0].mxu0 %v3494
        %v3945 = vpop.f32.mrb[0].mxu0
        %v3946 = vadd.f32 %v3433, %v3945
        %v3947 = vpop.f32.mrb[0].mxu0
        %v3948 = vadd.f32 %v3433, %v3947
        %v3949 = vpop.f32.mrb[0].mxu0
        %v3950 = vadd.f32 %v3438, %v3949
        %v3951 = vpop.f32.mrb[0].mxu0
        %v3952 = vadd.f32 %v3438, %v3951
        %3953 = vmatprep.mubr.bf16.mxu0 0
        %3954 = vmatmul.mubr.bf16.gmra.mrb[0].mxu0 %v3497
        %v3955 = vpop.f32.mrb[0].mxu0
        %v3956 = vadd.f32 %v3443, %v3955
        %v3957 = vpop.f32.mrb[0].mxu0
        %v3958 = vadd.f32 %v3443, %v3957
        %v3959 = vpop.f32.mrb[0].mxu0
        %v3960 = vadd.f32 %v3448, %v3959
        %v3961 = vpop.f32.mrb[0].mxu0
        %v3962 = vadd.f32 %v3448, %v3961
        %3963 = vdwg.mxu0
        %3964 = vmatprep.subr.bf16.mxu0 %v3281
        %3965 = vmatpush1.bf16.msra.mxu0 %v3280
        %3966 = vmatprep.subr.bf16.mxu0 %v3297
        %3967 = vmatpush1.bf16.msra.mxu0 %v3296
        %3968 = vmatprep.subr.bf16.mxu0 %v3313
        %3969 = vmatpush1.bf16.msra.mxu0 %v3312
        %3970 = vmatprep.subr.bf16.mxu0 %v3329
        %3971 = vmatpush1.bf16.msra.mxu0 %v3328
        %3972 = vmatprep.subr.bf16.mxu0 %v3345
        %3973 = vmatpush1.bf16.msra.mxu0 %v3344
        %3974 = vmatprep.subr.bf16.mxu0 %v3361
        %3975 = vmatpush1.bf16.msra.mxu0 %v3360
        %3976 = vmatprep.subr.bf16.mxu0 0
        %3977 = vmatpush1.bf16.msra.mxu0 0
        %3978 = vmatprep.subr.bf16.mxu0 0
        %3979 = vmatpush1.bf16.msra.mxu0 0
        %3980 = vmatprep.subr.bf16.mxu0 0
        %3981 = vmatpush1.bf16.msra.mxu0 0
        %3982 = vmatprep.subr.bf16.mxu0 0
        %3983 = vmatpush1.bf16.msra.mxu0 0
        %3984 = vmatprep.subr.bf16.mxu0 0
        %3985 = vmatpush1.bf16.msra.mxu0 0
        %3986 = vmatprep.subr.bf16.mxu0 0
        %3987 = vmatpush1.bf16.msra.mxu0 0
        %3988 = vmatprep.subr.bf16.mxu0 0
        %3989 = vmatpush1.bf16.msra.mxu0 0
        %3990 = vmatprep.subr.bf16.mxu0 0
        %3991 = vmatpush1.bf16.msra.mxu0 0
        %3992 = vmatprep.subr.bf16.mxu0 0
        %3993 = vmatpush1.bf16.msra.mxu0 0
        %3994 = vmatprep.subr.bf16.mxu0 0
        %3995 = vmatpush1.bf16.msra.mxu0 0
        %3996 = vmatprep.mubr.bf16.mxu0 0
        %3997 = vmatmul.mubr.bf16.gmra.mrb[0].mxu0 %v3482
        %v3998 = vpop.f32.mrb[0].mxu0
        %v3999 = vadd.f32 %v3393, %v3998
        %v4000 = vpop.f32.mrb[0].mxu0
        %v4001 = vadd.f32 %v3393, %v4000
        %v4002 = vpop.f32.mrb[0].mxu0
        %v4003 = vadd.f32 %v3398, %v4002
        %v4004 = vpop.f32.mrb[0].mxu0
        %v4005 = vadd.f32 %v3398, %v4004
        %4006 = vmatprep.mubr.bf16.mxu0 0
        %4007 = vmatmul.mubr.bf16.gmra.mrb[0].mxu0 %v3485
        %v4008 = vpop.f32.mrb[0].mxu0
        %v4009 = vadd.f32 %v3403, %v4008
        %v4010 = vpop.f32.mrb[0].mxu0
        %v4011 = vadd.f32 %v3403, %v4010
        %v4012 = vpop.f32.mrb[0].mxu0
        %v4013 = vadd.f32 %v3408, %v4012
        %v4014 = vpop.f32.mrb[0].mxu0
        %v4015 = vadd.f32 %v3408, %v4014
        %4016 = vmatprep.mubr.bf16.mxu0 0
        %4017 = vmatmul.mubr.bf16.gmra.mrb[0].mxu0 %v3488
        %v4018 = vpop.f32.mrb[0].mxu0
        %v4019 = vadd.f32 %v3413, %v4018
        %v4020 = vpop.f32.mrb[0].mxu0
        %v4021 = vadd.f32 %v3413, %v4020
        %v4022 = vpop.f32.mrb[0].mxu0
        %v4023 = vadd.f32 %v3418, %v4022
        %v4024 = vpop.f32.mrb[0].mxu0
        %v4025 = vadd.f32 %v3418, %v4024
        %4026 = vmatprep.mubr.bf16.mxu0 0
        %4027 = vmatmul.mubr.bf16.gmra.mrb[0].mxu0 %v3491
        %v4028 = vpop.f32.mrb[0].mxu0
        %v4029 = vadd.f32 %v3423, %v4028
        %v4030 = vpop.f32.mrb[0].mxu0
        %v4031 = vadd.f32 %v3423, %v4030
        %v4032 = vpop.f32.mrb[0].mxu0
        %v4033 = vadd.f32 %v3428, %v4032
        %v4034 = vpop.f32.mrb[0].mxu0
        %v4035 = vadd.f32 %v3428, %v4034
        %4036 = vmatprep.mubr.bf16.mxu0 0
        %4037 = vmatmul.mubr.bf16.gmra.mrb[0].mxu0 %v3494
        %v4038 = vpop.f32.mrb[0].mxu0
        %v4039 = vadd.f32 %v3433, %v4038
        %v4040 = vpop.f32.mrb[0].mxu0
        %v4041 = vadd.f32 %v3433, %v4040
        %v4042 = vpop.f32.mrb[0].mxu0
        %v4043 = vadd.f32 %v3438, %v4042
        %v4044 = vpop.f32.mrb[0].mxu0
        %v4045 = vadd.f32 %v3438, %v4044
        %4046 = vmatprep.mubr.bf16.mxu0 0
        %4047 = vmatmul.mubr.bf16.gmra.mrb[0].mxu0 %v3497
        %v4048 = vpop.f32.mrb[0].mxu0
        %v4049 = vadd.f32 %v3443, %v4048
        %v4050 = vpop.f32.mrb[0].mxu0
        %v4051 = vadd.f32 %v3443, %v4050
        %v4052 = vpop.f32.mrb[0].mxu0
        %v4053 = vadd.f32 %v3448, %v4052
        %v4054 = vpop.f32.mrb[0].mxu0
        %v4055 = vadd.f32 %v3448, %v4054
        %4056 = vdwg.mxu0
        %4057 = vmatprep.subr.bf16.mxu0 %v3283
        %4058 = vmatpush1.bf16.msra.mxu0 %v3282
        %4059 = vmatprep.subr.bf16.mxu0 %v3299
        %4060 = vmatpush1.bf16.msra.mxu0 %v3298
        %4061 = vmatprep.subr.bf16.mxu0 %v3315
        %4062 = vmatpush1.bf16.msra.mxu0 %v3314
        %4063 = vmatprep.subr.bf16.mxu0 %v3331
        %4064 = vmatpush1.bf16.msra.mxu0 %v3330
        %4065 = vmatprep.subr.bf16.mxu0 %v3347
        %4066 = vmatpush1.bf16.msra.mxu0 %v3346
        %4067 = vmatprep.subr.bf16.mxu0 %v3363
        %4068 = vmatpush1.bf16.msra.mxu0 %v3362
        %4069 = vmatprep.subr.bf16.mxu0 0
        %4070 = vmatpush1.bf16.msra.mxu0 0
        %4071 = vmatprep.subr.bf16.mxu0 0
        %4072 = vmatpush1.bf16.msra.mxu0 0
        %4073 = vmatprep.subr.bf16.mxu0 0
        %4074 = vmatpush1.bf16.msra.mxu0 0
        %4075 = vmatprep.subr.bf16.mxu0 0
        %4076 = vmatpush1.bf16.msra.mxu0 0
        %4077 = vmatprep.subr.bf16.mxu0 0
        %4078 = vmatpush1.bf16.msra.mxu0 0
        %4079 = vmatprep.subr.bf16.mxu0 0
        %4080 = vmatpush1.bf16.msra.mxu0 0
        %4081 = vmatprep.subr.bf16.mxu0 0
        %4082 = vmatpush1.bf16.msra.mxu0 0
        %4083 = vmatprep.subr.bf16.mxu0 0
        %4084 = vmatpush1.bf16.msra.mxu0 0
        %4085 = vmatprep.subr.bf16.mxu0 0
        %4086 = vmatpush1.bf16.msra.mxu0 0
        %4087 = vmatprep.subr.bf16.mxu0 0
        %4088 = vmatpush1.bf16.msra.mxu0 0
        %4089 = vmatprep.mubr.bf16.mxu0 0
        %4090 = vmatmul.mubr.bf16.gmra.mrb[0].mxu0 %v3482
        %v4091 = vpop.f32.mrb[0].mxu0
        %v4092 = vadd.f32 %v3393, %v4091
        %v4093 = vpop.f32.mrb[0].mxu0
        %v4094 = vadd.f32 %v3393, %v4093
        %v4095 = vpop.f32.mrb[0].mxu0
        %v4096 = vadd.f32 %v3398, %v4095
        %v4097 = vpop.f32.mrb[0].mxu0
        %v4098 = vadd.f32 %v3398, %v4097
        %4099 = vmatprep.mubr.bf16.mxu0 0
        %4100 = vmatmul.mubr.bf16.gmra.mrb[0].mxu0 %v3485
        %v4101 = vpop.f32.mrb[0].mxu0
        %v4102 = vadd.f32 %v3403, %v4101
        %v4103 = vpop.f32.mrb[0].mxu0
        %v4104 = vadd.f32 %v3403, %v4103
        %v4105 = vpop.f32.mrb[0].mxu0
        %v4106 = vadd.f32 %v3408, %v4105
        %v4107 = vpop.f32.mrb[0].mxu0
        %v4108 = vadd.f32 %v3408, %v4107
        %4109 = vmatprep.mubr.bf16.mxu0 0
        %4110 = vmatmul.mubr.bf16.gmra.mrb[0].mxu0 %v3488
        %v4111 = vpop.f32.mrb[0].mxu0
        %v4112 = vadd.f32 %v3413, %v4111
        %v4113 = vpop.f32.mrb[0].mxu0
        %v4114 = vadd.f32 %v3413, %v4113
        %v4115 = vpop.f32.mrb[0].mxu0
        %v4116 = vadd.f32 %v3418, %v4115
        %v4117 = vpop.f32.mrb[0].mxu0
        %v4118 = vadd.f32 %v3418, %v4117
        %4119 = vmatprep.mubr.bf16.mxu0 0
        %4120 = vmatmul.mubr.bf16.gmra.mrb[0].mxu0 %v3491
        %v4121 = vpop.f32.mrb[0].mxu0
        %v4122 = vadd.f32 %v3423, %v4121
        %v4123 = vpop.f32.mrb[0].mxu0
        %v4124 = vadd.f32 %v3423, %v4123
        %v4125 = vpop.f32.mrb[0].mxu0
        %v4126 = vadd.f32 %v3428, %v4125
        %v4127 = vpop.f32.mrb[0].mxu0
        %v4128 = vadd.f32 %v3428, %v4127
        %4129 = vmatprep.mubr.bf16.mxu0 0
        %4130 = vmatmul.mubr.bf16.gmra.mrb[0].mxu0 %v3494
        %v4131 = vpop.f32.mrb[0].mxu0
        %v4132 = vadd.f32 %v3433, %v4131
        %v4133 = vpop.f32.mrb[0].mxu0
        %v4134 = vadd.f32 %v3433, %v4133
        %v4135 = vpop.f32.mrb[0].mxu0
        %v4136 = vadd.f32 %v3438, %v4135
        %v4137 = vpop.f32.mrb[0].mxu0
        %v4138 = vadd.f32 %v3438, %v4137
        %4139 = vmatprep.mubr.bf16.mxu0 0
        %4140 = vmatmul.mubr.bf16.gmra.mrb[0].mxu0 %v3497
        %v4141 = vpop.f32.mrb[0].mxu0
        %v4142 = vadd.f32 %v3443, %v4141
        %v4143 = vpop.f32.mrb[0].mxu0
        %v4144 = vadd.f32 %v3443, %v4143
        %v4145 = vpop.f32.mrb[0].mxu0
        %v4146 = vadd.f32 %v3448, %v4145
        %v4147 = vpop.f32.mrb[0].mxu0
        %v4148 = vadd.f32 %v3448, %v4147
        %4149 = vdwg.mxu0
        %4150 = vmatprep.subr.bf16.mxu0 %v3285
        %4151 = vmatpush1.bf16.msra.mxu0 %v3284
        %4152 = vmatprep.subr.bf16.mxu0 %v3301
        %4153 = vmatpush1.bf16.msra.mxu0 %v3300
        %4154 = vmatprep.subr.bf16.mxu0 %v3317
        %4155 = vmatpush1.bf16.msra.mxu0 %v3316
        %4156 = vmatprep.subr.bf16.mxu0 %v3333
        %4157 = vmatpush1.bf16.msra.mxu0 %v3332
        %4158 = vmatprep.subr.bf16.mxu0 %v3349
        %4159 = vmatpush1.bf16.msra.mxu0 %v3348
        %4160 = vmatprep.subr.bf16.mxu0 %v3365
        %4161 = vmatpush1.bf16.msra.mxu0 %v3364
        %4162 = vmatprep.subr.bf16.mxu0 0
        %4163 = vmatpush1.bf16.msra.mxu0 0
        %4164 = vmatprep.subr.bf16.mxu0 0
        %4165 = vmatpush1.bf16.msra.mxu0 0
        %4166 = vmatprep.subr.bf16.mxu0 0
        %4167 = vmatpush1.bf16.msra.mxu0 0
        %4168 = vmatprep.subr.bf16.mxu0 0
        %4169 = vmatpush1.bf16.msra.mxu0 0
        %4170 = vmatprep.subr.bf16.mxu0 0
        %4171 = vmatpush1.bf16.msra.mxu0 0
        %4172 = vmatprep.subr.bf16.mxu0 0
        %4173 = vmatpush1.bf16.msra.mxu0 0
        %4174 = vmatprep.subr.bf16.mxu0 0
        %4175 = vmatpush1.bf16.msra.mxu0 0
        %4176 = vmatprep.subr.bf16.mxu0 0
        %4177 = vmatpush1.bf16.msra.mxu0 0
        %4178 = vmatprep.subr.bf16.mxu0 0
        %4179 = vmatpush1.bf16.msra.mxu0 0
        %4180 = vmatprep.subr.bf16.mxu0 0
        %4181 = vmatpush1.bf16.msra.mxu0 0
        %4182 = vmatprep.mubr.bf16.mxu0 0
        %4183 = vmatmul.mubr.bf16.gmra.mrb[0].mxu0 %v3482
        %v4184 = vpop.f32.mrb[0].mxu0
        %v4185 = vadd.f32 %v3393, %v4184
        %v4186 = vpop.f32.mrb[0].mxu0
        %v4187 = vadd.f32 %v3393, %v4186
        %v4188 = vpop.f32.mrb[0].mxu0
        %v4189 = vadd.f32 %v3398, %v4188
        %v4190 = vpop.f32.mrb[0].mxu0
        %v4191 = vadd.f32 %v3398, %v4190
        %4192 = vmatprep.mubr.bf16.mxu0 0
        %4193 = vmatmul.mubr.bf16.gmra.mrb[0].mxu0 %v3485
        %v4194 = vpop.f32.mrb[0].mxu0
        %v4195 = vadd.f32 %v3403, %v4194
        %v4196 = vpop.f32.mrb[0].mxu0
        %v4197 = vadd.f32 %v3403, %v4196
        %v4198 = vpop.f32.mrb[0].mxu0
        %v4199 = vadd.f32 %v3408, %v4198
        %v4200 = vpop.f32.mrb[0].mxu0
        %v4201 = vadd.f32 %v3408, %v4200
        %4202 = vmatprep.mubr.bf16.mxu0 0
        %4203 = vmatmul.mubr.bf16.gmra.mrb[0].mxu0 %v3488
        %v4204 = vpop.f32.mrb[0].mxu0
        %v4205 = vadd.f32 %v3413, %v4204
        %v4206 = vpop.f32.mrb[0].mxu0
        %v4207 = vadd.f32 %v3413, %v4206
        %v4208 = vpop.f32.mrb[0].mxu0
        %v4209 = vadd.f32 %v3418, %v4208
        %v4210 = vpop.f32.mrb[0].mxu0
        %v4211 = vadd.f32 %v3418, %v4210
        %4212 = vmatprep.mubr.bf16.mxu0 0
        %4213 = vmatmul.mubr.bf16.gmra.mrb[0].mxu0 %v3491
        %v4214 = vpop.f32.mrb[0].mxu0
        %v4215 = vadd.f32 %v3423, %v4214
        %v4216 = vpop.f32.mrb[0].mxu0
        %v4217 = vadd.f32 %v3423, %v4216
        %v4218 = vpop.f32.mrb[0].mxu0
        %v4219 = vadd.f32 %v3428, %v4218
        %v4220 = vpop.f32.mrb[0].mxu0
        %v4221 = vadd.f32 %v3428, %v4220
        %4222 = vmatprep.mubr.bf16.mxu0 0
        %4223 = vmatmul.mubr.bf16.gmra.mrb[0].mxu0 %v3494
        %v4224 = vpop.f32.mrb[0].mxu0
        %v4225 = vadd.f32 %v3433, %v4224
        %v4226 = vpop.f32.mrb[0].mxu0
        %v4227 = vadd.f32 %v3433, %v4226
        %v4228 = vpop.f32.mrb[0].mxu0
        %v4229 = vadd.f32 %v3438, %v4228
        %v4230 = vpop.f32.mrb[0].mxu0
        %v4231 = vadd.f32 %v3438, %v4230
        %4232 = vmatprep.mubr.bf16.mxu0 0
        %4233 = vmatmul.mubr.bf16.gmra.mrb[0].mxu0 %v3497
        %v4234 = vpop.f32.mrb[0].mxu0
        %v4235 = vadd.f32 %v3443, %v4234
        %v4236 = vpop.f32.mrb[0].mxu0
        %v4237 = vadd.f32 %v3443, %v4236
        %v4238 = vpop.f32.mrb[0].mxu0
        %v4239 = vadd.f32 %v3448, %v4238
        %v4240 = vpop.f32.mrb[0].mxu0
        %v4241 = vadd.f32 %v3448, %v4240
        %4242 = vdwg.mxu0
        %v4243 = vmax.f32 %v3534, 0.0
        %v4244 = vmax.f32 %v3536, 0.0
        %v4245 = vmax.f32 %v3627, 0.0
        %v4246 = vmax.f32 %v3629, 0.0
        %v4247 = vmax.f32 %v3720, 0.0
        %v4248 = vmax.f32 %v3722, 0.0
        %v4249 = vmax.f32 %v3813, 0.0
        %v4250 = vmax.f32 %v3815, 0.0
        %v4251 = vmax.f32 %v3906, 0.0
        %v4252 = vmax.f32 %v3908, 0.0
        %v4253 = vmax.f32 %v3999, 0.0
        %v4254 = vmax.f32 %v4001, 0.0
        %v4255 = vmax.f32 %v4092, 0.0
        %v4256 = vmax.f32 %v4094, 0.0
        %v4257 = vmax.f32 %v4185, 0.0
        %v4258 = vmax.f32 %v4187, 0.0
        %v4259 = vmax.f32 %v3538, 0.0
        %v4260 = vmax.f32 %v3540, 0.0
        %v4261 = vmax.f32 %v3631, 0.0
        %v4262 = vmax.f32 %v3633, 0.0
        %v4263 = vmax.f32 %v3724, 0.0
        %v4264 = vmax.f32 %v3726, 0.0
        %v4265 = vmax.f32 %v3817, 0.0
        %v4266 = vmax.f32 %v3819, 0.0
        %v4267 = vmax.f32 %v3910, 0.0
        %v4268 = vmax.f32 %v3912, 0.0
        %v4269 = vmax.f32 %v4003, 0.0
        %v4270 = vmax.f32 %v4005, 0.0
        %v4271 = vmax.f32 %v4096, 0.0
        %v4272 = vmax.f32 %v4098, 0.0
        %v4273 = vmax.f32 %v4189, 0.0
        %v4274 = vmax.f32 %v4191, 0.0
        %v4275 = vmax.f32 %v3544, 0.0
        %v4276 = vmax.f32 %v3546, 0.0
        %v4277 = vmax.f32 %v3637, 0.0
        %v4278 = vmax.f32 %v3639, 0.0
        %v4279 = vmax.f32 %v3730, 0.0
        %v4280 = vmax.f32 %v3732, 0.0
        %v4281 = vmax.f32 %v3823, 0.0
        %v4282 = vmax.f32 %v3825, 0.0
        %v4283 = vmax.f32 %v3916, 0.0
        %v4284 = vmax.f32 %v3918, 0.0
        %v4285 = vmax.f32 %v4009, 0.0
        %v4286 = vmax.f32 %v4011, 0.0
        %v4287 = vmax.f32 %v4102, 0.0
        %v4288 = vmax.f32 %v4104, 0.0
        %v4289 = vmax.f32 %v4195, 0.0
        %v4290 = vmax.f32 %v4197, 0.0
        %v4291 = vmax.f32 %v3548, 0.0
        %v4292 = vmax.f32 %v3550, 0.0
        %v4293 = vmax.f32 %v3641, 0.0
        %v4294 = vmax.f32 %v3643, 0.0
        %v4295 = vmax.f32 %v3734, 0.0
        %v4296 = vmax.f32 %v3736, 0.0
        %v4297 = vmax.f32 %v3827, 0.0
        %v4298 = vmax.f32 %v3829, 0.0
        %v4299 = vmax.f32 %v3920, 0.0
        %v4300 = vmax.f32 %v3922, 0.0
        %v4301 = vmax.f32 %v4013, 0.0
        %v4302 = vmax.f32 %v4015, 0.0
        %v4303 = vmax.f32 %v4106, 0.0
        %v4304 = vmax.f32 %v4108, 0.0
        %v4305 = vmax.f32 %v4199, 0.0
        %v4306 = vmax.f32 %v4201, 0.0
        %v4307 = vmax.f32 %v3554, 0.0
        %v4308 = vmax.f32 %v3556, 0.0
        %v4309 = vmax.f32 %v3647, 0.0
        %v4310 = vmax.f32 %v3649, 0.0
        %v4311 = vmax.f32 %v3740, 0.0
        %v4312 = vmax.f32 %v3742, 0.0
        %v4313 = vmax.f32 %v3833, 0.0
        %v4314 = vmax.f32 %v3835, 0.0
        %v4315 = vmax.f32 %v3926, 0.0
        %v4316 = vmax.f32 %v3928, 0.0
        %v4317 = vmax.f32 %v4019, 0.0
        %v4318 = vmax.f32 %v4021, 0.0
        %v4319 = vmax.f32 %v4112, 0.0
        %v4320 = vmax.f32 %v4114, 0.0
        %v4321 = vmax.f32 %v4205, 0.0
        %v4322 = vmax.f32 %v4207, 0.0
        %v4323 = vmax.f32 %v3558, 0.0
        %v4324 = vmax.f32 %v3560, 0.0
        %v4325 = vmax.f32 %v3651, 0.0
        %v4326 = vmax.f32 %v3653, 0.0
        %v4327 = vmax.f32 %v3744, 0.0
        %v4328 = vmax.f32 %v3746, 0.0
        %v4329 = vmax.f32 %v3837, 0.0
        %v4330 = vmax.f32 %v3839, 0.0
        %v4331 = vmax.f32 %v3930, 0.0
        %v4332 = vmax.f32 %v3932, 0.0
        %v4333 = vmax.f32 %v4023, 0.0
        %v4334 = vmax.f32 %v4025, 0.0
        %v4335 = vmax.f32 %v4116, 0.0
        %v4336 = vmax.f32 %v4118, 0.0
        %v4337 = vmax.f32 %v4209, 0.0
        %v4338 = vmax.f32 %v4211, 0.0
        %v4339 = vmax.f32 %v3564, 0.0
        %v4340 = vmax.f32 %v3566, 0.0
        %v4341 = vmax.f32 %v3657, 0.0
        %v4342 = vmax.f32 %v3659, 0.0
        %v4343 = vmax.f32 %v3750, 0.0
        %v4344 = vmax.f32 %v3752, 0.0
        %v4345 = vmax.f32 %v3843, 0.0
        %v4346 = vmax.f32 %v3845, 0.0
        %v4347 = vmax.f32 %v3936, 0.0
        %v4348 = vmax.f32 %v3938, 0.0
        %v4349 = vmax.f32 %v4029, 0.0
        %v4350 = vmax.f32 %v4031, 0.0
        %v4351 = vmax.f32 %v4122, 0.0
        %v4352 = vmax.f32 %v4124, 0.0
        %v4353 = vmax.f32 %v4215, 0.0
        %v4354 = vmax.f32 %v4217, 0.0
        %v4355 = vmax.f32 %v3568, 0.0
        %v4356 = vmax.f32 %v3570, 0.0
        %v4357 = vmax.f32 %v3661, 0.0
        %v4358 = vmax.f32 %v3663, 0.0
        %v4359 = vmax.f32 %v3754, 0.0
        %v4360 = vmax.f32 %v3756, 0.0
        %v4361 = vmax.f32 %v3847, 0.0
        %v4362 = vmax.f32 %v3849, 0.0
        %v4363 = vmax.f32 %v3940, 0.0
        %v4364 = vmax.f32 %v3942, 0.0
        %v4365 = vmax.f32 %v4033, 0.0
        %v4366 = vmax.f32 %v4035, 0.0
        %v4367 = vmax.f32 %v4126, 0.0
        %v4368 = vmax.f32 %v4128, 0.0
        %v4369 = vmax.f32 %v4219, 0.0
        %v4370 = vmax.f32 %v4221, 0.0
        %v4371 = vmax.f32 %v3574, 0.0
        %v4372 = vmax.f32 %v3576, 0.0
        %v4373 = vmax.f32 %v3667, 0.0
        %v4374 = vmax.f32 %v3669, 0.0
        %v4375 = vmax.f32 %v3760, 0.0
        %v4376 = vmax.f32 %v3762, 0.0
        %v4377 = vmax.f32 %v3853, 0.0
        %v4378 = vmax.f32 %v3855, 0.0
        %v4379 = vmax.f32 %v3946, 0.0
        %v4380 = vmax.f32 %v3948, 0.0
        %v4381 = vmax.f32 %v4039, 0.0
        %v4382 = vmax.f32 %v4041, 0.0
        %v4383 = vmax.f32 %v4132, 0.0
        %v4384 = vmax.f32 %v4134, 0.0
        %v4385 = vmax.f32 %v4225, 0.0
        %v4386 = vmax.f32 %v4227, 0.0
        %v4387 = vmax.f32 %v3578, 0.0
        %v4388 = vmax.f32 %v3580, 0.0
        %v4389 = vmax.f32 %v3671, 0.0
        %v4390 = vmax.f32 %v3673, 0.0
        %v4391 = vmax.f32 %v3764, 0.0
        %v4392 = vmax.f32 %v3766, 0.0
        %v4393 = vmax.f32 %v3857, 0.0
        %v4394 = vmax.f32 %v3859, 0.0
        %v4395 = vmax.f32 %v3950, 0.0
        %v4396 = vmax.f32 %v3952, 0.0
        %v4397 = vmax.f32 %v4043, 0.0
        %v4398 = vmax.f32 %v4045, 0.0
        %v4399 = vmax.f32 %v4136, 0.0
        %v4400 = vmax.f32 %v4138, 0.0
        %v4401 = vmax.f32 %v4229, 0.0
        %v4402 = vmax.f32 %v4231, 0.0
        %v4403 = vmax.f32 %v3584, 0.0
        %v4404 = vmax.f32 %v3586, 0.0
        %v4405 = vmax.f32 %v3677, 0.0
        %v4406 = vmax.f32 %v3679, 0.0
        %v4407 = vmax.f32 %v3770, 0.0
        %v4408 = vmax.f32 %v3772, 0.0
        %v4409 = vmax.f32 %v3863, 0.0
        %v4410 = vmax.f32 %v3865, 0.0
        %v4411 = vmax.f32 %v3956, 0.0
        %v4412 = vmax.f32 %v3958, 0.0
        %v4413 = vmax.f32 %v4049, 0.0
        %v4414 = vmax.f32 %v4051, 0.0
        %v4415 = vmax.f32 %v4142, 0.0
        %v4416 = vmax.f32 %v4144, 0.0
        %v4417 = vmax.f32 %v4235, 0.0
        %v4418 = vmax.f32 %v4237, 0.0
        %v4419 = vmax.f32 %v3588, 0.0
        %v4420 = vmax.f32 %v3590, 0.0
        %v4421 = vmax.f32 %v3681, 0.0
        %v4422 = vmax.f32 %v3683, 0.0
        %v4423 = vmax.f32 %v3774, 0.0
        %v4424 = vmax.f32 %v3776, 0.0
        %v4425 = vmax.f32 %v3867, 0.0
        %v4426 = vmax.f32 %v3869, 0.0
        %v4427 = vmax.f32 %v3960, 0.0
        %v4428 = vmax.f32 %v3962, 0.0
        %v4429 = vmax.f32 %v4053, 0.0
        %v4430 = vmax.f32 %v4055, 0.0
        %v4431 = vmax.f32 %v4146, 0.0
        %v4432 = vmax.f32 %v4148, 0.0
        %v4433 = vmax.f32 %v4239, 0.0
        %v4434 = vmax.f32 %v4241, 0.0
        %v4435 = vpack.c.bf16 %v4259, %v4243
        %v4436 = vpack.c.bf16 %v4260, %v4244
        %v4437 = vpack.c.bf16 %v4261, %v4245
        %v4438 = vpack.c.bf16 %v4262, %v4246
        %v4439 = vpack.c.bf16 %v4263, %v4247
        %v4440 = vpack.c.bf16 %v4264, %v4248
        %v4441 = vpack.c.bf16 %v4265, %v4249
        %v4442 = vpack.c.bf16 %v4266, %v4250
        %v4443 = vpack.c.bf16 %v4267, %v4251
        %v4444 = vpack.c.bf16 %v4268, %v4252
        %v4445 = vpack.c.bf16 %v4269, %v4253
        %v4446 = vpack.c.bf16 %v4270, %v4254
        %v4447 = vpack.c.bf16 %v4271, %v4255
        %v4448 = vpack.c.bf16 %v4272, %v4256
        %v4449 = vpack.c.bf16 %v4273, %v4257
        %v4450 = vpack.c.bf16 %v4274, %v4258
        %v4451 = vpack.c.bf16 %v4291, %v4275
        %v4452 = vpack.c.bf16 %v4292, %v4276
        %v4453 = vpack.c.bf16 %v4293, %v4277
        %v4454 = vpack.c.bf16 %v4294, %v4278
        %v4455 = vpack.c.bf16 %v4295, %v4279
        %v4456 = vpack.c.bf16 %v4296, %v4280
        %v4457 = vpack.c.bf16 %v4297, %v4281
        %v4458 = vpack.c.bf16 %v4298, %v4282
        %v4459 = vpack.c.bf16 %v4299, %v4283
        %v4460 = vpack.c.bf16 %v4300, %v4284
        %v4461 = vpack.c.bf16 %v4301, %v4285
        %v4462 = vpack.c.bf16 %v4302, %v4286
        %v4463 = vpack.c.bf16 %v4303, %v4287
        %v4464 = vpack.c.bf16 %v4304, %v4288
        %v4465 = vpack.c.bf16 %v4305, %v4289
        %v4466 = vpack.c.bf16 %v4306, %v4290
        %v4467 = vpack.c.bf16 %v4323, %v4307
        %v4468 = vpack.c.bf16 %v4324, %v4308
        %v4469 = vpack.c.bf16 %v4325, %v4309
        %v4470 = vpack.c.bf16 %v4326, %v4310
        %v4471 = vpack.c.bf16 %v4327, %v4311
        %v4472 = vpack.c.bf16 %v4328, %v4312
        %v4473 = vpack.c.bf16 %v4329, %v4313
        %v4474 = vpack.c.bf16 %v4330, %v4314
        %v4475 = vpack.c.bf16 %v4331, %v4315
        %v4476 = vpack.c.bf16 %v4332, %v4316
        %v4477 = vpack.c.bf16 %v4333, %v4317
        %v4478 = vpack.c.bf16 %v4334, %v4318
        %v4479 = vpack.c.bf16 %v4335, %v4319
        %v4480 = vpack.c.bf16 %v4336, %v4320
        %v4481 = vpack.c.bf16 %v4337, %v4321
        %v4482 = vpack.c.bf16 %v4338, %v4322
        %v4483 = vpack.c.bf16 %v4355, %v4339
        %v4484 = vpack.c.bf16 %v4356, %v4340
        %v4485 = vpack.c.bf16 %v4357, %v4341
        %v4486 = vpack.c.bf16 %v4358, %v4342
        %v4487 = vpack.c.bf16 %v4359, %v4343
        %v4488 = vpack.c.bf16 %v4360, %v4344
        %v4489 = vpack.c.bf16 %v4361, %v4345
        %v4490 = vpack.c.bf16 %v4362, %v4346
        %v4491 = vpack.c.bf16 %v4363, %v4347
        %v4492 = vpack.c.bf16 %v4364, %v4348
        %v4493 = vpack.c.bf16 %v4365, %v4349
        %v4494 = vpack.c.bf16 %v4366, %v4350
        %v4495 = vpack.c.bf16 %v4367, %v4351
        %v4496 = vpack.c.bf16 %v4368, %v4352
        %v4497 = vpack.c.bf16 %v4369, %v4353
        %v4498 = vpack.c.bf16 %v4370, %v4354
        %v4499 = vpack.c.bf16 %v4387, %v4371
        %v4500 = vpack.c.bf16 %v4388, %v4372
        %v4501 = vpack.c.bf16 %v4389, %v4373
        %v4502 = vpack.c.bf16 %v4390, %v4374
        %v4503 = vpack.c.bf16 %v4391, %v4375
        %v4504 = vpack.c.bf16 %v4392, %v4376
        %v4505 = vpack.c.bf16 %v4393, %v4377
        %v4506 = vpack.c.bf16 %v4394, %v4378
        %v4507 = vpack.c.bf16 %v4395, %v4379
        %v4508 = vpack.c.bf16 %v4396, %v4380
        %v4509 = vpack.c.bf16 %v4397, %v4381
        %v4510 = vpack.c.bf16 %v4398, %v4382
        %v4511 = vpack.c.bf16 %v4399, %v4383
        %v4512 = vpack.c.bf16 %v4400, %v4384
        %v4513 = vpack.c.bf16 %v4401, %v4385
        %v4514 = vpack.c.bf16 %v4402, %v4386
        %v4515 = vpack.c.bf16 %v4419, %v4403
        %v4516 = vpack.c.bf16 %v4420, %v4404
        %v4517 = vpack.c.bf16 %v4421, %v4405
        %v4518 = vpack.c.bf16 %v4422, %v4406
        %v4519 = vpack.c.bf16 %v4423, %v4407
        %v4520 = vpack.c.bf16 %v4424, %v4408
        %v4521 = vpack.c.bf16 %v4425, %v4409
        %v4522 = vpack.c.bf16 %v4426, %v4410
        %v4523 = vpack.c.bf16 %v4427, %v4411
        %v4524 = vpack.c.bf16 %v4428, %v4412
        %v4525 = vpack.c.bf16 %v4429, %v4413
        %v4526 = vpack.c.bf16 %v4430, %v4414
        %v4527 = vpack.c.bf16 %v4431, %v4415
        %v4528 = vpack.c.bf16 %v4432, %v4416
        %v4529 = vpack.c.bf16 %v4433, %v4417
        %v4530 = vpack.c.bf16 %v4434, %v4418
        %v4531 = vld [vmem:[%s6] sm:$0xf]
        %v4532 = vld [vmem:[%s6 + $0x4] sm:$0x1]
        %v4533 = vld [vmem:[%s7] sm:$0xff]
        %v4534 = vld [vmem:[%s7 + $0x8] sm:$0x1]
        %4536 = vset.pattern.permute.xlu0 0
        %4537 = vperm.xlu0 %4536, %v4533
        %v4538 = vpop.permute.xlu0 %4537
        %4541 = vset.pattern.permute.xlu0 0
        %4542 = vperm.xlu0 %4541, %v4534
        %v4543 = vpop.permute.xlu0 %4542
        %v4547 = vunpack.c.l.b16 %v4531
        %v4548 = vunpack.c.l.b16 %v4532
        %v4549 = vpack.c.b16 %v4548, %v4547
        %v4551 = vsel %vm3480, %v4549, 0
        %4553 = vmatprep.subr.bf16.mxu0 %v4436
        %4554 = vmatpush1.bf16.msra.mxu0 %v4435
        %4555 = vmatprep.subr.bf16.mxu0 %v4452
        %4556 = vmatpush1.bf16.msra.mxu0 %v4451
        %4557 = vmatprep.subr.bf16.mxu0 %v4468
        %4558 = vmatpush1.bf16.msra.mxu0 %v4467
        %4559 = vmatprep.subr.bf16.mxu0 %v4484
        %4560 = vmatpush1.bf16.msra.mxu0 %v4483
        %4561 = vmatprep.subr.bf16.mxu0 %v4500
        %4562 = vmatpush1.bf16.msra.mxu0 %v4499
        %4563 = vmatprep.subr.bf16.mxu0 %v4516
        %4564 = vmatpush1.bf16.msra.mxu0 %v4515
        %4565 = vmatprep.subr.bf16.mxu0 0
        %4566 = vmatpush1.bf16.msra.mxu0 0
        %4567 = vmatprep.subr.bf16.mxu0 0
        %4568 = vmatpush1.bf16.msra.mxu0 0
        %4569 = vmatprep.subr.bf16.mxu0 0
        %4570 = vmatpush1.bf16.msra.mxu0 0
        %4571 = vmatprep.subr.bf16.mxu0 0
        %4572 = vmatpush1.bf16.msra.mxu0 0
        %4573 = vmatprep.subr.bf16.mxu0 0
        %4574 = vmatpush1.bf16.msra.mxu0 0
        %4575 = vmatprep.subr.bf16.mxu0 0
        %4576 = vmatpush1.bf16.msra.mxu0 0
        %4577 = vmatprep.subr.bf16.mxu0 0
        %4578 = vmatpush1.bf16.msra.mxu0 0
        %4579 = vmatprep.subr.bf16.mxu0 0
        %4580 = vmatpush1.bf16.msra.mxu0 0
        %4581 = vmatprep.subr.bf16.mxu0 0
        %4582 = vmatpush1.bf16.msra.mxu0 0
        %4583 = vmatprep.subr.bf16.mxu0 0
        %4584 = vmatpush1.bf16.msra.mxu0 0
        %4585 = vmatprep.mubr.bf16.mxu0 0
        %4586 = vmatmul.mubr.bf16.gmra.mrb[0].mxu0 %v4551
        %v4587 = vpop.f32.mrb[0].mxu0
        %v4588 = vadd.f32 %v4538, %v4587
        %v4589 = vpop.f32.mrb[0].mxu0
        %v4590 = vadd.f32 %v4538, %v4589
        %v4591 = vpop.f32.mrb[0].mxu0
        %v4592 = vadd.f32 %v4543, %v4591
        %v4593 = vpop.f32.mrb[0].mxu0
        %v4594 = vadd.f32 %v4543, %v4593
        %4595 = vdwg.mxu0
        %4596 = vmatprep.subr.bf16.mxu0 %v4438
        %4597 = vmatpush1.bf16.msra.mxu0 %v4437
        %4598 = vmatprep.subr.bf16.mxu0 %v4454
        %4599 = vmatpush1.bf16.msra.mxu0 %v4453
        %4600 = vmatprep.subr.bf16.mxu0 %v4470
        %4601 = vmatpush1.bf16.msra.mxu0 %v4469
        %4602 = vmatprep.subr.bf16.mxu0 %v4486
        %4603 = vmatpush1.bf16.msra.mxu0 %v4485
        %4604 = vmatprep.subr.bf16.mxu0 %v4502
        %4605 = vmatpush1.bf16.msra.mxu0 %v4501
        %4606 = vmatprep.subr.bf16.mxu0 %v4518
        %4607 = vmatpush1.bf16.msra.mxu0 %v4517
        %4608 = vmatprep.subr.bf16.mxu0 0
        %4609 = vmatpush1.bf16.msra.mxu0 0
        %4610 = vmatprep.subr.bf16.mxu0 0
        %4611 = vmatpush1.bf16.msra.mxu0 0
        %4612 = vmatprep.subr.bf16.mxu0 0
        %4613 = vmatpush1.bf16.msra.mxu0 0
        %4614 = vmatprep.subr.bf16.mxu0 0
        %4615 = vmatpush1.bf16.msra.mxu0 0
        %4616 = vmatprep.subr.bf16.mxu0 0
        %4617 = vmatpush1.bf16.msra.mxu0 0
        %4618 = vmatprep.subr.bf16.mxu0 0
        %4619 = vmatpush1.bf16.msra.mxu0 0
        %4620 = vmatprep.subr.bf16.mxu0 0
        %4621 = vmatpush1.bf16.msra.mxu0 0
        %4622 = vmatprep.subr.bf16.mxu0 0
        %4623 = vmatpush1.bf16.msra.mxu0 0
        %4624 = vmatprep.subr.bf16.mxu0 0
        %4625 = vmatpush1.bf16.msra.mxu0 0
        %4626 = vmatprep.subr.bf16.mxu0 0
        %4627 = vmatpush1.bf16.msra.mxu0 0
        %4628 = vmatprep.mubr.bf16.mxu0 0
        %4629 = vmatmul.mubr.bf16.gmra.mrb[0].mxu0 %v4551
        %v4630 = vpop.f32.mrb[0].mxu0
        %v4631 = vadd.f32 %v4538, %v4630
        %v4632 = vpop.f32.mrb[0].mxu0
        %v4633 = vadd.f32 %v4538, %v4632
        %v4634 = vpop.f32.mrb[0].mxu0
        %v4635 = vadd.f32 %v4543, %v4634
        %v4636 = vpop.f32.mrb[0].mxu0
        %v4637 = vadd.f32 %v4543, %v4636
        %4638 = vdwg.mxu0
        %4639 = vmatprep.subr.bf16.mxu0 %v4440
        %4640 = vmatpush1.bf16.msra.mxu0 %v4439
        %4641 = vmatprep.subr.bf16.mxu0 %v4456
        %4642 = vmatpush1.bf16.msra.mxu0 %v4455
        %4643 = vmatprep.subr.bf16.mxu0 %v4472
        %4644 = vmatpush1.bf16.msra.mxu0 %v4471
        %4645 = vmatprep.subr.bf16.mxu0 %v4488
        %4646 = vmatpush1.bf16.msra.mxu0 %v4487
        %4647 = vmatprep.subr.bf16.mxu0 %v4504
        %4648 = vmatpush1.bf16.msra.mxu0 %v4503
        %4649 = vmatprep.subr.bf16.mxu0 %v4520
        %4650 = vmatpush1.bf16.msra.mxu0 %v4519
        %4651 = vmatprep.subr.bf16.mxu0 0
        %4652 = vmatpush1.bf16.msra.mxu0 0
        %4653 = vmatprep.subr.bf16.mxu0 0
        %4654 = vmatpush1.bf16.msra.mxu0 0
        %4655 = vmatprep.subr.bf16.mxu0 0
        %4656 = vmatpush1.bf16.msra.mxu0 0
        %4657 = vmatprep.subr.bf16.mxu0 0
        %4658 = vmatpush1.bf16.msra.mxu0 0
        %4659 = vmatprep.subr.bf16.mxu0 0
        %4660 = vmatpush1.bf16.msra.mxu0 0
        %4661 = vmatprep.subr.bf16.mxu0 0
        %4662 = vmatpush1.bf16.msra.mxu0 0
        %4663 = vmatprep.subr.bf16.mxu0 0
        %4664 = vmatpush1.bf16.msra.mxu0 0
        %4665 = vmatprep.subr.bf16.mxu0 0
        %4666 = vmatpush1.bf16.msra.mxu0 0
        %4667 = vmatprep.subr.bf16.mxu0 0
        %4668 = vmatpush1.bf16.msra.mxu0 0
        %4669 = vmatprep.subr.bf16.mxu0 0
        %4670 = vmatpush1.bf16.msra.mxu0 0
        %4671 = vmatprep.mubr.bf16.mxu0 0
        %4672 = vmatmul.mubr.bf16.gmra.mrb[0].mxu0 %v4551
        %v4673 = vpop.f32.mrb[0].mxu0
        %v4674 = vadd.f32 %v4538, %v4673
        %v4675 = vpop.f32.mrb[0].mxu0
        %v4676 = vadd.f32 %v4538, %v4675
        %v4677 = vpop.f32.mrb[0].mxu0
        %v4678 = vadd.f32 %v4543, %v4677
        %v4679 = vpop.f32.mrb[0].mxu0
        %v4680 = vadd.f32 %v4543, %v4679
        %4681 = vdwg.mxu0
        %4682 = vmatprep.subr.bf16.mxu0 %v4442
        %4683 = vmatpush1.bf16.msra.mxu0 %v4441
        %4684 = vmatprep.subr.bf16.mxu0 %v4458
        %4685 = vmatpush1.bf16.msra.mxu0 %v4457
        %4686 = vmatprep.subr.bf16.mxu0 %v4474
        %4687 = vmatpush1.bf16.msra.mxu0 %v4473
        %4688 = vmatprep.subr.bf16.mxu0 %v4490
        %4689 = vmatpush1.bf16.msra.mxu0 %v4489
        %4690 = vmatprep.subr.bf16.mxu0 %v4506
        %4691 = vmatpush1.bf16.msra.mxu0 %v4505
        %4692 = vmatprep.subr.bf16.mxu0 %v4522
        %4693 = vmatpush1.bf16.msra.mxu0 %v4521
        %4694 = vmatprep.subr.bf16.mxu0 0
        %4695 = vmatpush1.bf16.msra.mxu0 0
        %4696 = vmatprep.subr.bf16.mxu0 0
        %4697 = vmatpush1.bf16.msra.mxu0 0
        %4698 = vmatprep.subr.bf16.mxu0 0
        %4699 = vmatpush1.bf16.msra.mxu0 0
        %4700 = vmatprep.subr.bf16.mxu0 0
        %4701 = vmatpush1.bf16.msra.mxu0 0
        %4702 = vmatprep.subr.bf16.mxu0 0
        %4703 = vmatpush1.bf16.msra.mxu0 0
        %4704 = vmatprep.subr.bf16.mxu0 0
        %4705 = vmatpush1.bf16.msra.mxu0 0
        %4706 = vmatprep.subr.bf16.mxu0 0
        %4707 = vmatpush1.bf16.msra.mxu0 0
        %4708 = vmatprep.subr.bf16.mxu0 0
        %4709 = vmatpush1.bf16.msra.mxu0 0
        %4710 = vmatprep.subr.bf16.mxu0 0
        %4711 = vmatpush1.bf16.msra.mxu0 0
        %4712 = vmatprep.subr.bf16.mxu0 0
        %4713 = vmatpush1.bf16.msra.mxu0 0
        %4714 = vmatprep.mubr.bf16.mxu0 0
        %4715 = vmatmul.mubr.bf16.gmra.mrb[0].mxu0 %v4551
        %v4716 = vpop.f32.mrb[0].mxu0
        %v4717 = vadd.f32 %v4538, %v4716
        %v4718 = vpop.f32.mrb[0].mxu0
        %v4719 = vadd.f32 %v4538, %v4718
        %v4720 = vpop.f32.mrb[0].mxu0
        %v4721 = vadd.f32 %v4543, %v4720
        %v4722 = vpop.f32.mrb[0].mxu0
        %v4723 = vadd.f32 %v4543, %v4722
        %4724 = vdwg.mxu0
        %4725 = vmatprep.subr.bf16.mxu0 %v4444
        %4726 = vmatpush1.bf16.msra.mxu0 %v4443
        %4727 = vmatprep.subr.bf16.mxu0 %v4460
        %4728 = vmatpush1.bf16.msra.mxu0 %v4459
        %4729 = vmatprep.subr.bf16.mxu0 %v4476
        %4730 = vmatpush1.bf16.msra.mxu0 %v4475
        %4731 = vmatprep.subr.bf16.mxu0 %v4492
        %4732 = vmatpush1.bf16.msra.mxu0 %v4491
        %4733 = vmatprep.subr.bf16.mxu0 %v4508
        %4734 = vmatpush1.bf16.msra.mxu0 %v4507
        %4735 = vmatprep.subr.bf16.mxu0 %v4524
        %4736 = vmatpush1.bf16.msra.mxu0 %v4523
        %4737 = vmatprep.subr.bf16.mxu0 0
        %4738 = vmatpush1.bf16.msra.mxu0 0
        %4739 = vmatprep.subr.bf16.mxu0 0
        %4740 = vmatpush1.bf16.msra.mxu0 0
        %4741 = vmatprep.subr.bf16.mxu0 0
        %4742 = vmatpush1.bf16.msra.mxu0 0
        %4743 = vmatprep.subr.bf16.mxu0 0
        %4744 = vmatpush1.bf16.msra.mxu0 0
        %4745 = vmatprep.subr.bf16.mxu0 0
        %4746 = vmatpush1.bf16.msra.mxu0 0
        %4747 = vmatprep.subr.bf16.mxu0 0
        %4748 = vmatpush1.bf16.msra.mxu0 0
        %4749 = vmatprep.subr.bf16.mxu0 0
        %4750 = vmatpush1.bf16.msra.mxu0 0
        %4751 = vmatprep.subr.bf16.mxu0 0
        %4752 = vmatpush1.bf16.msra.mxu0 0
        %4753 = vmatprep.subr.bf16.mxu0 0
        %4754 = vmatpush1.bf16.msra.mxu0 0
        %4755 = vmatprep.subr.bf16.mxu0 0
        %4756 = vmatpush1.bf16.msra.mxu0 0
        %4757 = vmatprep.mubr.bf16.mxu0 0
        %4758 = vmatmul.mubr.bf16.gmra.mrb[0].mxu0 %v4551
        %v4759 = vpop.f32.mrb[0].mxu0
        %v4760 = vadd.f32 %v4538, %v4759
        %v4761 = vpop.f32.mrb[0].mxu0
        %v4762 = vadd.f32 %v4538, %v4761
        %v4763 = vpop.f32.mrb[0].mxu0
        %v4764 = vadd.f32 %v4543, %v4763
        %v4765 = vpop.f32.mrb[0].mxu0
        %v4766 = vadd.f32 %v4543, %v4765
        %4767 = vdwg.mxu0
        %4768 = vmatprep.subr.bf16.mxu0 %v4446
        %4769 = vmatpush1.bf16.msra.mxu0 %v4445
        %4770 = vmatprep.subr.bf16.mxu0 %v4462
        %4771 = vmatpush1.bf16.msra.mxu0 %v4461
        %4772 = vmatprep.subr.bf16.mxu0 %v4478
        %4773 = vmatpush1.bf16.msra.mxu0 %v4477
        %4774 = vmatprep.subr.bf16.mxu0 %v4494
        %4775 = vmatpush1.bf16.msra.mxu0 %v4493
        %4776 = vmatprep.subr.bf16.mxu0 %v4510
        %4777 = vmatpush1.bf16.msra.mxu0 %v4509
        %4778 = vmatprep.subr.bf16.mxu0 %v4526
        %4779 = vmatpush1.bf16.msra.mxu0 %v4525
        %4780 = vmatprep.subr.bf16.mxu0 0
        %4781 = vmatpush1.bf16.msra.mxu0 0
        %4782 = vmatprep.subr.bf16.mxu0 0
        %4783 = vmatpush1.bf16.msra.mxu0 0
        %4784 = vmatprep.subr.bf16.mxu0 0
        %4785 = vmatpush1.bf16.msra.mxu0 0
        %4786 = vmatprep.subr.bf16.mxu0 0
        %4787 = vmatpush1.bf16.msra.mxu0 0
        %4788 = vmatprep.subr.bf16.mxu0 0
        %4789 = vmatpush1.bf16.msra.mxu0 0
        %4790 = vmatprep.subr.bf16.mxu0 0
        %4791 = vmatpush1.bf16.msra.mxu0 0
        %4792 = vmatprep.subr.bf16.mxu0 0
        %4793 = vmatpush1.bf16.msra.mxu0 0
        %4794 = vmatprep.subr.bf16.mxu0 0
        %4795 = vmatpush1.bf16.msra.mxu0 0
        %4796 = vmatprep.subr.bf16.mxu0 0
        %4797 = vmatpush1.bf16.msra.mxu0 0
        %4798 = vmatprep.subr.bf16.mxu0 0
        %4799 = vmatpush1.bf16.msra.mxu0 0
        %4800 = vmatprep.mubr.bf16.mxu0 0
        %4801 = vmatmul.mubr.bf16.gmra.mrb[0].mxu0 %v4551
        %v4802 = vpop.f32.mrb[0].mxu0
        %v4803 = vadd.f32 %v4538, %v4802
        %v4804 = vpop.f32.mrb[0].mxu0
        %v4805 = vadd.f32 %v4538, %v4804
        %v4806 = vpop.f32.mrb[0].mxu0
        %v4807 = vadd.f32 %v4543, %v4806
        %v4808 = vpop.f32.mrb[0].mxu0
        %v4809 = vadd.f32 %v4543, %v4808
        %4810 = vdwg.mxu0
        %4811 = vmatprep.subr.bf16.mxu0 %v4448
        %4812 = vmatpush1.bf16.msra.mxu0 %v4447
        %4813 = vmatprep.subr.bf16.mxu0 %v4464
        %4814 = vmatpush1.bf16.msra.mxu0 %v4463
        %4815 = vmatprep.subr.bf16.mxu0 %v4480
        %4816 = vmatpush1.bf16.msra.mxu0 %v4479
        %4817 = vmatprep.subr.bf16.mxu0 %v4496
        %4818 = vmatpush1.bf16.msra.mxu0 %v4495
        %4819 = vmatprep.subr.bf16.mxu0 %v4512
        %4820 = vmatpush1.bf16.msra.mxu0 %v4511
        %4821 = vmatprep.subr.bf16.mxu0 %v4528
        %4822 = vmatpush1.bf16.msra.mxu0 %v4527
        %4823 = vmatprep.subr.bf16.mxu0 0
        %4824 = vmatpush1.bf16.msra.mxu0 0
        %4825 = vmatprep.subr.bf16.mxu0 0
        %4826 = vmatpush1.bf16.msra.mxu0 0
        %4827 = vmatprep.subr.bf16.mxu0 0
        %4828 = vmatpush1.bf16.msra.mxu0 0
        %4829 = vmatprep.subr.bf16.mxu0 0
        %4830 = vmatpush1.bf16.msra.mxu0 0
        %4831 = vmatprep.subr.bf16.mxu0 0
        %4832 = vmatpush1.bf16.msra.mxu0 0
        %4833 = vmatprep.subr.bf16.mxu0 0
        %4834 = vmatpush1.bf16.msra.mxu0 0
        %4835 = vmatprep.subr.bf16.mxu0 0
        %4836 = vmatpush1.bf16.msra.mxu0 0
        %4837 = vmatprep.subr.bf16.mxu0 0
        %4838 = vmatpush1.bf16.msra.mxu0 0
        %4839 = vmatprep.subr.bf16.mxu0 0
        %4840 = vmatpush1.bf16.msra.mxu0 0
        %4841 = vmatprep.subr.bf16.mxu0 0
        %4842 = vmatpush1.bf16.msra.mxu0 0
        %4843 = vmatprep.mubr.bf16.mxu0 0
        %4844 = vmatmul.mubr.bf16.gmra.mrb[0].mxu0 %v4551
        %v4845 = vpop.f32.mrb[0].mxu0
        %v4846 = vadd.f32 %v4538, %v4845
        %v4847 = vpop.f32.mrb[0].mxu0
        %v4848 = vadd.f32 %v4538, %v4847
        %v4849 = vpop.f32.mrb[0].mxu0
        %v4850 = vadd.f32 %v4543, %v4849
        %v4851 = vpop.f32.mrb[0].mxu0
        %v4852 = vadd.f32 %v4543, %v4851
        %4853 = vdwg.mxu0
        %4854 = vmatprep.subr.bf16.mxu0 %v4450
        %4855 = vmatpush1.bf16.msra.mxu0 %v4449
        %4856 = vmatprep.subr.bf16.mxu0 %v4466
        %4857 = vmatpush1.bf16.msra.mxu0 %v4465
        %4858 = vmatprep.subr.bf16.mxu0 %v4482
        %4859 = vmatpush1.bf16.msra.mxu0 %v4481
        %4860 = vmatprep.subr.bf16.mxu0 %v4498
        %4861 = vmatpush1.bf16.msra.mxu0 %v4497
        %4862 = vmatprep.subr.bf16.mxu0 %v4514
        %4863 = vmatpush1.bf16.msra.mxu0 %v4513
        %4864 = vmatprep.subr.bf16.mxu0 %v4530
        %4865 = vmatpush1.bf16.msra.mxu0 %v4529
        %4866 = vmatprep.subr.bf16.mxu0 0
        %4867 = vmatpush1.bf16.msra.mxu0 0
        %4868 = vmatprep.subr.bf16.mxu0 0
        %4869 = vmatpush1.bf16.msra.mxu0 0
        %4870 = vmatprep.subr.bf16.mxu0 0
        %4871 = vmatpush1.bf16.msra.mxu0 0
        %4872 = vmatprep.subr.bf16.mxu0 0
        %4873 = vmatpush1.bf16.msra.mxu0 0
        %4874 = vmatprep.subr.bf16.mxu0 0
        %4875 = vmatpush1.bf16.msra.mxu0 0
        %4876 = vmatprep.subr.bf16.mxu0 0
        %4877 = vmatpush1.bf16.msra.mxu0 0
        %4878 = vmatprep.subr.bf16.mxu0 0
        %4879 = vmatpush1.bf16.msra.mxu0 0
        %4880 = vmatprep.subr.bf16.mxu0 0
        %4881 = vmatpush1.bf16.msra.mxu0 0
        %4882 = vmatprep.subr.bf16.mxu0 0
        %4883 = vmatpush1.bf16.msra.mxu0 0
        %4884 = vmatprep.subr.bf16.mxu0 0
        %4885 = vmatpush1.bf16.msra.mxu0 0
        %4886 = vmatprep.mubr.bf16.mxu0 0
        %4887 = vmatmul.mubr.bf16.gmra.mrb[0].mxu0 %v4551
        %v4888 = vpop.f32.mrb[0].mxu0
        %v4889 = vadd.f32 %v4538, %v4888
        %v4890 = vpop.f32.mrb[0].mxu0
        %v4891 = vadd.f32 %v4538, %v4890
        %v4892 = vpop.f32.mrb[0].mxu0
        %v4893 = vadd.f32 %v4543, %v4892
        %v4894 = vpop.f32.mrb[0].mxu0
        %v4895 = vadd.f32 %v4543, %v4894
        %4896 = vdwg.mxu0
        %vm4897 = vcmp.eq.s32.totalorder %v432, 1
        %vm4898 = vcmp.eq.s32.totalorder %v433, 1
        %v4899 = vsel %vm4897, 1, 0
        %v4900 = vsel %vm4898, 1, 0
        %v4901 = vlaneseq
        %v4902 = vshrl.u32 %v4901, 7
        %v4903 = vsub.s32 0, %v4902
        %v4904 = vrot.slane %v4899, %v4903
        %v4905 = vlaneseq
        %v4906 = vshrl.u32 %v4905, 7
        %v4907 = vsub.s32 1, %v4906
        %v4908 = vrot.slane %v4899, %v4907
        %v4909 = vlaneseq
        %v4910 = vshrl.u32 %v4909, 7
        %v4911 = vsub.s32 2, %v4910
        %v4912 = vrot.slane %v4899, %v4911
        %v4913 = vlaneseq
        %v4914 = vshrl.u32 %v4913, 7
        %v4915 = vsub.s32 3, %v4914
        %v4916 = vrot.slane %v4899, %v4915
        %v4917 = vlaneseq
        %v4918 = vshrl.u32 %v4917, 7
        %v4919 = vsub.s32 4, %v4918
        %v4920 = vrot.slane %v4899, %v4919
        %v4921 = vlaneseq
        %v4922 = vshrl.u32 %v4921, 7
        %v4923 = vsub.s32 5, %v4922
        %v4924 = vrot.slane %v4899, %v4923
        %v4925 = vlaneseq
        %v4926 = vshrl.u32 %v4925, 7
        %v4927 = vsub.s32 6, %v4926
        %v4928 = vrot.slane %v4899, %v4927
        %v4929 = vlaneseq
        %v4930 = vshrl.u32 %v4929, 7
        %v4931 = vsub.s32 7, %v4930
        %v4932 = vrot.slane %v4899, %v4931
        %v4933 = vlaneseq
        %v4934 = vshrl.u32 %v4933, 7
        %v4935 = vsub.s32 0, %v4934
        %v4936 = vrot.slane %v4900, %v4935
        %v4937 = vlaneseq
        %v4938 = vshrl.u32 %v4937, 7
        %v4939 = vsub.s32 1, %v4938
        %v4940 = vrot.slane %v4900, %v4939
        %v4941 = vlaneseq
        %v4942 = vshrl.u32 %v4941, 7
        %v4943 = vsub.s32 2, %v4942
        %v4944 = vrot.slane %v4900, %v4943
        %v4945 = vlaneseq
        %v4946 = vshrl.u32 %v4945, 7
        %v4947 = vsub.s32 3, %v4946
        %v4948 = vrot.slane %v4900, %v4947
        %v4949 = vlaneseq
        %v4950 = vshrl.u32 %v4949, 7
        %v4951 = vsub.s32 4, %v4950
        %v4952 = vrot.slane %v4900, %v4951
        %v4953 = vlaneseq
        %v4954 = vshrl.u32 %v4953, 7
        %v4955 = vsub.s32 5, %v4954
        %v4956 = vrot.slane %v4900, %v4955
        %v4957 = vlaneseq
        %v4958 = vshrl.u32 %v4957, 7
        %v4959 = vsub.s32 6, %v4958
        %v4960 = vrot.slane %v4900, %v4959
        %v4961 = vlaneseq
        %v4962 = vshrl.u32 %v4961, 7
        %v4963 = vsub.s32 7, %v4962
        %v4964 = vrot.slane %v4900, %v4963
        %vm4965 = vcmp.eq.s32.totalorder %v4904, 1
        %vm4966 = vcmp.eq.s32.totalorder %v4908, 1
        %vm4967 = vcmp.eq.s32.totalorder %v4912, 1
        %vm4968 = vcmp.eq.s32.totalorder %v4916, 1
        %vm4969 = vcmp.eq.s32.totalorder %v4920, 1
        %vm4970 = vcmp.eq.s32.totalorder %v4924, 1
        %vm4971 = vcmp.eq.s32.totalorder %v4928, 1
        %vm4972 = vcmp.eq.s32.totalorder %v4932, 1
        %vm4973 = vcmp.eq.s32.totalorder %v4936, 1
        %vm4974 = vcmp.eq.s32.totalorder %v4940, 1
        %vm4975 = vcmp.eq.s32.totalorder %v4944, 1
        %vm4976 = vcmp.eq.s32.totalorder %v4948, 1
        %vm4977 = vcmp.eq.s32.totalorder %v4952, 1
        %vm4978 = vcmp.eq.s32.totalorder %v4956, 1
        %vm4979 = vcmp.eq.s32.totalorder %v4960, 1
        %vm4980 = vcmp.eq.s32.totalorder %v4964, 1
        %v4997 = vrot.slane %v4588, 5
        %v4998 = vrot.slane %v4590, 5
        %v4999 = vrot.slane %v4631, 5
        %v5000 = vrot.slane %v4633, 5
        %v5001 = vrot.slane %v4674, 5
        %v5002 = vrot.slane %v4676, 5
        %v5003 = vrot.slane %v4717, 5
        %v5004 = vrot.slane %v4719, 5
        %v5005 = vrot.slane %v4760, 5
        %v5006 = vrot.slane %v4762, 5
        %v5007 = vrot.slane %v4803, 5
        %v5008 = vrot.slane %v4805, 5
        %v5009 = vrot.slane %v4846, 5
        %v5010 = vrot.slane %v4848, 5
        %v5011 = vrot.slane %v4889, 5
        %v5012 = vrot.slane %v4891, 5
        %v5029 = vsel %vm4965, %v4588, %v4997
        %v5030 = vsel %vm4966, %v4590, %v4998
        %v5031 = vsel %vm4967, %v4631, %v4999
        %v5032 = vsel %vm4968, %v4633, %v5000
        %v5033 = vsel %vm4969, %v4674, %v5001
        %v5034 = vsel %vm4970, %v4676, %v5002
        %v5035 = vsel %vm4971, %v4717, %v5003
        %v5036 = vsel %vm4972, %v4719, %v5004
        %v5037 = vsel %vm4973, %v4760, %v5005
        %v5038 = vsel %vm4974, %v4762, %v5006
        %v5039 = vsel %vm4975, %v4803, %v5007
        %v5040 = vsel %vm4976, %v4805, %v5008
        %v5041 = vsel %vm4977, %v4846, %v5009
        %v5042 = vsel %vm4978, %v4848, %v5010
        %v5043 = vsel %vm4979, %v4889, %v5011
        %v5044 = vsel %vm4980, %v4891, %v5012
        %vm5045 = vcmp.eq.s32.totalorder %v432, 2
        %vm5046 = vcmp.eq.s32.totalorder %v433, 2
        %v5047 = vsel %vm5045, 1, 0
        %v5048 = vsel %vm5046, 1, 0
        %v5049 = vlaneseq
        %v5050 = vshrl.u32 %v5049, 7
        %v5051 = vsub.s32 0, %v5050
        %v5052 = vrot.slane %v5047, %v5051
        %v5053 = vlaneseq
        %v5054 = vshrl.u32 %v5053, 7
        %v5055 = vsub.s32 1, %v5054
        %v5056 = vrot.slane %v5047, %v5055
        %v5057 = vlaneseq
        %v5058 = vshrl.u32 %v5057, 7
        %v5059 = vsub.s32 2, %v5058
        %v5060 = vrot.slane %v5047, %v5059
        %v5061 = vlaneseq
        %v5062 = vshrl.u32 %v5061, 7
        %v5063 = vsub.s32 3, %v5062
        %v5064 = vrot.slane %v5047, %v5063
        %v5065 = vlaneseq
        %v5066 = vshrl.u32 %v5065, 7
        %v5067 = vsub.s32 4, %v5066
        %v5068 = vrot.slane %v5047, %v5067
        %v5069 = vlaneseq
        %v5070 = vshrl.u32 %v5069, 7
        %v5071 = vsub.s32 5, %v5070
        %v5072 = vrot.slane %v5047, %v5071
        %v5073 = vlaneseq
        %v5074 = vshrl.u32 %v5073, 7
        %v5075 = vsub.s32 6, %v5074
        %v5076 = vrot.slane %v5047, %v5075
        %v5077 = vlaneseq
        %v5078 = vshrl.u32 %v5077, 7
        %v5079 = vsub.s32 7, %v5078
        %v5080 = vrot.slane %v5047, %v5079
        %v5081 = vlaneseq
        %v5082 = vshrl.u32 %v5081, 7
        %v5083 = vsub.s32 0, %v5082
        %v5084 = vrot.slane %v5048, %v5083
        %v5085 = vlaneseq
        %v5086 = vshrl.u32 %v5085, 7
        %v5087 = vsub.s32 1, %v5086
        %v5088 = vrot.slane %v5048, %v5087
        %v5089 = vlaneseq
        %v5090 = vshrl.u32 %v5089, 7
        %v5091 = vsub.s32 2, %v5090
        %v5092 = vrot.slane %v5048, %v5091
        %v5093 = vlaneseq
        %v5094 = vshrl.u32 %v5093, 7
        %v5095 = vsub.s32 3, %v5094
        %v5096 = vrot.slane %v5048, %v5095
        %v5097 = vlaneseq
        %v5098 = vshrl.u32 %v5097, 7
        %v5099 = vsub.s32 4, %v5098
        %v5100 = vrot.slane %v5048, %v5099
        %v5101 = vlaneseq
        %v5102 = vshrl.u32 %v5101, 7
        %v5103 = vsub.s32 5, %v5102
        %v5104 = vrot.slane %v5048, %v5103
        %v5105 = vlaneseq
        %v5106 = vshrl.u32 %v5105, 7
        %v5107 = vsub.s32 6, %v5106
        %v5108 = vrot.slane %v5048, %v5107
        %v5109 = vlaneseq
        %v5110 = vshrl.u32 %v5109, 7
        %v5111 = vsub.s32 7, %v5110
        %v5112 = vrot.slane %v5048, %v5111
        %vm5113 = vcmp.eq.s32.totalorder %v5052, 1
        %vm5114 = vcmp.eq.s32.totalorder %v5056, 1
        %vm5115 = vcmp.eq.s32.totalorder %v5060, 1
        %vm5116 = vcmp.eq.s32.totalorder %v5064, 1
        %vm5117 = vcmp.eq.s32.totalorder %v5068, 1
        %vm5118 = vcmp.eq.s32.totalorder %v5072, 1
        %vm5119 = vcmp.eq.s32.totalorder %v5076, 1
        %vm5120 = vcmp.eq.s32.totalorder %v5080, 1
        %vm5121 = vcmp.eq.s32.totalorder %v5084, 1
        %vm5122 = vcmp.eq.s32.totalorder %v5088, 1
        %vm5123 = vcmp.eq.s32.totalorder %v5092, 1
        %vm5124 = vcmp.eq.s32.totalorder %v5096, 1
        %vm5125 = vcmp.eq.s32.totalorder %v5100, 1
        %vm5126 = vcmp.eq.s32.totalorder %v5104, 1
        %vm5127 = vcmp.eq.s32.totalorder %v5108, 1
        %vm5128 = vcmp.eq.s32.totalorder %v5112, 1
        %v5145 = vrot.slane %v5029, 5
        %v5146 = vrot.slane %v5030, 5
        %v5147 = vrot.slane %v5031, 5
        %v5148 = vrot.slane %v5032, 5
        %v5149 = vrot.slane %v5033, 5
        %v5150 = vrot.slane %v5034, 5
        %v5151 = vrot.slane %v5035, 5
        %v5152 = vrot.slane %v5036, 5
        %v5153 = vrot.slane %v5037, 5
        %v5154 = vrot.slane %v5038, 5
        %v5155 = vrot.slane %v5039, 5
        %v5156 = vrot.slane %v5040, 5
        %v5157 = vrot.slane %v5041, 5
        %v5158 = vrot.slane %v5042, 5
        %v5159 = vrot.slane %v5043, 5
        %v5160 = vrot.slane %v5044, 5
        %v5177 = vsel %vm5113, %v4588, %v5145
        %v5178 = vsel %vm5114, %v4590, %v5146
        %v5179 = vsel %vm5115, %v4631, %v5147
        %v5180 = vsel %vm5116, %v4633, %v5148
        %v5181 = vsel %vm5117, %v4674, %v5149
        %v5182 = vsel %vm5118, %v4676, %v5150
        %v5183 = vsel %vm5119, %v4717, %v5151
        %v5184 = vsel %vm5120, %v4719, %v5152
        %v5185 = vsel %vm5121, %v4760, %v5153
        %v5186 = vsel %vm5122, %v4762, %v5154
        %v5187 = vsel %vm5123, %v4803, %v5155
        %v5188 = vsel %vm5124, %v4805, %v5156
        %v5189 = vsel %vm5125, %v4846, %v5157
        %v5190 = vsel %vm5126, %v4848, %v5158
        %v5191 = vsel %vm5127, %v4889, %v5159
        %v5192 = vsel %vm5128, %v4891, %v5160
        %v5193 = vsel %vm5113, %v4592, %v5145
        %v5194 = vsel %vm5114, %v4594, %v5146
        %v5195 = vsel %vm5115, %v4635, %v5147
        %v5196 = vsel %vm5116, %v4637, %v5148
        %v5197 = vsel %vm5117, %v4678, %v5149
        %v5198 = vsel %vm5118, %v4680, %v5150
        %v5199 = vsel %vm5119, %v4721, %v5151
        %v5200 = vsel %vm5120, %v4723, %v5152
        %v5201 = vsel %vm5121, %v4764, %v5153
        %v5202 = vsel %vm5122, %v4766, %v5154
        %v5203 = vsel %vm5123, %v4807, %v5155
        %v5204 = vsel %vm5124, %v4809, %v5156
        %v5205 = vsel %vm5125, %v4850, %v5157
        %v5206 = vsel %vm5126, %v4852, %v5158
        %v5207 = vsel %vm5127, %v4893, %v5159
        %v5208 = vsel %vm5128, %v4895, %v5160
        %v5209 = vxor.u32 %v5177, 2147483648
        %v5210 = vxor.u32 %v5178, 2147483648
        %v5211 = vxor.u32 %v5179, 2147483648
        %v5212 = vxor.u32 %v5180, 2147483648
        %v5213 = vxor.u32 %v5181, 2147483648
        %v5214 = vxor.u32 %v5182, 2147483648
        %v5215 = vxor.u32 %v5183, 2147483648
        %v5216 = vxor.u32 %v5184, 2147483648
        %v5217 = vxor.u32 %v5185, 2147483648
        %v5218 = vxor.u32 %v5186, 2147483648
        %v5219 = vxor.u32 %v5187, 2147483648
        %v5220 = vxor.u32 %v5188, 2147483648
        %v5221 = vxor.u32 %v5189, 2147483648
        %v5222 = vxor.u32 %v5190, 2147483648
        %v5223 = vxor.u32 %v5191, 2147483648
        %v5224 = vxor.u32 %v5192, 2147483648
        %v5225 = vxor.u32 %v5193, 2147483648
        %v5226 = vxor.u32 %v5194, 2147483648
        %v5227 = vxor.u32 %v5195, 2147483648
        %v5228 = vxor.u32 %v5196, 2147483648
        %v5229 = vxor.u32 %v5197, 2147483648
        %v5230 = vxor.u32 %v5198, 2147483648
        %v5231 = vxor.u32 %v5199, 2147483648
        %v5232 = vxor.u32 %v5200, 2147483648
        %v5233 = vxor.u32 %v5201, 2147483648
        %v5234 = vxor.u32 %v5202, 2147483648
        %v5235 = vxor.u32 %v5203, 2147483648
        %v5236 = vxor.u32 %v5204, 2147483648
        %v5237 = vxor.u32 %v5205, 2147483648
        %v5238 = vxor.u32 %v5206, 2147483648
        %v5239 = vxor.u32 %v5207, 2147483648
        %v5240 = vxor.u32 %v5208, 2147483648
        %v5241 = vmul.f32 %v5209, 1.442695
        %v5242 = vpow.pop %v5241
        %v5243 = vmul.f32 %v5210, 1.442695
        %v5244 = vpow.pop %v5243
        %v5245 = vmul.f32 %v5211, 1.442695
        %v5246 = vpow.pop %v5245
        %v5247 = vmul.f32 %v5212, 1.442695
        %v5248 = vpow.pop %v5247
        %v5249 = vmul.f32 %v5213, 1.442695
        %v5250 = vpow.pop %v5249
        %v5251 = vmul.f32 %v5214, 1.442695
        %v5252 = vpow.pop %v5251
        %v5253 = vmul.f32 %v5215, 1.442695
        %v5254 = vpow.pop %v5253
        %v5255 = vmul.f32 %v5216, 1.442695
        %v5256 = vpow.pop %v5255
        %v5257 = vmul.f32 %v5217, 1.442695
        %v5258 = vpow.pop %v5257
        %v5259 = vmul.f32 %v5218, 1.442695
        %v5260 = vpow.pop %v5259
        %v5261 = vmul.f32 %v5219, 1.442695
        %v5262 = vpow.pop %v5261
        %v5263 = vmul.f32 %v5220, 1.442695
        %v5264 = vpow.pop %v5263
        %v5265 = vmul.f32 %v5221, 1.442695
        %v5266 = vpow.pop %v5265
        %v5267 = vmul.f32 %v5222, 1.442695
        %v5268 = vpow.pop %v5267
        %v5269 = vmul.f32 %v5223, 1.442695
        %v5270 = vpow.pop %v5269
        %v5271 = vmul.f32 %v5224, 1.442695
        %v5272 = vpow.pop %v5271
        %v5273 = vmul.f32 %v5225, 1.442695
        %v5274 = vpow.pop %v5273
        %v5275 = vmul.f32 %v5226, 1.442695
        %v5276 = vpow.pop %v5275
        %v5277 = vmul.f32 %v5227, 1.442695
        %v5278 = vpow.pop %v5277
        %v5279 = vmul.f32 %v5228, 1.442695
        %v5280 = vpow.pop %v5279
        %v5281 = vmul.f32 %v5229, 1.442695
        %v5282 = vpow.pop %v5281
        %v5283 = vmul.f32 %v5230, 1.442695
        %v5284 = vpow.pop %v5283
        %v5285 = vmul.f32 %v5231, 1.442695
        %v5286 = vpow.pop %v5285
        %v5287 = vmul.f32 %v5232, 1.442695
        %v5288 = vpow.pop %v5287
        %v5289 = vmul.f32 %v5233, 1.442695
        %v5290 = vpow.pop %v5289
        %v5291 = vmul.f32 %v5234, 1.442695
        %v5292 = vpow.pop %v5291
        %v5293 = vmul.f32 %v5235, 1.442695
        %v5294 = vpow.pop %v5293
        %v5295 = vmul.f32 %v5236, 1.442695
        %v5296 = vpow.pop %v5295
        %v5297 = vmul.f32 %v5237, 1.442695
        %v5298 = vpow.pop %v5297
        %v5299 = vmul.f32 %v5238, 1.442695
        %v5300 = vpow.pop %v5299
        %v5301 = vmul.f32 %v5239, 1.442695
        %v5302 = vpow.pop %v5301
        %v5303 = vmul.f32 %v5240, 1.442695
        %v5304 = vpow.pop %v5303
        %v5305 = vadd.f32 %v5242, 1.0
        %v5306 = vadd.f32 %v5244, 1.0
        %v5307 = vadd.f32 %v5246, 1.0
        %v5308 = vadd.f32 %v5248, 1.0
        %v5309 = vadd.f32 %v5250, 1.0
        %v5310 = vadd.f32 %v5252, 1.0
        %v5311 = vadd.f32 %v5254, 1.0
        %v5312 = vadd.f32 %v5256, 1.0
        %v5313 = vadd.f32 %v5258, 1.0
        %v5314 = vadd.f32 %v5260, 1.0
        %v5315 = vadd.f32 %v5262, 1.0
        %v5316 = vadd.f32 %v5264, 1.0
        %v5317 = vadd.f32 %v5266, 1.0
        %v5318 = vadd.f32 %v5268, 1.0
        %v5319 = vadd.f32 %v5270, 1.0
        %v5320 = vadd.f32 %v5272, 1.0
        %v5321 = vadd.f32 %v5274, 1.0
        %v5322 = vadd.f32 %v5276, 1.0
        %v5323 = vadd.f32 %v5278, 1.0
        %v5324 = vadd.f32 %v5280, 1.0
        %v5325 = vadd.f32 %v5282, 1.0
        %v5326 = vadd.f32 %v5284, 1.0
        %v5327 = vadd.f32 %v5286, 1.0
        %v5328 = vadd.f32 %v5288, 1.0
        %v5329 = vadd.f32 %v5290, 1.0
        %v5330 = vadd.f32 %v5292, 1.0
        %v5331 = vadd.f32 %v5294, 1.0
        %v5332 = vadd.f32 %v5296, 1.0
        %v5333 = vadd.f32 %v5298, 1.0
        %v5334 = vadd.f32 %v5300, 1.0
        %v5335 = vadd.f32 %v5302, 1.0
        %v5336 = vadd.f32 %v5304, 1.0
        %v5337 = vrcp.pop %v5305
        %v5338 = vmul.f32 1.0, %v5337
        %v5339 = vrcp.pop %v5306
        %v5340 = vmul.f32 1.0, %v5339
        %v5341 = vrcp.pop %v5307
        %v5342 = vmul.f32 1.0, %v5341
        %v5343 = vrcp.pop %v5308
        %v5344 = vmul.f32 1.0, %v5343
        %v5345 = vrcp.pop %v5309
        %v5346 = vmul.f32 1.0, %v5345
        %v5347 = vrcp.pop %v5310
        %v5348 = vmul.f32 1.0, %v5347
        %v5349 = vrcp.pop %v5311
        %v5350 = vmul.f32 1.0, %v5349
        %v5351 = vrcp.pop %v5312
        %v5352 = vmul.f32 1.0, %v5351
        %v5353 = vrcp.pop %v5313
        %v5354 = vmul.f32 1.0, %v5353
        %v5355 = vrcp.pop %v5314
        %v5356 = vmul.f32 1.0, %v5355
        %v5357 = vrcp.pop %v5315
        %v5358 = vmul.f32 1.0, %v5357
        %v5359 = vrcp.pop %v5316
        %v5360 = vmul.f32 1.0, %v5359
        %v5361 = vrcp.pop %v5317
        %v5362 = vmul.f32 1.0, %v5361
        %v5363 = vrcp.pop %v5318
        %v5364 = vmul.f32 1.0, %v5363
        %v5365 = vrcp.pop %v5319
        %v5366 = vmul.f32 1.0, %v5365
        %v5367 = vrcp.pop %v5320
        %v5368 = vmul.f32 1.0, %v5367
        %v5369 = vrcp.pop %v5321
        %v5370 = vmul.f32 1.0, %v5369
        %v5371 = vrcp.pop %v5322
        %v5372 = vmul.f32 1.0, %v5371
        %v5373 = vrcp.pop %v5323
        %v5374 = vmul.f32 1.0, %v5373
        %v5375 = vrcp.pop %v5324
        %v5376 = vmul.f32 1.0, %v5375
        %v5377 = vrcp.pop %v5325
        %v5378 = vmul.f32 1.0, %v5377
        %v5379 = vrcp.pop %v5326
        %v5380 = vmul.f32 1.0, %v5379
        %v5381 = vrcp.pop %v5327
        %v5382 = vmul.f32 1.0, %v5381
        %v5383 = vrcp.pop %v5328
        %v5384 = vmul.f32 1.0, %v5383
        %v5385 = vrcp.pop %v5329
        %v5386 = vmul.f32 1.0, %v5385
        %v5387 = vrcp.pop %v5330
        %v5388 = vmul.f32 1.0, %v5387
        %v5389 = vrcp.pop %v5331
        %v5390 = vmul.f32 1.0, %v5389
        %v5391 = vrcp.pop %v5332
        %v5392 = vmul.f32 1.0, %v5391
        %v5393 = vrcp.pop %v5333
        %v5394 = vmul.f32 1.0, %v5393
        %v5395 = vrcp.pop %v5334
        %v5396 = vmul.f32 1.0, %v5395
        %v5397 = vrcp.pop %v5335
        %v5398 = vmul.f32 1.0, %v5397
        %v5399 = vrcp.pop %v5336
        %v5400 = vmul.f32 1.0, %v5399
        %v5433 = vcombine.high %v5338, %v5340
        %v5434 = vcombine.high %v5342, %v5344
        %v5435 = vcombine.high %v5346, %v5348
        %v5436 = vcombine.high %v5350, %v5352
        %v5437 = vcombine.high %v5354, %v5356
        %v5438 = vcombine.high %v5358, %v5360
        %v5439 = vcombine.high %v5362, %v5364
        %v5440 = vcombine.high %v5366, %v5368
        %v5441 = vcombine.low %v5370, %v5372
        %v5442 = vcombine.low %v5374, %v5376
        %v5443 = vcombine.low %v5378, %v5380
        %v5444 = vcombine.low %v5382, %v5384
        %v5445 = vcombine.low %v5386, %v5388
        %v5446 = vcombine.low %v5390, %v5392
        %v5447 = vcombine.low %v5394, %v5396
        %v5448 = vcombine.low %v5398, %v5400
        %vm5449 = vcmask 1045508
        %vm5450 = vmor %vm1811, %vm5449
        %v5451 = vrot.slane %v5433, 6
        %v5452 = vrot.slane %v5451, 4
        %v5453 = vrot.slane %v5441, 6
        %v5454 = vsel %vm5450, %v5452, %v5453
        %v5455 = vrot.slane %v5434, 6
        %v5456 = vrot.slane %v5455, 4
        %v5457 = vrot.slane %v5442, 6
        %v5458 = vsel %vm5450, %v5456, %v5457
        %v5459 = vrot.slane %v5435, 6
        %v5460 = vrot.slane %v5459, 4
        %v5461 = vrot.slane %v5443, 6
        %v5462 = vsel %vm5450, %v5460, %v5461
        %v5463 = vrot.slane %v5436, 6
        %v5464 = vrot.slane %v5463, 4
        %v5465 = vrot.slane %v5444, 6
        %v5466 = vsel %vm5450, %v5464, %v5465
        %v5467 = vrot.slane %v5437, 6
        %v5468 = vrot.slane %v5467, 4
        %v5469 = vrot.slane %v5445, 6
        %v5470 = vsel %vm5450, %v5468, %v5469
        %v5471 = vrot.slane %v5438, 6
        %v5472 = vrot.slane %v5471, 4
        %v5473 = vrot.slane %v5446, 6
        %v5474 = vsel %vm5450, %v5472, %v5473
        %v5475 = vrot.slane %v5439, 6
        %v5476 = vrot.slane %v5475, 4
        %v5477 = vrot.slane %v5447, 6
        %v5478 = vsel %vm5450, %v5476, %v5477
        %v5479 = vrot.slane %v5440, 6
        %v5480 = vrot.slane %v5479, 4
        %v5481 = vrot.slane %v5448, 6
        %v5482 = vsel %vm5450, %v5480, %v5481
        %5491 = vst [vmem:[%s337] sm:$0x77] %v5454
        %5492 = vst [vmem:[%s337 + $0x8] sm:$0x77] %v5458
        %5493 = vst [vmem:[%s337 + $0x10] sm:$0x77] %v5462
        %5494 = vst [vmem:[%s337 + $0x18] sm:$0x77] %v5466
        %5495 = vst [vmem:[%s337 + $0x20] sm:$0x77] %v5470
        %5496 = vst [vmem:[%s337 + $0x28] sm:$0x77] %v5474
        %5497 = vst [vmem:[%s337 + $0x30] sm:$0x77] %v5478
        %5498 = vst [vmem:[%s337 + $0x38] sm:$0x77] %v5482
        %s5499 = sand.u32 %s207, 1
        %s5500 = scalar_lea.sflag [#allocation4], %s5499
        %s5501 = sand.u32 %s207, 1
        %s5502 = smul.addr %s5501, 64
        %s5503 = scalar_lea.vmem [#allocation7], %s5502
        // Predicated region
        $region61: #{tpu_custom_call.1} parent=51 // pred_check
          %p5504 = pneg %p217
        $region62: #{tpu_custom_call.1} parent=51 // pred_check_branch
          %5506 = sbr.rel (%p5504) target = $region64
        $region63: #{tpu_custom_call.1} parent=51 // pred_region
          %s5507 = smul.u32 16, %s26
          %s5509 = ssub.s32 1024, 1024
          %5510 = vsyncadd %s5500, %s5509
          %s5511 = smul.addr %s5507, 64
          %s5512 = scalar_lea.hbm %s8, %s5511
          %s5514 = sshll.u32 %s5503, 4
          %s5515 = int_to_ptr.vmem [resolvable:$true] %s5514
          %5517 = dma.vmem_to_hbm [thread:$0]  %s5515, 1024, %s5512, %s5500
        $region64: #{tpu_custom_call.1} parent=51 // pred_fallthru
          _
      $region52: #{tpu_custom_call.1} parent=5 // pred_fallthru
        _
      %p5518 = scmp.le.s32.totalorder 2, %s21
      // Predicated region
      $region65: #{tpu_custom_call.1} parent=5 // pred_check
        %p5519 = pneg %p5518
      $region66: #{tpu_custom_call.1} parent=5 // pred_check_branch
        %5521 = sbr.rel (%p5519) target = $region68
      $region67: #{tpu_custom_call.1} parent=5 // pred_region
        %s5522 = ssub.s32 %s21, 2
        // Predicated region
        $region69: #{tpu_custom_call.1} parent=67 // pred_check
          %p5523 = pneg %p223
        $region70: #{tpu_custom_call.1} parent=67 // pred_check_branch
          %5525 = sbr.rel (%p5523) target = $region72
        $region71: #{tpu_custom_call.1} parent=67 // pred_region
          %s5526 = sand.u32 %s208, 1
          %s5527 = scalar_lea.sflag [#allocation4], %s5526
          %s5528 = sand.u32 %s208, 1
          %s5529 = smul.addr %s5528, 64
          %s5530 = scalar_lea.vmem [#allocation7], %s5529
          %5531 = dma.done %s5527, 1024
        $region72: #{tpu_custom_call.1} parent=67 // pred_fallthru
          _
      $region68: #{tpu_custom_call.1} parent=5 // pred_fallthru
        _
    $region6: #{tpu_custom_call.1} parent=1 // loop_footer
      %s25 = sadd.s32 1, %s21
    $region7: #{tpu_custom_call.1} parent=1 // loop_footer_branch
      %20 = sbr.rel target = $region3
    $region8: #{tpu_custom_call.1} parent=1 // loop_exit
      _
    %5532 = vsyncpa [#allocation3], 1
    %s5533 = scalar_lea.sflag [#allocation3], 1
    %5534 = vsyncpa %s5533, 1
    %5535 = vsyncpa [#allocation4], 1
    %s5536 = scalar_lea.sflag [#allocation4], 1
    %5537 = vsyncpa %s5536, 1
    %5538 = vsyncpa [#allocation5], 1
    %s5539 = scalar_lea.sflag [#allocation5], 1
    %5540 = vsyncpa %s5539, 1

</llo_original>
